<compile_context>
chip_gen: v5e
topology: v5e:2x2
jax: 0.10.0
libtpu: 0.0.40
codegen_flags: <defaults>
</compile_context>

<pallas_src>
import functools
import math

import jax
import jax.numpy as jnp
from jax.experimental import pallas as pl
from jax.experimental.pallas import tpu as pltpu


# ----------------------------------------------------------------------------- helpers

def _ru(v, m):
    return (v + m - 1) // m * m


def _pad2(a, rows, cols, dtype):
    out = jnp.zeros((rows, cols), dtype)
    return out.at[: a.shape[0], : a.shape[1]].set(a.astype(dtype))


# ----------------------------------------------------------------------------- GIN layer kernel

def _gin_layer_kernel(adj_ref, h_ref, pool_ref, w1_ref, b1_ref, w2_ref, b2_ref,
                      hout_ref, stats_ref, pooled_ref, acc_ref,
                      *, n_real, tm, tk, h_resident):
    """One GIN layer + fused global_add_pool partials, tiled over (dst tile, src tile).

    adj_ref    : (tm, tk)      bf16  streamed block of (A + I)      [dst rows, src cols]
    h_ref      : (npad, Din) or (tk, Din)  bf16  BN-pre-applied layer input (resident or streamed)
    pool_ref   : (gp, tm)      bf16  one-hot pooling columns of this dst tile
    w*/b*      : bf16 weights (resident), f32 biases
    hout_ref   : (tm, Dout)    f32   pre-BN output activations of this dst tile
    stats_ref  : (1, 2, Dout)  f32   row 0 = masked sum, row 1 = masked sum of squares
    pooled_ref : (1, gp, Dout) f32   pool_tile @ h_pre  (pre-BN pooled partial)
    acc_ref    : (tm, Din)     f32   VMEM accumulator for agg = (A + I) @ h
    """
    f32, bf16 = jnp.float32, jnp.bfloat16
    # NOTE: program_id / num_programs are read only here (top level).  Calling them inside a
    # pl.when branch leaves a program_id primitive in the cond sub-jaxpr, which fails to lower
    # in interpret mode ("MLIR translation rule for 'program_id' not found for platform cpu").
    i = pl.program_id(0)            # dst node tile (parallel)
    k = pl.program_id(1)            # src node tile (arbitrary, reduction)
    nk = pl.num_programs(1)

    @pl.when(k == 0)
    def _():
        acc_ref[...] = jnp.zeros_like(acc_ref)

    if h_resident:
        h_blk = h_ref[pl.ds(k * tk, tk), :]        # resident input: slice current src tile
    else:
        h_blk = h_ref[...]                         # streamed input tile
    acc_ref[...] += jnp.dot(adj_ref[...], h_blk, preferred_element_type=f32)

    # dst-row mask for the BatchNorm statistics (exclude padded fake nodes), computed outside
    # pl.when and closed over by the epilogue.
    row = i * tm + jax.lax.broadcasted_iota(jnp.int32, (tm, 1), 0)
    rmask = (row < n_real).astype(f32)

    @pl.when(k == nk - 1)
    def _():
        agg = acc_ref[...]
        # GIN MLP: Linear -> ReLU -> Linear, then the encoder's ReLU (all pre-BN).
        m = jnp.dot(agg.astype(bf16), w1_ref[...], preferred_element_type=f32) + b1_ref[...]
        m = jnp.maximum(m, 0.0)
        m = jnp.dot(m.astype(bf16), w2_ref[...], preferred_element_type=f32) + b2_ref[...]
        h_pre = jnp.maximum(m, 0.0)
        hout_ref[...] = h_pre

        # Streamed BatchNorm partials (masked so padded fake nodes never pollute statistics).
        hm = h_pre * rmask
        s = jnp.sum(hm, axis=0, keepdims=True)
        ss = jnp.sum(hm * hm, axis=0, keepdims=True)
        stats_ref[0] = jnp.concatenate([s, ss], axis=0)

        # Fused global_add_pool partial for this dst tile (pool columns of fake nodes are zero).
        pooled_ref[0] = jnp.dot(pool_ref[...], h_pre.astype(bf16), preferred_element_type=f32)


def _gin_layer(adj, h_in, pool, w1, b1, w2, b2, gamma, beta, counts, n_real, tm, tk):
    f32 = jnp.float32
    npad = adj.shape[0]
    din = h_in.shape[1]
    dout = w1.shape[1]
    gp = pool.shape[0]
    n_dst, n_src = npad // tm, npad // tk

    # Keep the (bf16) layer input fully resident in VMEM when its double-buffered copy fits a
    # conservative budget; otherwise stream it per src tile.
    h_resident = (2 * npad * din * 2) <= (8 << 20)
    h_spec = (pl.BlockSpec((npad, din), lambda i, k: (0, 0)) if h_resident
              else pl.BlockSpec((tk, din), lambda i, k: (k, 0)))

    cost = pl.CostEstimate(
        flops=2 * npad * npad * din + 2 * npad * (din + dout) * dout + 2 * gp * npad * dout,
        transcendentals=0,
        bytes_accessed=(npad * npad * 2
                        + npad * din * 2 * (1 if h_resident else n_dst)
                        + gp * npad * 2
                        + npad * dout * 4
                        + 2 * (din * dout + dout * dout)
                        + n_dst * (2 + gp) * dout * 4),
    )

    h_pre, stats, pooled = pl.pallas_call(
        functools.partial(_gin_layer_kernel, n_real=n_real, tm=tm, tk=tk, h_resident=h_resident),
        out_shape=(jax.ShapeDtypeStruct((npad, dout), f32),
                   jax.ShapeDtypeStruct((n_dst, 2, dout), f32),
                   jax.ShapeDtypeStruct((n_dst, gp, dout), f32)),
        grid=(n_dst, n_src),
        in_specs=[
            pl.BlockSpec((tm, tk), lambda i, k: (i, k)),      # (A + I) tile, streamed bf16
            h_spec,                                           # layer input (resident or streamed)
            pl.BlockSpec((gp, tm), lambda i, k: (0, i)),      # pooling columns of this dst tile
            pl.BlockSpec((din, dout), lambda i, k: (0, 0)),   # resident weights / biases
            pl.BlockSpec((1, dout), lambda i, k: (0, 0)),
            pl.BlockSpec((dout, dout), lambda i, k: (0, 0)),
            pl.BlockSpec((1, dout), lambda i, k: (0, 0)),
        ],
        out_specs=(
            pl.BlockSpec((tm, dout), lambda i, k: (i, 0)),      # pre-BN activations
            pl.BlockSpec((1, 2, dout), lambda i, k: (i, 0, 0)),  # BN partials per dst tile
            pl.BlockSpec((1, gp, dout), lambda i, k: (i, 0, 0)),  # pooled partials per dst tile
        ),
        scratch_shapes=[pltpu.VMEM((tm, din), f32)],
        compiler_params=pltpu.CompilerParams(
            dimension_semantics=("parallel", "arbitrary")),
        cost_estimate=cost,
    )(adj, h_in, pool, w1, b1, w2, b2)

    # Finalize training-mode BatchNorm1d from the streamed masked partials (tiny [2, D] reduce;
    # done here because the dst-tile axis is megacore-parallel).
    total = stats.sum(axis=0)
    mean = total[0:1] / n_real
    var = jnp.maximum(total[1:2] / n_real - mean * mean, 0.0)   # biased variance (PyTorch BN)
    scale = gamma * jax.lax.rsqrt(var + 1e-5)
    shift = beta - mean * scale

    # Pre-apply BN and hand the next layer a bf16 input (halves its streaming bytes).
    h_next = (h_pre * scale + shift).astype(jnp.bfloat16)
    # BN commutes with global_add_pool: sum_g BN(h) = (pool @ h_pre) * scale + count_g * shift.
    pooled_bn = pooled.sum(axis=0) * scale + counts[:, None] * shift
    return h_next, pooled_bn


# ----------------------------------------------------------------------------- projection head

def _proj_head_kernel(p1_ref, p2_ref, w1a_ref, w1b_ref, b1_ref, w2_ref, b2_ref, z_ref):
    """Tiny (gp, E) projection head; the concat is removed by splitting pw1 into two blocks."""
    f32, bf16 = jnp.float32, jnp.bfloat16
    z = (jnp.dot(p1_ref[...].astype(bf16), w1a_ref[...], preferred_element_type=f32)
         + jnp.dot(p2_ref[...].astype(bf16), w1b_ref[...], preferred_element_type=f32)
         + b1_ref[...])
    z = jnp.maximum(z, 0.0)
    z_ref[...] = (jnp.dot(z.astype(bf16), w2_ref[...], preferred_element_type=f32)
                  + b2_ref[...])


def _proj_head(p1, p2, w1a, w1b, b1, w2, b2):
    gp, ep = p1.shape[0], w1a.shape[1]
    return pl.pallas_call(
        _proj_head_kernel,
        out_shape=jax.ShapeDtypeStruct((gp, ep), jnp.float32),
    )(p1, p2, w1a, w1b, b1, w2, b2)


# ----------------------------------------------------------------------------- forward wrapper

@functools.partial(jax.jit, static_argnames=("num_graphs", "dst_tile", "src_tile"))
def simclr_forward(x, edge_index, batch, num_graphs, params, dst_tile=256, src_tile=512):
    """Pallas implementation of simclr.forward(x, edge_index, batch, num_graphs)."""
    f32, bf16 = jnp.float32, jnp.bfloat16
    n, f = x.shape
    d = params["w02"].shape[0]
    e = 2 * d                                    # embedding_dim = hidden_dim * num_gc_layers (=2)
    fp, dp, ep = _ru(f, 128), _ru(d, 128), _ru(e, 128)     # lane-dense (x128) feature dims

    nround = _ru(n, 128)
    tm = min(dst_tile, nround)                   # dst tile (parallel axis; n_dst even on v7x
    tk = min(src_tile, nround)                   #           whenever npad >= 2*tm)
    npad = _ru(n, math.lcm(tm, tk))
    gp = _ru(num_graphs, 8)

    # --- glue: dense (A + I) operator and one-hot pooling matrix, built DIRECTLY in bf16
    #     (small integer counts / {0,1} -> exact in bf16; no f32 N^2 scatter + cast pass).
    # TODO(synk): for large sparse graphs switch to a scalar-prefetched edge-list segment-sum
    #             (PrefetchScalarGridSpec) instead of the dense O(N^2) operator.
    src, dst = edge_index[0], edge_index[1]
    adj = jnp.zeros((npad, npad), bf16).at[dst, src].add(1.0)
    adj = adj.at[jnp.arange(n), jnp.arange(n)].add(1.0)   # GIN eps=0: h_i + sum_nbr = (A + I) @ h
    pool = jnp.zeros((gp, npad), bf16).at[batch, jnp.arange(n)].set(1.0)
    counts = jnp.zeros((gp,), f32).at[batch].add(1.0)     # nodes per graph (BN shift term)

    h0 = _pad2(x, npad, fp, bf16)                          # raw layer-0 input, bf16

    w01, b01 = _pad2(params["w01"], fp, dp, bf16), _pad2(params["b01"], 1, dp, f32)
    w02, b02 = _pad2(params["w02"], dp, dp, bf16), _pad2(params["b02"], 1, dp, f32)
    w11, b11 = _pad2(params["w11"], dp, dp, bf16), _pad2(params["b11"], 1, dp, f32)
    w12, b12 = _pad2(params["w12"], dp, dp, bf16), _pad2(params["b12"], 1, dp, f32)
    g0, be0 = _pad2(params["bn0_g"], 1, dp, f32), _pad2(params["bn0_b"], 1, dp, f32)
    g1, be1 = _pad2(params["bn1_g"], 1, dp, f32), _pad2(params["bn1_b"], 1, dp, f32)
    pw1a = _pad2(params["pw1"][:d], dp, ep, bf16)          # split pw1 -> no concat needed
    pw1b = _pad2(params["pw1"][d:], dp, ep, bf16)
    pb1 = _pad2(params["pb1"], 1, ep, f32)
    pw2, pb2 = _pad2(params["pw2"], ep, ep, bf16), _pad2(params["pb2"], 1, ep, f32)

    h1, p1 = _gin_layer(adj, h0, pool, w01, b01, w02, b02, g0, be0, counts, n, tm, tk)
    _, p2 = _gin_layer(adj, h1, pool, w11, b11, w12, b12, g1, be1, counts, n, tm, tk)
    z = _proj_head(p1, p2, pw1a, pw1b, pb1, pw2, pb2)
    return z[:num_graphs, :e]


# ----------------------------------------------------------------------------- reference (plain JAX)

def _reference(x, edge_index, batch, num_graphs, params):
    """Plain-JAX reference using the SAME precision policy as the kernels (bf16 matmul operands,
    exact bf16 adjacency/pooling, f32 accumulation and f32 bias/ReLU/BatchNorm math), so the
    comparison validates the kernel tiling / masking / BN / fused-pooling logic itself."""
    f32, bf16 = jnp.float32, jnp.bfloat16
    n = x.shape[0]
    d = params["w02"].shape[0]

    adj = jnp.zeros((n, n), f32).at[edge_index[1], edge_index[0]].add(1.0)
    adj = (adj + jnp.eye(n, dtype=f32)).astype(bf16)
    pool = jax.nn.one_hot(batch, num_graphs, dtype=f32).T.astype(bf16)
    counts = jnp.zeros((num_graphs,), f32).at[batch].add(1.0)

    def dotf(a, b):
        return jnp.dot(a.astype(bf16), b.astype(bf16), preferred_element_type=f32)

    def gin(h, w1, b1, w2, b2, g, be):
        agg = dotf(adj, h)                                    # (A + I) @ h
        m = jnp.maximum(dotf(agg, w1) + b1, 0.0)
        hp = jnp.maximum(dotf(m, w2) + b2, 0.0)               # pre-BN activations
        mean = hp.sum(0, keepdims=True) / n
        var = jnp.maximum((hp * hp).sum(0, keepdims=True) / n - mean * mean, 0.0)
        scale = g * jax.lax.rsqrt(var + 1e-5)
        shift = be - mean * scale
        pooled = dotf(pool, hp) * scale + counts[:, None] * shift   # BN commuted past pooling
        h_next = (hp * scale + shift).astype(bf16)                  # training-mode BatchNorm1d
        return h_next, pooled

    h1, p1 = gin(x.astype(bf16), params["w01"], params["b01"], params["w02"], params["b02"],
                 params["bn0_g"], params["bn0_b"])
    _, p2 = gin(h1, params["w11"], params["b11"], params["w12"], params["b12"],
                params["bn1_g"], params["bn1_b"])
    z = dotf(p1, params["pw1"][:d]) + dotf(p2, params["pw1"][d:]) + params["pb1"]
    return dotf(jnp.maximum(z, 0.0), params["pw2"]) + params["pb2"]


# ----------------------------------------------------------------------------- setup / main

def _xavier(key, fan_in, fan_out):
    bound = (6.0 / (fan_in + fan_out)) ** 0.5
    return jax.random.uniform(key, (fan_in, fan_out), jnp.float32, -bound, bound)


def make_params(key, num_features, hidden_dim):
    d, e = hidden_dim, 2 * hidden_dim
    ks = jax.random.split(key, 6)
    zeros = lambda m: jnp.zeros((1, m), jnp.float32)
    ones = lambda m: jnp.ones((1, m), jnp.float32)
    return {
        # GIN layer 0 MLP: Linear(F, D) -> ReLU -> Linear(D, D); BatchNorm1d(D)
        "w01": _xavier(ks[0], num_features, d), "b01": zeros(d),
        "w02": _xavier(ks[1], d, d),            "b02": zeros(d),
        "bn0_g": ones(d),                       "bn0_b": zeros(d),
        # GIN layer 1 MLP: Linear(D, D) -> ReLU -> Linear(D, D); BatchNorm1d(D)
        "w11": _xavier(ks[2], d, d),            "b11": zeros(d),
        "w12": _xavier(ks[3], d, d),            "b12": zeros(d),
        "bn1_g": ones(d),                       "bn1_b": zeros(d),
        # projection head: Linear(E, E) -> ReLU -> Linear(E, E)   (biases = 0 per init_emb)
        "pw1": _xavier(ks[4], e, e),            "pb1": zeros(e),
        "pw2": _xavier(ks[5], e, e),            "pb2": zeros(e),
    }


if __name__ == "__main__":
    # small demo: 600 nodes -> padded to 1024 -> a real (4 dst x 2 src) tile grid with masking,
    # 16 input features, hidden_dim=32, num_gc_layers=2, 6 graphs, 2400 random edges.
    N, F, D, G, NUM_EDGES = 600, 16, 32, 6, 2400

    key = jax.random.PRNGKey(0)
    kx, ke, kp = jax.random.split(key, 3)

    x = jax.random.normal(kx, (N, F), jnp.float32)
    edge_index = jax.random.randint(ke, (2, NUM_EDGES), 0, N, dtype=jnp.int32)
    batch = jnp.repeat(jnp.arange(G, dtype=jnp.int32), N // G)
    params = make_params(kp, F, D)

    y = simclr_forward(x, edge_index, batch, G, params)
    jax.block_until_ready(y)

    y_ref = _reference(x, edge_index, batch, G, params)
    assert y.shape == (G, 2 * D)
    err = float(jnp.max(jnp.abs(y - y_ref)))
    # tolerance covers bf16 operand rounding noise only; structural errors are O(1)+
    assert jnp.allclose(y, y_ref, atol=2e-2, rtol=2e-2), f"mismatch vs reference (max abs err {err})"

    print("KERNEL_OK")
</pallas_src>

<mosaic_0001>
module attributes {stable_mosaic.version = 11 : i64} {
  func.func @_gin_layer_kernel(%arg0: i32, %arg1: i32, %arg2: memref<256x512xbf16, #tpu.memory_space<vmem>>, %arg3: memref<1024x128xbf16, #tpu.memory_space<vmem>>, %arg4: memref<8x256xbf16, #tpu.memory_space<vmem>>, %arg5: memref<128x128xbf16, #tpu.memory_space<vmem>>, %arg6: memref<1x128xf32, #tpu.memory_space<vmem>>, %arg7: memref<128x128xbf16, #tpu.memory_space<vmem>>, %arg8: memref<1x128xf32, #tpu.memory_space<vmem>>, %arg9: memref<256x128xf32, #tpu.memory_space<vmem>>, %arg10: memref<1x2x128xf32, #tpu.memory_space<vmem>>, %arg11: memref<1x8x128xf32, #tpu.memory_space<vmem>>, %arg12: memref<256x128xf32, #tpu.memory_space<vmem>>) attributes {dimension_semantics = [#tpu.dimension_semantics<parallel>, #tpu.dimension_semantics<arbitrary>], iteration_bounds = array<i64: 4, 2>, scalar_prefetch = 0 : i64, scratch_operands = 1 : i64, tpu.core_type = #tpu.core_type<tc>, window_params = [{transform_indices = @transform_0, window_bounds = array<i64: 256, 512>}, {pipeline_mode = #tpu.pipeline_mode<synchronous>, transform_indices = @transform_1, window_bounds = array<i64: 1024, 128>}, {transform_indices = @transform_2, window_bounds = array<i64: 8, 256>}, {pipeline_mode = #tpu.pipeline_mode<synchronous>, transform_indices = @transform_3, window_bounds = array<i64: 128, 128>}, {pipeline_mode = #tpu.pipeline_mode<synchronous>, transform_indices = @transform_4, window_bounds = array<i64: 1, 128>}, {pipeline_mode = #tpu.pipeline_mode<synchronous>, transform_indices = @transform_5, window_bounds = array<i64: 128, 128>}, {pipeline_mode = #tpu.pipeline_mode<synchronous>, transform_indices = @transform_6, window_bounds = array<i64: 1, 128>}, {transform_indices = @transform_7, window_bounds = array<i64: 256, 128>}, {transform_indices = @transform_8, window_bounds = array<i64: 1, 2, 128>}, {transform_indices = @transform_9, window_bounds = array<i64: 1, 8, 128>}]} {
    %c0_i32 = arith.constant 0 : i32
    %0 = arith.cmpi eq, %arg1, %c0_i32 : i32
    %1 = arith.extui %0 : i1 to i32
    %c0_i32_0 = arith.constant 0 : i32
    %2 = arith.cmpi ne, %1, %c0_i32_0 : i32
    scf.if %2 {
      %cst_8 = arith.constant 0.000000e+00 : f32
      %22 = vector.broadcast %cst_8 : f32 to vector<256x128xf32>
      %c0_9 = arith.constant 0 : index
      %c0_10 = arith.constant 0 : index
      %23 = vector.load %arg12[%c0_9, %c0_10] : memref<256x128xf32, #tpu.memory_space<vmem>>, vector<256x128xf32>
      tpu.vector_store %arg12[%c0_9, %c0_10], %22 {strides = array<i32>} : memref<256x128xf32, #tpu.memory_space<vmem>>, vector<256x128xf32>,
    } else {
    }
    %c512_i32 = arith.constant 512 : i32
    %3 = arith.muli %arg1, %c512_i32 : i32
    %4 = arith.index_cast %3 : i32 to index
    %c0 = arith.constant 0 : index
    %5 = vector.load %arg3[%4, %c0] : memref<1024x128xbf16, #tpu.memory_space<vmem>>, vector<512x128xbf16>
    %c0_1 = arith.constant 0 : index
    %c0_2 = arith.constant 0 : index
    %6 = vector.load %arg12[%c0_1, %c0_2] : memref<256x128xf32, #tpu.memory_space<vmem>>, vector<256x128xf32>
    %c0_3 = arith.constant 0 : index
    %c0_4 = arith.constant 0 : index
    %7 = vector.load %arg2[%c0_3, %c0_4] : memref<256x512xbf16, #tpu.memory_space<vmem>>, vector<256x512xbf16>
    %cst = arith.constant dense<0.000000e+00> : vector<256x128xf32>
    %8 = tpu.matmul %7, %5, %cst {dimension_numbers = #tpu.dot_dimension_numbers<[1], [0], [0], [1], [0, 0, 1, 1], [], []>} : vector<256x512xbf16>, vector<512x128xbf16>, vector<256x128xf32> -> vector<256x128xf32>
    %9 = arith.addf %6, %8 : vector<256x128xf32>
    %c0_5 = arith.constant 0 : index
    %c0_6 = arith.constant 0 : index
    %10 = vector.load %arg12[%c0_5, %c0_6] : memref<256x128xf32, #tpu.memory_space<vmem>>, vector<256x128xf32>
    tpu.vector_store %arg12[%c0_5, %c0_6], %9 {strides = array<i32>} : memref<256x128xf32, #tpu.memory_space<vmem>>, vector<256x128xf32>,
    %c256_i32 = arith.constant 256 : i32
    %11 = arith.muli %arg0, %c256_i32 : i32
    %12 = tpu.iota {dimensions = array<i32: 0>} : vector<256x1xi32>
    %13 = vector.broadcast %11 : i32 to vector<256x1xi32>
    %14 = arith.addi %13, %12 : vector<256x1xi32>
    %c600_i32 = arith.constant 600 : i32
    %15 = vector.broadcast %c600_i32 : i32 to vector<256x1xi32>
    %16 = arith.cmpi slt, %14, %15 : vector<256x1xi32>
    %17 = arith.extui %16 : vector<256x1xi1> to vector<256x1xi32>
    %18 = arith.sitofp %17 : vector<256x1xi32> to vector<256x1xf32>
    %c1_i32 = arith.constant 1 : i32
    %19 = arith.cmpi eq, %arg1, %c1_i32 : i32
    %20 = arith.extui %19 : i1 to i32
    %c0_i32_7 = arith.constant 0 : i32
    %21 = arith.cmpi ne, %20, %c0_i32_7 : i32
    scf.if %21 {
      %c0_8 = arith.constant 0 : index
      %c0_9 = arith.constant 0 : index
      %22 = vector.load %arg12[%c0_8, %c0_9] : memref<256x128xf32, #tpu.memory_space<vmem>>, vector<256x128xf32>
      %23 = arith.truncf %22 : vector<256x128xf32> to vector<256x128xbf16>
      %c0_10 = arith.constant 0 : index
      %c0_11 = arith.constant 0 : index
      %24 = vector.load %arg5[%c0_10, %c0_11] : memref<128x128xbf16, #tpu.memory_space<vmem>>, vector<128x128xbf16>
      %cst_12 = arith.constant dense<0.000000e+00> : vector<256x128xf32>
      %25 = tpu.matmul %23, %24, %cst_12 {dimension_numbers = #tpu.dot_dimension_numbers<[1], [0], [0], [1], [0, 0, 1, 1], [], []>} : vector<256x128xbf16>, vector<128x128xbf16>, vector<256x128xf32> -> vector<256x128xf32>
      %c0_13 = arith.constant 0 : index
      %c0_14 = arith.constant 0 : index
      %26 = vector.load %arg6[%c0_13, %c0_14] : memref<1x128xf32, #tpu.memory_space<vmem>>, vector<1x128xf32>
      %27 = vector.broadcast %26 : vector<1x128xf32> to vector<256x128xf32>
      %28 = arith.addf %25, %27 : vector<256x128xf32>
      %cst_15 = arith.constant 0.000000e+00 : f32
      %29 = vector.broadcast %cst_15 : f32 to vector<256x128xf32>
      %30 = arith.maximumf %28, %29 : vector<256x128xf32>
      %31 = arith.truncf %30 : vector<256x128xf32> to vector<256x128xbf16>
      %c0_16 = arith.constant 0 : index
      %c0_17 = arith.constant 0 : index
      %32 = vector.load %arg7[%c0_16, %c0_17] : memref<128x128xbf16, #tpu.memory_space<vmem>>, vector<128x128xbf16>
      %cst_18 = arith.constant dense<0.000000e+00> : vector<256x128xf32>
      %33 = tpu.matmul %31, %32, %cst_18 {dimension_numbers = #tpu.dot_dimension_numbers<[1], [0], [0], [1], [0, 0, 1, 1], [], []>} : vector<256x128xbf16>, vector<128x128xbf16>, vector<256x128xf32> -> vector<256x128xf32>
      %c0_19 = arith.constant 0 : index
      %c0_20 = arith.constant 0 : index
      %34 = vector.load %arg8[%c0_19, %c0_20] : memref<1x128xf32, #tpu.memory_space<vmem>>, vector<1x128xf32>
      %35 = vector.broadcast %34 : vector<1x128xf32> to vector<256x128xf32>
      %36 = arith.addf %33, %35 : vector<256x128xf32>
      %cst_21 = arith.constant 0.000000e+00 : f32
      %37 = vector.broadcast %cst_21 : f32 to vector<256x128xf32>
      %38 = arith.maximumf %36, %37 : vector<256x128xf32>
      %c0_22 = arith.constant 0 : index
      %c0_23 = arith.constant 0 : index
      %39 = vector.load %arg9[%c0_22, %c0_23] : memref<256x128xf32, #tpu.memory_space<vmem>>, vector<256x128xf32>
      tpu.vector_store %arg9[%c0_22, %c0_23], %38 {strides = array<i32>} : memref<256x128xf32, #tpu.memory_space<vmem>>, vector<256x128xf32>,
      %40 = vector.broadcast %18 : vector<256x1xf32> to vector<256x128xf32>
      %41 = arith.mulf %38, %40 : vector<256x128xf32>
      %cst_24 = arith.constant dense<0.000000e+00> : vector<128xf32>
      %42 = vector.multi_reduction <add>, %41, %cst_24 [0] : vector<256x128xf32> to vector<128xf32>
      %43 = vector.shape_cast %42 : vector<128xf32> to vector<1x128xf32>
      %44 = arith.mulf %41, %41 : vector<256x128xf32>
      %cst_25 = arith.constant dense<0.000000e+00> : vector<128xf32>
      %45 = vector.multi_reduction <add>, %44, %cst_25 [0] : vector<256x128xf32> to vector<128xf32>
      %46 = vector.shape_cast %45 : vector<128xf32> to vector<1x128xf32>
      %47 = tpu.concatenate %43, %46 in 0 : vector<1x128xf32>, vector<1x128xf32> -> vector<2x128xf32>
      %c0_26 = arith.constant 0 : index
      %c0_27 = arith.constant 0 : index
      %c0_28 = arith.constant 0 : index
      %48 = vector.load %arg10[%c0_26, %c0_27, %c0_28] : memref<1x2x128xf32, #tpu.memory_space<vmem>>, vector<1x2x128xf32>
      %49 = vector.shape_cast %48 : vector<1x2x128xf32> to vector<2x128xf32>
      %50 = vector.shape_cast %47 : vector<2x128xf32> to vector<1x2x128xf32>
      tpu.vector_store %arg10[%c0_26, %c0_27, %c0_28], %50 {strides = array<i32>} : memref<1x2x128xf32, #tpu.memory_space<vmem>>, vector<1x2x128xf32>,
      %c0_29 = arith.constant 0 : index
      %c0_30 = arith.constant 0 : index
      %51 = vector.load %arg4[%c0_29, %c0_30] : memref<8x256xbf16, #tpu.memory_space<vmem>>, vector<8x256xbf16>
      %52 = arith.truncf %38 : vector<256x128xf32> to vector<256x128xbf16>
      %cst_31 = arith.constant dense<0.000000e+00> : vector<8x128xf32>
      %53 = tpu.matmul %51, %52, %cst_31 {dimension_numbers = #tpu.dot_dimension_numbers<[1], [0], [0], [1], [0, 0, 1, 1], [], []>} : vector<8x256xbf16>, vector<256x128xbf16>, vector<8x128xf32> -> vector<8x128xf32>
      %c0_32 = arith.constant 0 : index
      %c0_33 = arith.constant 0 : index
      %c0_34 = arith.constant 0 : index
      %54 = vector.load %arg11[%c0_32, %c0_33, %c0_34] : memref<1x8x128xf32, #tpu.memory_space<vmem>>, vector<1x8x128xf32>
      %55 = vector.shape_cast %54 : vector<1x8x128xf32> to vector<8x128xf32>
      %56 = vector.shape_cast %53 : vector<8x128xf32> to vector<1x8x128xf32>
      tpu.vector_store %arg11[%c0_32, %c0_33, %c0_34], %56 {strides = array<i32>} : memref<1x8x128xf32, #tpu.memory_space<vmem>>, vector<1x8x128xf32>,
    } else {
    }
    return
  }
  func.func @transform_0(%arg0: i32, %arg1: i32) -> (i32, i32) {
    %c0_i32 = arith.constant 0 : i32
    return %arg0, %arg1 : i32, i32
  }
  func.func @transform_1(%arg0: i32, %arg1: i32) -> (i32, i32) {
    %c0_i32 = arith.constant 0 : i32
    %c0_i32_0 = arith.constant 0 : i32
    %c0_i32_1 = arith.constant 0 : i32
    return %c0_i32, %c0_i32_0 : i32, i32
  }
  func.func @transform_2(%arg0: i32, %arg1: i32) -> (i32, i32) {
    %c0_i32 = arith.constant 0 : i32
    %c0_i32_0 = arith.constant 0 : i32
    return %c0_i32, %arg0 : i32, i32
  }
  func.func @transform_3(%arg0: i32, %arg1: i32) -> (i32, i32) {
    %c0_i32 = arith.constant 0 : i32
    %c0_i32_0 = arith.constant 0 : i32
    %c0_i32_1 = arith.constant 0 : i32
    return %c0_i32, %c0_i32_0 : i32, i32
  }
  func.func @transform_4(%arg0: i32, %arg1: i32) -> (i32, i32) {
    %c0_i32 = arith.constant 0 : i32
    %c0_i32_0 = arith.constant 0 : i32
    %c0_i32_1 = arith.constant 0 : i32
    return %c0_i32, %c0_i32_0 : i32, i32
  }
  func.func @transform_5(%arg0: i32, %arg1: i32) -> (i32, i32) {
    %c0_i32 = arith.constant 0 : i32
    %c0_i32_0 = arith.constant 0 : i32
    %c0_i32_1 = arith.constant 0 : i32
    return %c0_i32, %c0_i32_0 : i32, i32
  }
  func.func @transform_6(%arg0: i32, %arg1: i32) -> (i32, i32) {
    %c0_i32 = arith.constant 0 : i32
    %c0_i32_0 = arith.constant 0 : i32
    %c0_i32_1 = arith.constant 0 : i32
    return %c0_i32, %c0_i32_0 : i32, i32
  }
  func.func @transform_7(%arg0: i32, %arg1: i32) -> (i32, i32) {
    %c0_i32 = arith.constant 0 : i32
    %c0_i32_0 = arith.constant 0 : i32
    return %arg0, %c0_i32 : i32, i32
  }
  func.func @transform_8(%arg0: i32, %arg1: i32) -> (i32, i32, i32) {
    %c0_i32 = arith.constant 0 : i32
    %c0_i32_0 = arith.constant 0 : i32
    %c0_i32_1 = arith.constant 0 : i32
    return %arg0, %c0_i32, %c0_i32_0 : i32, i32, i32
  }
  func.func @transform_9(%arg0: i32, %arg1: i32) -> (i32, i32, i32) {
    %c0_i32 = arith.constant 0 : i32
    %c0_i32_0 = arith.constant 0 : i32
    %c0_i32_1 = arith.constant 0 : i32
    return %arg0, %c0_i32, %c0_i32_0 : i32, i32, i32
  }
}

module attributes {stable_mosaic.version = 11 : i64} {
  func.func @_gin_layer_kernel(%arg0: i32, %arg1: i32, %arg2: memref<256x512xbf16, #tpu.memory_space<vmem>>, %arg3: memref<1024x128xbf16, #tpu.memory_space<vmem>>, %arg4: memref<8x256xbf16, #tpu.memory_space<vmem>>, %arg5: memref<128x128xbf16, #tpu.memory_space<vmem>>, %arg6: memref<1x128xf32, #tpu.memory_space<vmem>>, %arg7: memref<128x128xbf16, #tpu.memory_space<vmem>>, %arg8: memref<1x128xf32, #tpu.memory_space<vmem>>, %arg9: memref<256x128xf32, #tpu.memory_space<vmem>>, %arg10: memref<1x2x128xf32, #tpu.memory_space<vmem>>, %arg11: memref<1x8x128xf32, #tpu.memory_space<vmem>>, %arg12: memref<256x128xf32, #tpu.memory_space<vmem>>) attributes {dimension_semantics = [#tpu.dimension_semantics<parallel>, #tpu.dimension_semantics<arbitrary>], iteration_bounds = array<i64: 4, 2>, scalar_prefetch = 0 : i64, scratch_operands = 1 : i64, tpu.core_type = #tpu.core_type<tc>, window_params = [{transform_indices = @transform_0, window_bounds = array<i64: 256, 512>}, {pipeline_mode = #tpu.pipeline_mode<synchronous>, transform_indices = @transform_1, window_bounds = array<i64: 1024, 128>}, {transform_indices = @transform_2, window_bounds = array<i64: 8, 256>}, {pipeline_mode = #tpu.pipeline_mode<synchronous>, transform_indices = @transform_3, window_bounds = array<i64: 128, 128>}, {pipeline_mode = #tpu.pipeline_mode<synchronous>, transform_indices = @transform_4, window_bounds = array<i64: 1, 128>}, {pipeline_mode = #tpu.pipeline_mode<synchronous>, transform_indices = @transform_5, window_bounds = array<i64: 128, 128>}, {pipeline_mode = #tpu.pipeline_mode<synchronous>, transform_indices = @transform_6, window_bounds = array<i64: 1, 128>}, {transform_indices = @transform_7, window_bounds = array<i64: 256, 128>}, {transform_indices = @transform_8, window_bounds = array<i64: 1, 2, 128>}, {transform_indices = @transform_9, window_bounds = array<i64: 1, 8, 128>}]} {
    %c0_i32 = arith.constant 0 : i32
    %0 = arith.cmpi eq, %arg1, %c0_i32 : i32
    %1 = arith.extui %0 : i1 to i32
    %c0_i32_0 = arith.constant 0 : i32
    %2 = arith.cmpi ne, %1, %c0_i32_0 : i32
    scf.if %2 {
      %cst_8 = arith.constant 0.000000e+00 : f32
      %22 = vector.broadcast %cst_8 : f32 to vector<256x128xf32>
      %c0_9 = arith.constant 0 : index
      %c0_10 = arith.constant 0 : index
      %23 = vector.load %arg12[%c0_9, %c0_10] : memref<256x128xf32, #tpu.memory_space<vmem>>, vector<256x128xf32>
      tpu.vector_store %arg12[%c0_9, %c0_10], %22 {strides = array<i32>} : memref<256x128xf32, #tpu.memory_space<vmem>>, vector<256x128xf32>,
    } else {
    }
    %c512_i32 = arith.constant 512 : i32
    %3 = arith.muli %arg1, %c512_i32 : i32
    %4 = arith.index_cast %3 : i32 to index
    %c0 = arith.constant 0 : index
    %5 = vector.load %arg3[%4, %c0] : memref<1024x128xbf16, #tpu.memory_space<vmem>>, vector<512x128xbf16>
    %c0_1 = arith.constant 0 : index
    %c0_2 = arith.constant 0 : index
    %6 = vector.load %arg12[%c0_1, %c0_2] : memref<256x128xf32, #tpu.memory_space<vmem>>, vector<256x128xf32>
    %c0_3 = arith.constant 0 : index
    %c0_4 = arith.constant 0 : index
    %7 = vector.load %arg2[%c0_3, %c0_4] : memref<256x512xbf16, #tpu.memory_space<vmem>>, vector<256x512xbf16>
    %cst = arith.constant dense<0.000000e+00> : vector<256x128xf32>
    %8 = tpu.matmul %7, %5, %cst {dimension_numbers = #tpu.dot_dimension_numbers<[1], [0], [0], [1], [0, 0, 1, 1], [], []>} : vector<256x512xbf16>, vector<512x128xbf16>, vector<256x128xf32> -> vector<256x128xf32>
    %9 = arith.addf %6, %8 : vector<256x128xf32>
    %c0_5 = arith.constant 0 : index
    %c0_6 = arith.constant 0 : index
    %10 = vector.load %arg12[%c0_5, %c0_6] : memref<256x128xf32, #tpu.memory_space<vmem>>, vector<256x128xf32>
    tpu.vector_store %arg12[%c0_5, %c0_6], %9 {strides = array<i32>} : memref<256x128xf32, #tpu.memory_space<vmem>>, vector<256x128xf32>,
    %c256_i32 = arith.constant 256 : i32
    %11 = arith.muli %arg0, %c256_i32 : i32
    %12 = tpu.iota {dimensions = array<i32: 0>} : vector<256x1xi32>
    %13 = vector.broadcast %11 : i32 to vector<256x1xi32>
    %14 = arith.addi %13, %12 : vector<256x1xi32>
    %c600_i32 = arith.constant 600 : i32
    %15 = vector.broadcast %c600_i32 : i32 to vector<256x1xi32>
    %16 = arith.cmpi slt, %14, %15 : vector<256x1xi32>
    %17 = arith.extui %16 : vector<256x1xi1> to vector<256x1xi32>
    %18 = arith.sitofp %17 : vector<256x1xi32> to vector<256x1xf32>
    %c1_i32 = arith.constant 1 : i32
    %19 = arith.cmpi eq, %arg1, %c1_i32 : i32
    %20 = arith.extui %19 : i1 to i32
    %c0_i32_7 = arith.constant 0 : i32
    %21 = arith.cmpi ne, %20, %c0_i32_7 : i32
    scf.if %21 {
      %c0_8 = arith.constant 0 : index
      %c0_9 = arith.constant 0 : index
      %22 = vector.load %arg12[%c0_8, %c0_9] : memref<256x128xf32, #tpu.memory_space<vmem>>, vector<256x128xf32>
      %23 = arith.truncf %22 : vector<256x128xf32> to vector<256x128xbf16>
      %c0_10 = arith.constant 0 : index
      %c0_11 = arith.constant 0 : index
      %24 = vector.load %arg5[%c0_10, %c0_11] : memref<128x128xbf16, #tpu.memory_space<vmem>>, vector<128x128xbf16>
      %cst_12 = arith.constant dense<0.000000e+00> : vector<256x128xf32>
      %25 = tpu.matmul %23, %24, %cst_12 {dimension_numbers = #tpu.dot_dimension_numbers<[1], [0], [0], [1], [0, 0, 1, 1], [], []>} : vector<256x128xbf16>, vector<128x128xbf16>, vector<256x128xf32> -> vector<256x128xf32>
      %c0_13 = arith.constant 0 : index
      %c0_14 = arith.constant 0 : index
      %26 = vector.load %arg6[%c0_13, %c0_14] : memref<1x128xf32, #tpu.memory_space<vmem>>, vector<1x128xf32>
      %27 = vector.broadcast %26 : vector<1x128xf32> to vector<256x128xf32>
      %28 = arith.addf %25, %27 : vector<256x128xf32>
      %cst_15 = arith.constant 0.000000e+00 : f32
      %29 = vector.broadcast %cst_15 : f32 to vector<256x128xf32>
      %30 = arith.maximumf %28, %29 : vector<256x128xf32>
      %31 = arith.truncf %30 : vector<256x128xf32> to vector<256x128xbf16>
      %c0_16 = arith.constant 0 : index
      %c0_17 = arith.constant 0 : index
      %32 = vector.load %arg7[%c0_16, %c0_17] : memref<128x128xbf16, #tpu.memory_space<vmem>>, vector<128x128xbf16>
      %cst_18 = arith.constant dense<0.000000e+00> : vector<256x128xf32>
      %33 = tpu.matmul %31, %32, %cst_18 {dimension_numbers = #tpu.dot_dimension_numbers<[1], [0], [0], [1], [0, 0, 1, 1], [], []>} : vector<256x128xbf16>, vector<128x128xbf16>, vector<256x128xf32> -> vector<256x128xf32>
      %c0_19 = arith.constant 0 : index
      %c0_20 = arith.constant 0 : index
      %34 = vector.load %arg8[%c0_19, %c0_20] : memref<1x128xf32, #tpu.memory_space<vmem>>, vector<1x128xf32>
      %35 = vector.broadcast %34 : vector<1x128xf32> to vector<256x128xf32>
      %36 = arith.addf %33, %35 : vector<256x128xf32>
      %cst_21 = arith.constant 0.000000e+00 : f32
      %37 = vector.broadcast %cst_21 : f32 to vector<256x128xf32>
      %38 = arith.maximumf %36, %37 : vector<256x128xf32>
      %c0_22 = arith.constant 0 : index
      %c0_23 = arith.constant 0 : index
      %39 = vector.load %arg9[%c0_22, %c0_23] : memref<256x128xf32, #tpu.memory_space<vmem>>, vector<256x128xf32>
      tpu.vector_store %arg9[%c0_22, %c0_23], %38 {strides = array<i32>} : memref<256x128xf32, #tpu.memory_space<vmem>>, vector<256x128xf32>,
      %40 = vector.broadcast %18 : vector<256x1xf32> to vector<256x128xf32>
      %41 = arith.mulf %38, %40 : vector<256x128xf32>
      %cst_24 = arith.constant dense<0.000000e+00> : vector<128xf32>
      %42 = vector.multi_reduction <add>, %41, %cst_24 [0] : vector<256x128xf32> to vector<128xf32>
      %43 = vector.shape_cast %42 : vector<128xf32> to vector<1x128xf32>
      %44 = arith.mulf %41, %41 : vector<256x128xf32>
      %cst_25 = arith.constant dense<0.000000e+00> : vector<128xf32>
      %45 = vector.multi_reduction <add>, %44, %cst_25 [0] : vector<256x128xf32> to vector<128xf32>
      %46 = vector.shape_cast %45 : vector<128xf32> to vector<1x128xf32>
      %47 = tpu.concatenate %43, %46 in 0 : vector<1x128xf32>, vector<1x128xf32> -> vector<2x128xf32>
      %c0_26 = arith.constant 0 : index
      %c0_27 = arith.constant 0 : index
      %c0_28 = arith.constant 0 : index
      %48 = vector.load %arg10[%c0_26, %c0_27, %c0_28] : memref<1x2x128xf32, #tpu.memory_space<vmem>>, vector<1x2x128xf32>
      %49 = vector.shape_cast %48 : vector<1x2x128xf32> to vector<2x128xf32>
      %50 = vector.shape_cast %47 : vector<2x128xf32> to vector<1x2x128xf32>
      tpu.vector_store %arg10[%c0_26, %c0_27, %c0_28], %50 {strides = array<i32>} : memref<1x2x128xf32, #tpu.memory_space<vmem>>, vector<1x2x128xf32>,
      %c0_29 = arith.constant 0 : index
      %c0_30 = arith.constant 0 : index
      %51 = vector.load %arg4[%c0_29, %c0_30] : memref<8x256xbf16, #tpu.memory_space<vmem>>, vector<8x256xbf16>
      %52 = arith.truncf %38 : vector<256x128xf32> to vector<256x128xbf16>
      %cst_31 = arith.constant dense<0.000000e+00> : vector<8x128xf32>
      %53 = tpu.matmul %51, %52, %cst_31 {dimension_numbers = #tpu.dot_dimension_numbers<[1], [0], [0], [1], [0, 0, 1, 1], [], []>} : vector<8x256xbf16>, vector<256x128xbf16>, vector<8x128xf32> -> vector<8x128xf32>
      %c0_32 = arith.constant 0 : index
      %c0_33 = arith.constant 0 : index
      %c0_34 = arith.constant 0 : index
      %54 = vector.load %arg11[%c0_32, %c0_33, %c0_34] : memref<1x8x128xf32, #tpu.memory_space<vmem>>, vector<1x8x128xf32>
      %55 = vector.shape_cast %54 : vector<1x8x128xf32> to vector<8x128xf32>
      %56 = vector.shape_cast %53 : vector<8x128xf32> to vector<1x8x128xf32>
      tpu.vector_store %arg11[%c0_32, %c0_33, %c0_34], %56 {strides = array<i32>} : memref<1x8x128xf32, #tpu.memory_space<vmem>>, vector<1x8x128xf32>,
    } else {
    }
    return
  }
  func.func @transform_0(%arg0: i32, %arg1: i32) -> (i32, i32) {
    %c0_i32 = arith.constant 0 : i32
    return %arg0, %arg1 : i32, i32
  }
  func.func @transform_1(%arg0: i32, %arg1: i32) -> (i32, i32) {
    %c0_i32 = arith.constant 0 : i32
    %c0_i32_0 = arith.constant 0 : i32
    %c0_i32_1 = arith.constant 0 : i32
    return %c0_i32, %c0_i32_0 : i32, i32
  }
  func.func @transform_2(%arg0: i32, %arg1: i32) -> (i32, i32) {
    %c0_i32 = arith.constant 0 : i32
    %c0_i32_0 = arith.constant 0 : i32
    return %c0_i32, %arg0 : i32, i32
  }
  func.func @transform_3(%arg0: i32, %arg1: i32) -> (i32, i32) {
    %c0_i32 = arith.constant 0 : i32
    %c0_i32_0 = arith.constant 0 : i32
    %c0_i32_1 = arith.constant 0 : i32
    return %c0_i32, %c0_i32_0 : i32, i32
  }
  func.func @transform_4(%arg0: i32, %arg1: i32) -> (i32, i32) {
    %c0_i32 = arith.constant 0 : i32
    %c0_i32_0 = arith.constant 0 : i32
    %c0_i32_1 = arith.constant 0 : i32
    return %c0_i32, %c0_i32_0 : i32, i32
  }
  func.func @transform_5(%arg0: i32, %arg1: i32) -> (i32, i32) {
    %c0_i32 = arith.constant 0 : i32
    %c0_i32_0 = arith.constant 0 : i32
    %c0_i32_1 = arith.constant 0 : i32
    return %c0_i32, %c0_i32_0 : i32, i32
  }
  func.func @transform_6(%arg0: i32, %arg1: i32) -> (i32, i32) {
    %c0_i32 = arith.constant 0 : i32
    %c0_i32_0 = arith.constant 0 : i32
    %c0_i32_1 = arith.constant 0 : i32
    return %c0_i32, %c0_i32_0 : i32, i32
  }
  func.func @transform_7(%arg0: i32, %arg1: i32) -> (i32, i32) {
    %c0_i32 = arith.constant 0 : i32
    %c0_i32_0 = arith.constant 0 : i32
    return %arg0, %c0_i32 : i32, i32
  }
  func.func @transform_8(%arg0: i32, %arg1: i32) -> (i32, i32, i32) {
    %c0_i32 = arith.constant 0 : i32
    %c0_i32_0 = arith.constant 0 : i32
    %c0_i32_1 = arith.constant 0 : i32
    return %arg0, %c0_i32, %c0_i32_0 : i32, i32, i32
  }
  func.func @transform_9(%arg0: i32, %arg1: i32) -> (i32, i32, i32) {
    %c0_i32 = arith.constant 0 : i32
    %c0_i32_0 = arith.constant 0 : i32
    %c0_i32_1 = arith.constant 0 : i32
    return %arg0, %c0_i32, %c0_i32_0 : i32, i32, i32
  }
}

module attributes {stable_mosaic.version = 11 : i64} {
  func.func @_proj_head_kernel(%arg0: memref<8x128xf32, #tpu.memory_space<vmem>>, %arg1: memref<8x128xf32, #tpu.memory_space<vmem>>, %arg2: memref<128x128xbf16, #tpu.memory_space<vmem>>, %arg3: memref<128x128xbf16, #tpu.memory_space<vmem>>, %arg4: memref<1x128xf32, #tpu.memory_space<vmem>>, %arg5: memref<128x128xbf16, #tpu.memory_space<vmem>>, %arg6: memref<1x128xf32, #tpu.memory_space<vmem>>, %arg7: memref<8x128xf32, #tpu.memory_space<vmem>>) attributes {dimension_semantics = [], scalar_prefetch = 0 : i64, scratch_operands = 0 : i64, tpu.core_type = #tpu.core_type<tc>} {
    %c0 = arith.constant 0 : index
    %c0_0 = arith.constant 0 : index
    %0 = vector.load %arg0[%c0, %c0_0] : memref<8x128xf32, #tpu.memory_space<vmem>>, vector<8x128xf32>
    %1 = arith.truncf %0 : vector<8x128xf32> to vector<8x128xbf16>
    %c0_1 = arith.constant 0 : index
    %c0_2 = arith.constant 0 : index
    %2 = vector.load %arg2[%c0_1, %c0_2] : memref<128x128xbf16, #tpu.memory_space<vmem>>, vector<128x128xbf16>
    %cst = arith.constant dense<0.000000e+00> : vector<8x128xf32>
    %3 = tpu.matmul %1, %2, %cst {dimension_numbers = #tpu.dot_dimension_numbers<[1], [0], [0], [1], [0, 0, 1, 1], [], []>} : vector<8x128xbf16>, vector<128x128xbf16>, vector<8x128xf32> -> vector<8x128xf32>
    %c0_3 = arith.constant 0 : index
    %c0_4 = arith.constant 0 : index
    %4 = vector.load %arg1[%c0_3, %c0_4] : memref<8x128xf32, #tpu.memory_space<vmem>>, vector<8x128xf32>
    %5 = arith.truncf %4 : vector<8x128xf32> to vector<8x128xbf16>
    %c0_5 = arith.constant 0 : index
    %c0_6 = arith.constant 0 : index
    %6 = vector.load %arg3[%c0_5, %c0_6] : memref<128x128xbf16, #tpu.memory_space<vmem>>, vector<128x128xbf16>
    %cst_7 = arith.constant dense<0.000000e+00> : vector<8x128xf32>
    %7 = tpu.matmul %5, %6, %cst_7 {dimension_numbers = #tpu.dot_dimension_numbers<[1], [0], [0], [1], [0, 0, 1, 1], [], []>} : vector<8x128xbf16>, vector<128x128xbf16>, vector<8x128xf32> -> vector<8x128xf32>
    %8 = arith.addf %3, %7 : vector<8x128xf32>
    %c0_8 = arith.constant 0 : index
    %c0_9 = arith.constant 0 : index
    %9 = vector.load %arg4[%c0_8, %c0_9] : memref<1x128xf32, #tpu.memory_space<vmem>>, vector<1x128xf32>
    %10 = vector.broadcast %9 : vector<1x128xf32> to vector<8x128xf32>
    %11 = arith.addf %8, %10 : vector<8x128xf32>
    %cst_10 = arith.constant 0.000000e+00 : f32
    %12 = vector.broadcast %cst_10 : f32 to vector<8x128xf32>
    %13 = arith.maximumf %11, %12 : vector<8x128xf32>
    %14 = arith.truncf %13 : vector<8x128xf32> to vector<8x128xbf16>
    %c0_11 = arith.constant 0 : index
    %c0_12 = arith.constant 0 : index
    %15 = vector.load %arg5[%c0_11, %c0_12] : memref<128x128xbf16, #tpu.memory_space<vmem>>, vector<128x128xbf16>
    %cst_13 = arith.constant dense<0.000000e+00> : vector<8x128xf32>
    %16 = tpu.matmul %14, %15, %cst_13 {dimension_numbers = #tpu.dot_dimension_numbers<[1], [0], [0], [1], [0, 0, 1, 1], [], []>} : vector<8x128xbf16>, vector<128x128xbf16>, vector<8x128xf32> -> vector<8x128xf32>
    %c0_14 = arith.constant 0 : index
    %c0_15 = arith.constant 0 : index
    %17 = vector.load %arg6[%c0_14, %c0_15] : memref<1x128xf32, #tpu.memory_space<vmem>>, vector<1x128xf32>
    %18 = vector.broadcast %17 : vector<1x128xf32> to vector<8x128xf32>
    %19 = arith.addf %16, %18 : vector<8x128xf32>
    %c0_16 = arith.constant 0 : index
    %c0_17 = arith.constant 0 : index
    %20 = vector.load %arg7[%c0_16, %c0_17] : memref<8x128xf32, #tpu.memory_space<vmem>>, vector<8x128xf32>
    tpu.vector_store %arg7[%c0_16, %c0_17], %19 {strides = array<i32>} : memref<8x128xf32, #tpu.memory_space<vmem>>, vector<8x128xf32>,
    return
  }
}

</mosaic_0001>

<llo_original>
// kernel: simclr_forward.3
$region0: #{simclr_forward.3}
  #allocation0 [shape = 'u32[]', space=smem, size = 0x4, offset = 0x4, fixed_abs, tag = 'smem constant byte address 0x4 - core index']
  #allocation1 [shape = 'u32[72,128]{1,0:T(1,128)}', space=vmem, size = 0x9000, scoped, tag = 'internal scratch']
  #allocation2 [shape = 'f32[256,128]{1,0:T(8,128)}', space=vmem, size = 0x20000, scoped, tag = 'scratch operand']
  %s0 = inlined_call_operand.vmem [shape: bf16[1024,1024], index: 0, kind: input, shape index: {}]
  %s1 = inlined_call_operand.vmem [shape: bf16[1024,128], index: 1, kind: input, shape index: {}]
  %s2 = inlined_call_operand.vmem [shape: bf16[8,1024], index: 2, kind: input, shape index: {}]
  %s3 = inlined_call_operand.vmem [shape: bf16[128,128], index: 3, kind: input, shape index: {}]
  %s4 = inlined_call_operand.vmem [shape: f32[1,128], index: 4, kind: input, shape index: {}]
  %s5 = inlined_call_operand.vmem [shape: bf16[128,128], index: 5, kind: input, shape index: {}]
  %s6 = inlined_call_operand.vmem [shape: f32[1,128], index: 6, kind: input, shape index: {}]
  %s7 = inlined_call_operand.vmem [shape: f32[1024,128], index: 7, kind: output, shape index: {0}]
  %s8 = inlined_call_operand.vmem [shape: f32[4,2,128], index: 8, kind: output, shape index: {1}]
  %s9 = inlined_call_operand.vmem [shape: f32[4,8,128], index: 9, kind: output, shape index: {2}]
  %10 = xla_tuple %s7, %s8, %s9
  %s11 = sld [smem:[#allocation0]]
  $region108: #{simclr_forward.3} parent=0
    _
  %s13 = ssub.s32 1, %s11
  %s14 = scalar_select 0, %s13, %s11
  $region1: #{simclr_forward.3} parent=0
    #allocation3 [shape = 'u8[524288]{0}', space=vmem, size = 0x80000, scoped, tag = 'input window, operand 0']
    loop: start=0, step=1, limit=10
    $region2: #{simclr_forward.3} parent=1 // loop_pre_header
      _
    $region3: #{simclr_forward.3} parent=1 // loop_header
      %s16 = sphi 0, %s20
      %p17 = scmp.ge.s32.totalorder %s16, 10
      %s23 = sphi 0, %s35
      %s24 = sphi 0, %s31
      %s25 = sphi 0, %s23
      %s26 = sphi 0, %s24
      %s27 = sphi 0, %s25
      %s28 = sphi 0, %s26
      %s40 = sphi 0, %s42
      %s43 = sphi 0, %s40
      %s44 = sphi 0, %s43
      %s60 = sphi 0, %s44
      %s64 = sphi 0, %s64
      %s66 = sphi 0, %s64
      %s67 = sphi 0, %s66
      %s81 = sphi 0, %s67
      %s87 = sphi 0, %s89
      %s90 = sphi 0, %s87
      %s91 = sphi 0, %s90
      %s107 = sphi 0, %s91
      %s111 = sphi 0, %s111
      %s113 = sphi 0, %s111
      %s114 = sphi 0, %s113
      %s128 = sphi 0, %s114
      %s132 = sphi 0, %s132
      %s134 = sphi 0, %s132
      %s135 = sphi 0, %s134
      %s149 = sphi 0, %s135
      %s153 = sphi 0, %s153
      %s155 = sphi 0, %s153
      %s156 = sphi 0, %s155
      %s170 = sphi 0, %s156
      %s174 = sphi 0, %s174
      %s176 = sphi 0, %s174
      %s177 = sphi 0, %s176
      %s191 = sphi 0, %s177
      %s197 = sphi 0, %s199
      %s200 = sphi 0, %s197
      %s201 = sphi 0, %s200
      %s217 = sphi 0, %s201
      %s223 = sphi 0, %s225
      %s226 = sphi 0, %s223
      %s227 = sphi 0, %s226
      %s243 = sphi 0, %s227
      %s249 = sphi 0, %s251
      %s252 = sphi 0, %s249
      %s253 = sphi 0, %s252
      %s269 = sphi 0, %s253
    $region4: #{simclr_forward.3} parent=1 // loop_header_branch
      %19 = sbr.rel (%p17) target = $region8
    $region5: #{simclr_forward.3} parent=1 // loop_body
      %s21 = ssub.s32 %s16, 1
      %s22 = ssub.s32 %s16, 2
      %s29 = sadd.s32 1, %s24
      %p30 = scmp.ge.s32.totalorder %s29, 2
      %s31 = scalar_select %p30, 0, %s29
      %s32 = sadd.s32 1, %s23
      %s33 = scalar_select %p30, %s32, %s23
      %p34 = scmp.ge.s32.totalorder %s33, 4
      %s35 = scalar_select %p34, 0, %s33
      %s36 = ssub.s32 %s23, %s35
      %s37 = ssub.s32 %s24, %s31
      %s38 = sor.u32 %s36, %s37
      %p39 = scmp.eq.s32.totalorder %s38, 0
      %s41 = sadd.s32 %s40, 1
      %s42 = scalar_select %p39, %s40, %s41
      %p45 = pneg %p39
      %p46 = scmp.eq.s32.totalorder %s16, 7
      %p47 = por %p45, %p46
      %p48 = scmp.ne.s32.totalorder %s40, %s43
      %p49 = scmp.eq.s32.totalorder %s16, 0
      %p50 = por %p48, %p49
      %p51 = scmp.ne.s32.totalorder %s40, %s43
      %p52 = scmp.eq.s32.totalorder %s21, 7
      %p53 = por %p51, %p52
      %p54 = scmp.ne.s32.totalorder %s43, %s44
      %p55 = scmp.eq.s32.totalorder %s21, 0
      %p56 = por %p54, %p55
      %p57 = scmp.ne.s32.totalorder %s43, %s44
      %p58 = scmp.eq.s32.totalorder %s22, 7
      %p59 = por %p57, %p58
      %p61 = scmp.ne.s32.totalorder %s44, %s60
      %p62 = scmp.eq.s32.totalorder %s22, 0
      %p63 = por %p61, %p62
      %s65 = sadd.s32 %s64, 1
      %p68 = scmp.eq.s32.totalorder %s16, 7
      %p69 = scmp.ne.s32.totalorder %s64, %s66
      %p70 = scmp.eq.s32.totalorder %s16, 0
      %p71 = por %p69, %p70
      %p72 = scmp.ne.s32.totalorder %s64, %s66
      %p73 = scmp.eq.s32.totalorder %s21, 7
      %p74 = por %p72, %p73
      %p75 = scmp.ne.s32.totalorder %s66, %s67
      %p76 = scmp.eq.s32.totalorder %s21, 0
      %p77 = por %p75, %p76
      %p78 = scmp.ne.s32.totalorder %s66, %s67
      %p79 = scmp.eq.s32.totalorder %s22, 7
      %p80 = por %p78, %p79
      %p82 = scmp.ne.s32.totalorder %s67, %s81
      %p83 = scmp.eq.s32.totalorder %s22, 0
      %p84 = por %p82, %p83
      %s85 = ssub.s32 %s23, %s35
      %p86 = scmp.eq.s32.totalorder %s85, 0
      %s88 = sadd.s32 %s87, 1
      %s89 = scalar_select %p86, %s87, %s88
      %p92 = pneg %p86
      %p93 = scmp.eq.s32.totalorder %s16, 7
      %p94 = por %p92, %p93
      %p95 = scmp.ne.s32.totalorder %s87, %s90
      %p96 = scmp.eq.s32.totalorder %s16, 0
      %p97 = por %p95, %p96
      %p98 = scmp.ne.s32.totalorder %s87, %s90
      %p99 = scmp.eq.s32.totalorder %s21, 7
      %p100 = por %p98, %p99
      %p101 = scmp.ne.s32.totalorder %s90, %s91
      %p102 = scmp.eq.s32.totalorder %s21, 0
      %p103 = por %p101, %p102
      %p104 = scmp.ne.s32.totalorder %s90, %s91
      %p105 = scmp.eq.s32.totalorder %s22, 7
      %p106 = por %p104, %p105
      %p108 = scmp.ne.s32.totalorder %s91, %s107
      %p109 = scmp.eq.s32.totalorder %s22, 0
      %p110 = por %p108, %p109
      %s112 = sadd.s32 %s111, 1
      %p115 = scmp.eq.s32.totalorder %s16, 7
      %p116 = scmp.ne.s32.totalorder %s111, %s113
      %p117 = scmp.eq.s32.totalorder %s16, 0
      %p118 = por %p116, %p117
      %p119 = scmp.ne.s32.totalorder %s111, %s113
      %p120 = scmp.eq.s32.totalorder %s21, 7
      %p121 = por %p119, %p120
      %p122 = scmp.ne.s32.totalorder %s113, %s114
      %p123 = scmp.eq.s32.totalorder %s21, 0
      %p124 = por %p122, %p123
      %p125 = scmp.ne.s32.totalorder %s113, %s114
      %p126 = scmp.eq.s32.totalorder %s22, 7
      %p127 = por %p125, %p126
      %p129 = scmp.ne.s32.totalorder %s114, %s128
      %p130 = scmp.eq.s32.totalorder %s22, 0
      %p131 = por %p129, %p130
      %s133 = sadd.s32 %s132, 1
      %p136 = scmp.eq.s32.totalorder %s16, 7
      %p137 = scmp.ne.s32.totalorder %s132, %s134
      %p138 = scmp.eq.s32.totalorder %s16, 0
      %p139 = por %p137, %p138
      %p140 = scmp.ne.s32.totalorder %s132, %s134
      %p141 = scmp.eq.s32.totalorder %s21, 7
      %p142 = por %p140, %p141
      %p143 = scmp.ne.s32.totalorder %s134, %s135
      %p144 = scmp.eq.s32.totalorder %s21, 0
      %p145 = por %p143, %p144
      %p146 = scmp.ne.s32.totalorder %s134, %s135
      %p147 = scmp.eq.s32.totalorder %s22, 7
      %p148 = por %p146, %p147
      %p150 = scmp.ne.s32.totalorder %s135, %s149
      %p151 = scmp.eq.s32.totalorder %s22, 0
      %p152 = por %p150, %p151
      %s154 = sadd.s32 %s153, 1
      %p157 = scmp.eq.s32.totalorder %s16, 7
      %p158 = scmp.ne.s32.totalorder %s153, %s155
      %p159 = scmp.eq.s32.totalorder %s16, 0
      %p160 = por %p158, %p159
      %p161 = scmp.ne.s32.totalorder %s153, %s155
      %p162 = scmp.eq.s32.totalorder %s21, 7
      %p163 = por %p161, %p162
      %p164 = scmp.ne.s32.totalorder %s155, %s156
      %p165 = scmp.eq.s32.totalorder %s21, 0
      %p166 = por %p164, %p165
      %p167 = scmp.ne.s32.totalorder %s155, %s156
      %p168 = scmp.eq.s32.totalorder %s22, 7
      %p169 = por %p167, %p168
      %p171 = scmp.ne.s32.totalorder %s156, %s170
      %p172 = scmp.eq.s32.totalorder %s22, 0
      %p173 = por %p171, %p172
      %s175 = sadd.s32 %s174, 1
      %p178 = scmp.eq.s32.totalorder %s16, 7
      %p179 = scmp.ne.s32.totalorder %s174, %s176
      %p180 = scmp.eq.s32.totalorder %s16, 0
      %p181 = por %p179, %p180
      %p182 = scmp.ne.s32.totalorder %s174, %s176
      %p183 = scmp.eq.s32.totalorder %s21, 7
      %p184 = por %p182, %p183
      %p185 = scmp.ne.s32.totalorder %s176, %s177
      %p186 = scmp.eq.s32.totalorder %s21, 0
      %p187 = por %p185, %p186
      %p188 = scmp.ne.s32.totalorder %s176, %s177
      %p189 = scmp.eq.s32.totalorder %s22, 7
      %p190 = por %p188, %p189
      %p192 = scmp.ne.s32.totalorder %s177, %s191
      %p193 = scmp.eq.s32.totalorder %s22, 0
      %p194 = por %p192, %p193
      %s195 = ssub.s32 %s23, %s35
      %p196 = scmp.eq.s32.totalorder %s195, 0
      %s198 = sadd.s32 %s197, 1
      %s199 = scalar_select %p196, %s197, %s198
      %p202 = pneg %p196
      %p203 = scmp.eq.s32.totalorder %s16, 7
      %p204 = por %p202, %p203
      %p205 = scmp.ne.s32.totalorder %s197, %s200
      %p206 = scmp.eq.s32.totalorder %s16, 0
      %p207 = por %p205, %p206
      %p208 = scmp.ne.s32.totalorder %s197, %s200
      %p209 = scmp.eq.s32.totalorder %s21, 7
      %p210 = por %p208, %p209
      %p211 = scmp.ne.s32.totalorder %s200, %s201
      %p212 = scmp.eq.s32.totalorder %s21, 0
      %p213 = por %p211, %p212
      %p214 = scmp.ne.s32.totalorder %s200, %s201
      %p215 = scmp.eq.s32.totalorder %s22, 7
      %p216 = por %p214, %p215
      %p218 = scmp.ne.s32.totalorder %s201, %s217
      %p219 = scmp.eq.s32.totalorder %s22, 0
      %p220 = por %p218, %p219
      %s221 = ssub.s32 %s23, %s35
      %p222 = scmp.eq.s32.totalorder %s221, 0
      %s224 = sadd.s32 %s223, 1
      %s225 = scalar_select %p222, %s223, %s224
      %p228 = pneg %p222
      %p229 = scmp.eq.s32.totalorder %s16, 7
      %p230 = por %p228, %p229
      %p231 = scmp.ne.s32.totalorder %s223, %s226
      %p232 = scmp.eq.s32.totalorder %s16, 0
      %p233 = por %p231, %p232
      %p234 = scmp.ne.s32.totalorder %s223, %s226
      %p235 = scmp.eq.s32.totalorder %s21, 7
      %p236 = por %p234, %p235
      %p237 = scmp.ne.s32.totalorder %s226, %s227
      %p238 = scmp.eq.s32.totalorder %s21, 0
      %p239 = por %p237, %p238
      %p240 = scmp.ne.s32.totalorder %s226, %s227
      %p241 = scmp.eq.s32.totalorder %s22, 7
      %p242 = por %p240, %p241
      %p244 = scmp.ne.s32.totalorder %s227, %s243
      %p245 = scmp.eq.s32.totalorder %s22, 0
      %p246 = por %p244, %p245
      %s247 = ssub.s32 %s23, %s35
      %p248 = scmp.eq.s32.totalorder %s247, 0
      %s250 = sadd.s32 %s249, 1
      %s251 = scalar_select %p248, %s249, %s250
      %p254 = pneg %p248
      %p255 = scmp.eq.s32.totalorder %s16, 7
      %p256 = por %p254, %p255
      %p257 = scmp.ne.s32.totalorder %s249, %s252
      %p258 = scmp.eq.s32.totalorder %s16, 0
      %p259 = por %p257, %p258
      %p260 = scmp.ne.s32.totalorder %s249, %s252
      %p261 = scmp.eq.s32.totalorder %s21, 7
      %p262 = por %p260, %p261
      %p263 = scmp.ne.s32.totalorder %s252, %s253
      %p264 = scmp.eq.s32.totalorder %s21, 0
      %p265 = por %p263, %p264
      %p266 = scmp.ne.s32.totalorder %s252, %s253
      %p267 = scmp.eq.s32.totalorder %s22, 7
      %p268 = por %p266, %p267
      %p270 = scmp.ne.s32.totalorder %s253, %s269
      %p271 = scmp.eq.s32.totalorder %s22, 0
      %p272 = por %p270, %p271
      %p273 = scmp.le.s32.totalorder 1, %s16
      %p274 = scmp.lt.s32.totalorder %s16, 9
      %p275 = pnand %p273, %p274
      %p276 = pneg %p275
      // Predicated region
      $region9: #{simclr_forward.3} parent=5 // pred_check
        _
      $region10: #{simclr_forward.3} parent=5 // pred_check_branch
        %278 = sbr.rel (%p275) target = $region12
      $region11: #{simclr_forward.3} parent=5 // pred_region
        %s279 = ssub.s32 %s16, 1
        // Predicated region
        $region13: #{simclr_forward.3} parent=11 // pred_check
          %p280 = pneg %p77
        $region14: #{simclr_forward.3} parent=11 // pred_check_branch
          %282 = sbr.rel (%p280) target = $region16
        $region15: #{simclr_forward.3} parent=11 // pred_region
          _
        $region16: #{simclr_forward.3} parent=11 // pred_fallthru
          _
        // Predicated region
        $region17: #{simclr_forward.3} parent=11 // pred_check
          %p283 = pneg %p124
        $region18: #{simclr_forward.3} parent=11 // pred_check_branch
          %285 = sbr.rel (%p283) target = $region20
        $region19: #{simclr_forward.3} parent=11 // pred_region
          _
        $region20: #{simclr_forward.3} parent=11 // pred_fallthru
          _
        // Predicated region
        $region21: #{simclr_forward.3} parent=11 // pred_check
          %p286 = pneg %p145
        $region22: #{simclr_forward.3} parent=11 // pred_check_branch
          %288 = sbr.rel (%p286) target = $region24
        $region23: #{simclr_forward.3} parent=11 // pred_region
          _
        $region24: #{simclr_forward.3} parent=11 // pred_fallthru
          _
        // Predicated region
        $region25: #{simclr_forward.3} parent=11 // pred_check
          %p289 = pneg %p166
        $region26: #{simclr_forward.3} parent=11 // pred_check_branch
          %291 = sbr.rel (%p289) target = $region28
        $region27: #{simclr_forward.3} parent=11 // pred_region
          _
        $region28: #{simclr_forward.3} parent=11 // pred_fallthru
          _
        // Predicated region
        $region29: #{simclr_forward.3} parent=11 // pred_check
          %p292 = pneg %p187
        $region30: #{simclr_forward.3} parent=11 // pred_check_branch
          %294 = sbr.rel (%p292) target = $region32
        $region31: #{simclr_forward.3} parent=11 // pred_region
          _
        $region32: #{simclr_forward.3} parent=11 // pred_fallthru
          _
      $region12: #{simclr_forward.3} parent=5 // pred_fallthru
        _
      %p295 = scmp.lt.s32.totalorder %s16, 8
      // Predicated region
      $region33: #{simclr_forward.3} parent=5 // pred_check
        %p296 = pneg %p295
      $region34: #{simclr_forward.3} parent=5 // pred_check_branch
        %298 = sbr.rel (%p296) target = $region36
      $region35: #{simclr_forward.3} parent=5 // pred_region
        // Predicated region
        $region37: #{simclr_forward.3} parent=35 // pred_check
          %p299 = pneg %p50
        $region38: #{simclr_forward.3} parent=35 // pred_check_branch
          %301 = sbr.rel (%p299) target = $region40
        $region39: #{simclr_forward.3} parent=35 // pred_region
          %s302 = sand.u32 %s40, 1
          %s303 = sand.u32 %s40, 1
          %s304 = smul.addr %s303, 512
          %s305 = scalar_lea.vmem [#allocation3], %s304
          %s306 = smul.u32 32, %s23
          %s307 = smul.u32 4, %s24
          %s308 = smul.addr %s306, 8
          %s309 = sadd.s32 %s307, %s308
          %s310 = smul.addr %s309, 4
          %s311 = scalar_lea.vmem %s0, %s310
          // Predicated region
          $region41: #{simclr_forward.3} parent=39 // pred_check
            _
          $region42: #{simclr_forward.3} parent=39 // pred_check_branch
            %313 = sbr.rel (0) target = $region44
          $region43: #{simclr_forward.3} parent=39 // pred_region
            // Predicated region
            $region45: #{simclr_forward.3} parent=43 // pred_check
              _
            $region46: #{simclr_forward.3} parent=43 // pred_check_branch
              %315 = sbr.rel (0) target = $region48
            $region47: #{simclr_forward.3} parent=43 // pred_region
              loop: start=0, step=1, limit=1
              $region49: #{simclr_forward.3} parent=47 // loop_pre_header
                _
              $region50: #{simclr_forward.3} parent=47 // loop_header
                %s317 = sphi 0, %s321
                %p318 = scmp.ge.s32.totalorder %s317, 1
                %s322 = sphi %s311, %s311
                %s323 = sphi %s305, %s305
              $region51: #{simclr_forward.3} parent=47 // loop_header_branch
                %320 = sbr.rel (%p318) target = $region55
              $region52: #{simclr_forward.3} parent=47 // loop_body
                %v324 = vld [vmem:[%s322] sm:$0xff]
                %325 = vst [vmem:[%s323] sm:$0xff] %v324
                %v326 = vld [vmem:[%s322 + $0x8] sm:$0xff]
                %327 = vst [vmem:[%s323 + $0x8] sm:$0xff] %v326
                %v328 = vld [vmem:[%s322 + $0x20] sm:$0xff]
                %329 = vst [vmem:[%s323 + $0x10] sm:$0xff] %v328
                %v330 = vld [vmem:[%s322 + $0x28] sm:$0xff]
                %331 = vst [vmem:[%s323 + $0x18] sm:$0xff] %v330
                %v332 = vld [vmem:[%s322 + $0x40] sm:$0xff]
                %333 = vst [vmem:[%s323 + $0x20] sm:$0xff] %v332
                %v334 = vld [vmem:[%s322 + $0x48] sm:$0xff]
                %335 = vst [vmem:[%s323 + $0x28] sm:$0xff] %v334
                %v336 = vld [vmem:[%s322 + $0x60] sm:$0xff]
                %337 = vst [vmem:[%s323 + $0x30] sm:$0xff] %v336
                %v338 = vld [vmem:[%s322 + $0x68] sm:$0xff]
                %339 = vst [vmem:[%s323 + $0x38] sm:$0xff] %v338
                %v340 = vld [vmem:[%s322 + $0x80] sm:$0xff]
                %341 = vst [vmem:[%s323 + $0x40] sm:$0xff] %v340
                %v342 = vld [vmem:[%s322 + $0x88] sm:$0xff]
                %343 = vst [vmem:[%s323 + $0x48] sm:$0xff] %v342
                %v344 = vld [vmem:[%s322 + $0xa0] sm:$0xff]
                %345 = vst [vmem:[%s323 + $0x50] sm:$0xff] %v344
                %v346 = vld [vmem:[%s322 + $0xa8] sm:$0xff]
                %347 = vst [vmem:[%s323 + $0x58] sm:$0xff] %v346
                %v348 = vld [vmem:[%s322 + $0xc0] sm:$0xff]
                %349 = vst [vmem:[%s323 + $0x60] sm:$0xff] %v348
                %v350 = vld [vmem:[%s322 + $0xc8] sm:$0xff]
                %351 = vst [vmem:[%s323 + $0x68] sm:$0xff] %v350
                %v352 = vld [vmem:[%s322 + $0xe0] sm:$0xff]
                %353 = vst [vmem:[%s323 + $0x70] sm:$0xff] %v352
                %v354 = vld [vmem:[%s322 + $0xe8] sm:$0xff]
                %355 = vst [vmem:[%s323 + $0x78] sm:$0xff] %v354
                %v356 = vld [vmem:[%s322 + $0x100] sm:$0xff]
                %357 = vst [vmem:[%s323 + $0x80] sm:$0xff] %v356
                %v358 = vld [vmem:[%s322 + $0x108] sm:$0xff]
                %359 = vst [vmem:[%s323 + $0x88] sm:$0xff] %v358
                %v360 = vld [vmem:[%s322 + $0x120] sm:$0xff]
                %361 = vst [vmem:[%s323 + $0x90] sm:$0xff] %v360
                %v362 = vld [vmem:[%s322 + $0x128] sm:$0xff]
                %363 = vst [vmem:[%s323 + $0x98] sm:$0xff] %v362
                %v364 = vld [vmem:[%s322 + $0x140] sm:$0xff]
                %365 = vst [vmem:[%s323 + $0xa0] sm:$0xff] %v364
                %v366 = vld [vmem:[%s322 + $0x148] sm:$0xff]
                %367 = vst [vmem:[%s323 + $0xa8] sm:$0xff] %v366
                %v368 = vld [vmem:[%s322 + $0x160] sm:$0xff]
                %369 = vst [vmem:[%s323 + $0xb0] sm:$0xff] %v368
                %v370 = vld [vmem:[%s322 + $0x168] sm:$0xff]
                %371 = vst [vmem:[%s323 + $0xb8] sm:$0xff] %v370
                %v372 = vld [vmem:[%s322 + $0x180] sm:$0xff]
                %373 = vst [vmem:[%s323 + $0xc0] sm:$0xff] %v372
                %v374 = vld [vmem:[%s322 + $0x188] sm:$0xff]
                %375 = vst [vmem:[%s323 + $0xc8] sm:$0xff] %v374
                %v376 = vld [vmem:[%s322 + $0x1a0] sm:$0xff]
                %377 = vst [vmem:[%s323 + $0xd0] sm:$0xff] %v376
                %v378 = vld [vmem:[%s322 + $0x1a8] sm:$0xff]
                %379 = vst [vmem:[%s323 + $0xd8] sm:$0xff] %v378
                %v380 = vld [vmem:[%s322 + $0x1c0] sm:$0xff]
                %381 = vst [vmem:[%s323 + $0xe0] sm:$0xff] %v380
                %v382 = vld [vmem:[%s322 + $0x1c8] sm:$0xff]
                %383 = vst [vmem:[%s323 + $0xe8] sm:$0xff] %v382
                %v384 = vld [vmem:[%s322 + $0x1e0] sm:$0xff]
                %385 = vst [vmem:[%s323 + $0xf0] sm:$0xff] %v384
                %v386 = vld [vmem:[%s322 + $0x1e8] sm:$0xff]
                %387 = vst [vmem:[%s323 + $0xf8] sm:$0xff] %v386
                %v388 = vld [vmem:[%s322 + $0x200] sm:$0xff]
                %389 = vst [vmem:[%s323 + $0x100] sm:$0xff] %v388
                %v390 = vld [vmem:[%s322 + $0x208] sm:$0xff]
                %391 = vst [vmem:[%s323 + $0x108] sm:$0xff] %v390
                %v392 = vld [vmem:[%s322 + $0x220] sm:$0xff]
                %393 = vst [vmem:[%s323 + $0x110] sm:$0xff] %v392
                %v394 = vld [vmem:[%s322 + $0x228] sm:$0xff]
                %395 = vst [vmem:[%s323 + $0x118] sm:$0xff] %v394
                %v396 = vld [vmem:[%s322 + $0x240] sm:$0xff]
                %397 = vst [vmem:[%s323 + $0x120] sm:$0xff] %v396
                %v398 = vld [vmem:[%s322 + $0x248] sm:$0xff]
                %399 = vst [vmem:[%s323 + $0x128] sm:$0xff] %v398
                %v400 = vld [vmem:[%s322 + $0x260] sm:$0xff]
                %401 = vst [vmem:[%s323 + $0x130] sm:$0xff] %v400
                %v402 = vld [vmem:[%s322 + $0x268] sm:$0xff]
                %403 = vst [vmem:[%s323 + $0x138] sm:$0xff] %v402
                %v404 = vld [vmem:[%s322 + $0x280] sm:$0xff]
                %405 = vst [vmem:[%s323 + $0x140] sm:$0xff] %v404
                %v406 = vld [vmem:[%s322 + $0x288] sm:$0xff]
                %407 = vst [vmem:[%s323 + $0x148] sm:$0xff] %v406
                %v408 = vld [vmem:[%s322 + $0x2a0] sm:$0xff]
                %409 = vst [vmem:[%s323 + $0x150] sm:$0xff] %v408
                %v410 = vld [vmem:[%s322 + $0x2a8] sm:$0xff]
                %411 = vst [vmem:[%s323 + $0x158] sm:$0xff] %v410
                %v412 = vld [vmem:[%s322 + $0x2c0] sm:$0xff]
                %413 = vst [vmem:[%s323 + $0x160] sm:$0xff] %v412
                %v414 = vld [vmem:[%s322 + $0x2c8] sm:$0xff]
                %415 = vst [vmem:[%s323 + $0x168] sm:$0xff] %v414
                %v416 = vld [vmem:[%s322 + $0x2e0] sm:$0xff]
                %417 = vst [vmem:[%s323 + $0x170] sm:$0xff] %v416
                %v418 = vld [vmem:[%s322 + $0x2e8] sm:$0xff]
                %419 = vst [vmem:[%s323 + $0x178] sm:$0xff] %v418
                %v420 = vld [vmem:[%s322 + $0x300] sm:$0xff]
                %421 = vst [vmem:[%s323 + $0x180] sm:$0xff] %v420
                %v422 = vld [vmem:[%s322 + $0x308] sm:$0xff]
                %423 = vst [vmem:[%s323 + $0x188] sm:$0xff] %v422
                %v424 = vld [vmem:[%s322 + $0x320] sm:$0xff]
                %425 = vst [vmem:[%s323 + $0x190] sm:$0xff] %v424
                %v426 = vld [vmem:[%s322 + $0x328] sm:$0xff]
                %427 = vst [vmem:[%s323 + $0x198] sm:$0xff] %v426
                %v428 = vld [vmem:[%s322 + $0x340] sm:$0xff]
                %429 = vst [vmem:[%s323 + $0x1a0] sm:$0xff] %v428
                %v430 = vld [vmem:[%s322 + $0x348] sm:$0xff]
                %431 = vst [vmem:[%s323 + $0x1a8] sm:$0xff] %v430
                %v432 = vld [vmem:[%s322 + $0x360] sm:$0xff]
                %433 = vst [vmem:[%s323 + $0x1b0] sm:$0xff] %v432
                %v434 = vld [vmem:[%s322 + $0x368] sm:$0xff]
                %435 = vst [vmem:[%s323 + $0x1b8] sm:$0xff] %v434
                %v436 = vld [vmem:[%s322 + $0x380] sm:$0xff]
                %437 = vst [vmem:[%s323 + $0x1c0] sm:$0xff] %v436
                %v438 = vld [vmem:[%s322 + $0x388] sm:$0xff]
                %439 = vst [vmem:[%s323 + $0x1c8] sm:$0xff] %v438
                %v440 = vld [vmem:[%s322 + $0x3a0] sm:$0xff]
                %441 = vst [vmem:[%s323 + $0x1d0] sm:$0xff] %v440
                %v442 = vld [vmem:[%s322 + $0x3a8] sm:$0xff]
                %443 = vst [vmem:[%s323 + $0x1d8] sm:$0xff] %v442
                %v444 = vld [vmem:[%s322 + $0x3c0] sm:$0xff]
                %445 = vst [vmem:[%s323 + $0x1e0] sm:$0xff] %v444
                %v446 = vld [vmem:[%s322 + $0x3c8] sm:$0xff]
                %447 = vst [vmem:[%s323 + $0x1e8] sm:$0xff] %v446
                %v448 = vld [vmem:[%s322 + $0x3e0] sm:$0xff]
                %449 = vst [vmem:[%s323 + $0x1f0] sm:$0xff] %v448
                %v450 = vld [vmem:[%s322 + $0x3e8] sm:$0xff]
                %451 = vst [vmem:[%s323 + $0x1f8] sm:$0xff] %v450
              $region53: #{simclr_forward.3} parent=47 // loop_footer
                %s321 = sadd.s32 1, %s317
              $region54: #{simclr_forward.3} parent=47 // loop_footer_branch
                %316 = sbr.rel target = $region50
              $region55: #{simclr_forward.3} parent=47 // loop_exit
                _
            $region48: #{simclr_forward.3} parent=43 // pred_fallthru
              _
            // Predicated region
            $region56: #{simclr_forward.3} parent=43 // pred_check
              _
            $region57: #{simclr_forward.3} parent=43 // pred_check_branch
              %453 = sbr.rel target = $region59
            $region58: #{simclr_forward.3} parent=43 // pred_region
              _
            $region59: #{simclr_forward.3} parent=43 // pred_fallthru
              _
          $region44: #{simclr_forward.3} parent=39 // pred_fallthru
            _
          %454 = vnop
        $region40: #{simclr_forward.3} parent=35 // pred_fallthru
          _
        // Predicated region
        $region60: #{simclr_forward.3} parent=35 // pred_check
          %p455 = pneg %p97
        $region61: #{simclr_forward.3} parent=35 // pred_check_branch
          %457 = sbr.rel (%p455) target = $region63
        $region62: #{simclr_forward.3} parent=35 // pred_region
          %s458 = smul.u32 2, %s23
          %p459 = scmp.lt.s32.totalorder %s458, 7
          %s460 = scalar_select %p459, %s458, 7
          %s461 = smul.addr %s460, 4
          %s462 = scalar_lea.vmem %s2, %s461
          %s463 = smul.u32 2, %s23
        $region63: #{simclr_forward.3} parent=35 // pred_fallthru
          _
      $region36: #{simclr_forward.3} parent=5 // pred_fallthru
        _
      %p464 = scmp.le.s32.totalorder 1, %s16
      %p465 = scmp.lt.s32.totalorder %s16, 9
      %p466 = pnand %p464, %p465
      %p467 = pneg %p466
      // Predicated region
      $region64: #{simclr_forward.3} parent=5 // pred_check
        _
      $region65: #{simclr_forward.3} parent=5 // pred_check_branch
        %469 = sbr.rel (%p466) target = $region67
      $region66: #{simclr_forward.3} parent=5 // pred_region
        %s470 = ssub.s32 %s16, 1
        %s471 = sand.u32 %s43, 1
        %s472 = sand.u32 %s43, 1
        %s473 = smul.addr %s472, 512
        %s474 = scalar_lea.vmem [#allocation3], %s473
        // Predicated region
        $region68: #{simclr_forward.3} parent=66 // pred_check
          %p475 = pneg %p56
        $region69: #{simclr_forward.3} parent=66 // pred_check_branch
          %477 = sbr.rel (%p475) target = $region71
        $region70: #{simclr_forward.3} parent=66 // pred_region
          _
        $region71: #{simclr_forward.3} parent=66 // pred_fallthru
          _
        %s478 = sand.u32 %s43, 1
        %s479 = sand.u32 %s43, 1
        %s480 = smul.addr %s479, 512
        %s481 = scalar_lea.vmem [#allocation3], %s480
        %p482 = pneg %p56
        %p483 = pneg %p53
        %p484 = pneg %p77
        %p485 = pneg %p74
        %s486 = smul.u32 2, %s25
        %p487 = scmp.lt.s32.totalorder %s486, 7
        %s488 = scalar_select %p487, %s486, 7
        %s489 = smul.addr %s488, 4
        %s490 = scalar_lea.vmem %s2, %s489
        %p491 = pneg %p103
        %p492 = pneg %p100
        %p493 = pneg %p124
        %p494 = pneg %p121
        %p495 = pneg %p145
        %p496 = pneg %p142
        %p497 = pneg %p166
        %p498 = pneg %p163
        %p499 = pneg %p187
        %p500 = pneg %p184
        %p501 = pneg %p213
        %p502 = pneg %p210
        %s503 = smul.u32 32, %s25
        %p504 = scmp.lt.s32.totalorder %s503, 127
        %s505 = scalar_select %p504, %s503, 127
        %s506 = smul.addr %s505, 8
        %s507 = scalar_lea.vmem %s7, %s506
        %p508 = pneg %p239
        %p509 = pneg %p236
        %p510 = scmp.lt.s32.totalorder %s25, 3
        %s511 = scalar_select %p510, %s25, 3
        %s512 = smul.addr %s511, 2
        %s513 = scalar_lea.vmem %s8, %s512
        %p514 = pneg %p265
        %p515 = pneg %p262
        %p516 = scmp.lt.s32.totalorder %s25, 3
        %s517 = scalar_select %p516, %s25, 3
        %s518 = smul.addr %s517, 8
        %s519 = scalar_lea.vmem %s9, %s518
        %s520 = smul.u32 32, %s25
        %s521 = smul.u32 4, %s26
        %s522 = smul.u32 2, %s25
        %p523 = scmp.lt.s32.totalorder %s522, 7
        %s524 = scalar_select %p523, %s522, 7
        %s525 = smul.addr %s524, 4
        %s526 = scalar_lea.vmem %s2, %s525
        %s527 = smul.u32 2, %s25
        %s528 = smul.u32 32, %s25
        %p529 = scmp.lt.s32.totalorder %s528, 127
        %s530 = scalar_select %p529, %s528, 127
        %s531 = smul.addr %s530, 8
        %s532 = scalar_lea.vmem %s7, %s531
        %s533 = smul.u32 32, %s25
        %p534 = scmp.lt.s32.totalorder %s25, 3
        %s535 = scalar_select %p534, %s25, 3
        %s536 = smul.addr %s535, 2
        %s537 = scalar_lea.vmem %s8, %s536
        %p538 = scmp.lt.s32.totalorder %s25, 3
        %s539 = scalar_select %p538, %s25, 3
        %s540 = smul.addr %s539, 8
        %s541 = scalar_lea.vmem %s9, %s540
        %p542 = scmp.eq.s32.totalorder %s26, 0
        // Predicated region
        $region72: #{simclr_forward.3} parent=66 // pred_check
          %p543 = pneg %p542
        $region73: #{simclr_forward.3} parent=66 // pred_check_branch
          %545 = sbr.rel (%p543) target = $region75
        $region74: #{simclr_forward.3} parent=66 // pred_region
          %546 = vst [vmem:[#allocation2] sm:$0xff] 0.0
          %547 = vst [vmem:[#allocation2 + $0x8] sm:$0xff] 0.0
          %548 = vst [vmem:[#allocation2 + $0x10] sm:$0xff] 0.0
          %549 = vst [vmem:[#allocation2 + $0x18] sm:$0xff] 0.0
          %550 = vst [vmem:[#allocation2 + $0x20] sm:$0xff] 0.0
          %551 = vst [vmem:[#allocation2 + $0x28] sm:$0xff] 0.0
          %552 = vst [vmem:[#allocation2 + $0x30] sm:$0xff] 0.0
          %553 = vst [vmem:[#allocation2 + $0x38] sm:$0xff] 0.0
          %554 = vst [vmem:[#allocation2 + $0x40] sm:$0xff] 0.0
          %555 = vst [vmem:[#allocation2 + $0x48] sm:$0xff] 0.0
          %556 = vst [vmem:[#allocation2 + $0x50] sm:$0xff] 0.0
          %557 = vst [vmem:[#allocation2 + $0x58] sm:$0xff] 0.0
          %558 = vst [vmem:[#allocation2 + $0x60] sm:$0xff] 0.0
          %559 = vst [vmem:[#allocation2 + $0x68] sm:$0xff] 0.0
          %560 = vst [vmem:[#allocation2 + $0x70] sm:$0xff] 0.0
          %561 = vst [vmem:[#allocation2 + $0x78] sm:$0xff] 0.0
          %562 = vst [vmem:[#allocation2 + $0x80] sm:$0xff] 0.0
          %563 = vst [vmem:[#allocation2 + $0x88] sm:$0xff] 0.0
          %564 = vst [vmem:[#allocation2 + $0x90] sm:$0xff] 0.0
          %565 = vst [vmem:[#allocation2 + $0x98] sm:$0xff] 0.0
          %566 = vst [vmem:[#allocation2 + $0xa0] sm:$0xff] 0.0
          %567 = vst [vmem:[#allocation2 + $0xa8] sm:$0xff] 0.0
          %568 = vst [vmem:[#allocation2 + $0xb0] sm:$0xff] 0.0
          %569 = vst [vmem:[#allocation2 + $0xb8] sm:$0xff] 0.0
          %570 = vst [vmem:[#allocation2 + $0xc0] sm:$0xff] 0.0
          %571 = vst [vmem:[#allocation2 + $0xc8] sm:$0xff] 0.0
          %572 = vst [vmem:[#allocation2 + $0xd0] sm:$0xff] 0.0
          %573 = vst [vmem:[#allocation2 + $0xd8] sm:$0xff] 0.0
          %574 = vst [vmem:[#allocation2 + $0xe0] sm:$0xff] 0.0
          %575 = vst [vmem:[#allocation2 + $0xe8] sm:$0xff] 0.0
          %576 = vst [vmem:[#allocation2 + $0xf0] sm:$0xff] 0.0
          %577 = vst [vmem:[#allocation2 + $0xf8] sm:$0xff] 0.0
        $region75: #{simclr_forward.3} parent=66 // pred_fallthru
          _
        %s578 = smul.u32 %s26, 512
        %s579 = sshra.s32 %s578, 3
        %s580 = sand.u32 %s578, 7
        %s581 = smul.addr %s579, 4
        %s582 = scalar_lea.vmem %s1, %s581
        %v583 = vld [vmem:[%s582] sm:$0xf]
        %v584 = vld [vmem:[%s582 + $0x4] sm:$0xf]
        %v585 = vld [vmem:[%s582 + $0x8] sm:$0xf]
        %v586 = vld [vmem:[%s582 + $0xc] sm:$0xf]
        %v587 = vld [vmem:[%s582 + $0x10] sm:$0xf]
        %v588 = vld [vmem:[%s582 + $0x14] sm:$0xf]
        %v589 = vld [vmem:[%s582 + $0x18] sm:$0xf]
        %v590 = vld [vmem:[%s582 + $0x1c] sm:$0xf]
        %v591 = vld [vmem:[%s582 + $0x20] sm:$0xf]
        %v592 = vld [vmem:[%s582 + $0x24] sm:$0xf]
        %v593 = vld [vmem:[%s582 + $0x28] sm:$0xf]
        %v594 = vld [vmem:[%s582 + $0x2c] sm:$0xf]
        %v595 = vld [vmem:[%s582 + $0x30] sm:$0xf]
        %v596 = vld [vmem:[%s582 + $0x34] sm:$0xf]
        %v597 = vld [vmem:[%s582 + $0x38] sm:$0xf]
        %v598 = vld [vmem:[%s582 + $0x3c] sm:$0xf]
        %v599 = vld [vmem:[%s582 + $0x40] sm:$0xf]
        %v600 = vld [vmem:[%s582 + $0x44] sm:$0xf]
        %v601 = vld [vmem:[%s582 + $0x48] sm:$0xf]
        %v602 = vld [vmem:[%s582 + $0x4c] sm:$0xf]
        %v603 = vld [vmem:[%s582 + $0x50] sm:$0xf]
        %v604 = vld [vmem:[%s582 + $0x54] sm:$0xf]
        %v605 = vld [vmem:[%s582 + $0x58] sm:$0xf]
        %v606 = vld [vmem:[%s582 + $0x5c] sm:$0xf]
        %v607 = vld [vmem:[%s582 + $0x60] sm:$0xf]
        %v608 = vld [vmem:[%s582 + $0x64] sm:$0xf]
        %v609 = vld [vmem:[%s582 + $0x68] sm:$0xf]
        %v610 = vld [vmem:[%s582 + $0x6c] sm:$0xf]
        %v611 = vld [vmem:[%s582 + $0x70] sm:$0xf]
        %v612 = vld [vmem:[%s582 + $0x74] sm:$0xf]
        %v613 = vld [vmem:[%s582 + $0x78] sm:$0xf]
        %v614 = vld [vmem:[%s582 + $0x7c] sm:$0xf]
        %v615 = vld [vmem:[%s582 + $0x80] sm:$0xf]
        %v616 = vld [vmem:[%s582 + $0x84] sm:$0xf]
        %v617 = vld [vmem:[%s582 + $0x88] sm:$0xf]
        %v618 = vld [vmem:[%s582 + $0x8c] sm:$0xf]
        %v619 = vld [vmem:[%s582 + $0x90] sm:$0xf]
        %v620 = vld [vmem:[%s582 + $0x94] sm:$0xf]
        %v621 = vld [vmem:[%s582 + $0x98] sm:$0xf]
        %v622 = vld [vmem:[%s582 + $0x9c] sm:$0xf]
        %v623 = vld [vmem:[%s582 + $0xa0] sm:$0xf]
        %v624 = vld [vmem:[%s582 + $0xa4] sm:$0xf]
        %v625 = vld [vmem:[%s582 + $0xa8] sm:$0xf]
        %v626 = vld [vmem:[%s582 + $0xac] sm:$0xf]
        %v627 = vld [vmem:[%s582 + $0xb0] sm:$0xf]
        %v628 = vld [vmem:[%s582 + $0xb4] sm:$0xf]
        %v629 = vld [vmem:[%s582 + $0xb8] sm:$0xf]
        %v630 = vld [vmem:[%s582 + $0xbc] sm:$0xf]
        %v631 = vld [vmem:[%s582 + $0xc0] sm:$0xf]
        %v632 = vld [vmem:[%s582 + $0xc4] sm:$0xf]
        %v633 = vld [vmem:[%s582 + $0xc8] sm:$0xf]
        %v634 = vld [vmem:[%s582 + $0xcc] sm:$0xf]
        %v635 = vld [vmem:[%s582 + $0xd0] sm:$0xf]
        %v636 = vld [vmem:[%s582 + $0xd4] sm:$0xf]
        %v637 = vld [vmem:[%s582 + $0xd8] sm:$0xf]
        %v638 = vld [vmem:[%s582 + $0xdc] sm:$0xf]
        %v639 = vld [vmem:[%s582 + $0xe0] sm:$0xf]
        %v640 = vld [vmem:[%s582 + $0xe4] sm:$0xf]
        %v641 = vld [vmem:[%s582 + $0xe8] sm:$0xf]
        %v642 = vld [vmem:[%s582 + $0xec] sm:$0xf]
        %v643 = vld [vmem:[%s582 + $0xf0] sm:$0xf]
        %v644 = vld [vmem:[%s582 + $0xf4] sm:$0xf]
        %v645 = vld [vmem:[%s582 + $0xf8] sm:$0xf]
        %v646 = vld [vmem:[%s582 + $0xfc] sm:$0xf]
        %v647 = vld [vmem:[#allocation2] sm:$0xff]
        %v648 = vld [vmem:[#allocation2 + $0x8] sm:$0xff]
        %v649 = vld [vmem:[#allocation2 + $0x10] sm:$0xff]
        %v650 = vld [vmem:[#allocation2 + $0x18] sm:$0xff]
        %v651 = vld [vmem:[#allocation2 + $0x20] sm:$0xff]
        %v652 = vld [vmem:[#allocation2 + $0x28] sm:$0xff]
        %v653 = vld [vmem:[#allocation2 + $0x30] sm:$0xff]
        %v654 = vld [vmem:[#allocation2 + $0x38] sm:$0xff]
        %v655 = vld [vmem:[#allocation2 + $0x40] sm:$0xff]
        %v656 = vld [vmem:[#allocation2 + $0x48] sm:$0xff]
        %v657 = vld [vmem:[#allocation2 + $0x50] sm:$0xff]
        %v658 = vld [vmem:[#allocation2 + $0x58] sm:$0xff]
        %v659 = vld [vmem:[#allocation2 + $0x60] sm:$0xff]
        %v660 = vld [vmem:[#allocation2 + $0x68] sm:$0xff]
        %v661 = vld [vmem:[#allocation2 + $0x70] sm:$0xff]
        %v662 = vld [vmem:[#allocation2 + $0x78] sm:$0xff]
        %v663 = vld [vmem:[#allocation2 + $0x80] sm:$0xff]
        %v664 = vld [vmem:[#allocation2 + $0x88] sm:$0xff]
        %v665 = vld [vmem:[#allocation2 + $0x90] sm:$0xff]
        %v666 = vld [vmem:[#allocation2 + $0x98] sm:$0xff]
        %v667 = vld [vmem:[#allocation2 + $0xa0] sm:$0xff]
        %v668 = vld [vmem:[#allocation2 + $0xa8] sm:$0xff]
        %v669 = vld [vmem:[#allocation2 + $0xb0] sm:$0xff]
        %v670 = vld [vmem:[#allocation2 + $0xb8] sm:$0xff]
        %v671 = vld [vmem:[#allocation2 + $0xc0] sm:$0xff]
        %v672 = vld [vmem:[#allocation2 + $0xc8] sm:$0xff]
        %v673 = vld [vmem:[#allocation2 + $0xd0] sm:$0xff]
        %v674 = vld [vmem:[#allocation2 + $0xd8] sm:$0xff]
        %v675 = vld [vmem:[#allocation2 + $0xe0] sm:$0xff]
        %v676 = vld [vmem:[#allocation2 + $0xe8] sm:$0xff]
        %v677 = vld [vmem:[#allocation2 + $0xf0] sm:$0xff]
        %v678 = vld [vmem:[#allocation2 + $0xf8] sm:$0xff]
        %v679 = vld [vmem:[%s474] sm:$0xff]
        %v680 = vld [vmem:[%s474 + $0x8] sm:$0xff]
        %v681 = vld [vmem:[%s474 + $0x10] sm:$0xff]
        %v682 = vld [vmem:[%s474 + $0x18] sm:$0xff]
        %v683 = vld [vmem:[%s474 + $0x20] sm:$0xff]
        %v684 = vld [vmem:[%s474 + $0x28] sm:$0xff]
        %v685 = vld [vmem:[%s474 + $0x30] sm:$0xff]
        %v686 = vld [vmem:[%s474 + $0x38] sm:$0xff]
        %v687 = vld [vmem:[%s474 + $0x40] sm:$0xff]
        %v688 = vld [vmem:[%s474 + $0x48] sm:$0xff]
        %v689 = vld [vmem:[%s474 + $0x50] sm:$0xff]
        %v690 = vld [vmem:[%s474 + $0x58] sm:$0xff]
        %v691 = vld [vmem:[%s474 + $0x60] sm:$0xff]
        %v692 = vld [vmem:[%s474 + $0x68] sm:$0xff]
        %v693 = vld [vmem:[%s474 + $0x70] sm:$0xff]
        %v694 = vld [vmem:[%s474 + $0x78] sm:$0xff]
        %v695 = vld [vmem:[%s474 + $0x80] sm:$0xff]
        %v696 = vld [vmem:[%s474 + $0x88] sm:$0xff]
        %v697 = vld [vmem:[%s474 + $0x90] sm:$0xff]
        %v698 = vld [vmem:[%s474 + $0x98] sm:$0xff]
        %v699 = vld [vmem:[%s474 + $0xa0] sm:$0xff]
        %v700 = vld [vmem:[%s474 + $0xa8] sm:$0xff]
        %v701 = vld [vmem:[%s474 + $0xb0] sm:$0xff]
        %v702 = vld [vmem:[%s474 + $0xb8] sm:$0xff]
        %v703 = vld [vmem:[%s474 + $0xc0] sm:$0xff]
        %v704 = vld [vmem:[%s474 + $0xc8] sm:$0xff]
        %v705 = vld [vmem:[%s474 + $0xd0] sm:$0xff]
        %v706 = vld [vmem:[%s474 + $0xd8] sm:$0xff]
        %v707 = vld [vmem:[%s474 + $0xe0] sm:$0xff]
        %v708 = vld [vmem:[%s474 + $0xe8] sm:$0xff]
        %v709 = vld [vmem:[%s474 + $0xf0] sm:$0xff]
        %v710 = vld [vmem:[%s474 + $0xf8] sm:$0xff]
        %v711 = vld [vmem:[%s474 + $0x100] sm:$0xff]
        %v712 = vld [vmem:[%s474 + $0x108] sm:$0xff]
        %v713 = vld [vmem:[%s474 + $0x110] sm:$0xff]
        %v714 = vld [vmem:[%s474 + $0x118] sm:$0xff]
        %v715 = vld [vmem:[%s474 + $0x120] sm:$0xff]
        %v716 = vld [vmem:[%s474 + $0x128] sm:$0xff]
        %v717 = vld [vmem:[%s474 + $0x130] sm:$0xff]
        %v718 = vld [vmem:[%s474 + $0x138] sm:$0xff]
        %v719 = vld [vmem:[%s474 + $0x140] sm:$0xff]
        %v720 = vld [vmem:[%s474 + $0x148] sm:$0xff]
        %v721 = vld [vmem:[%s474 + $0x150] sm:$0xff]
        %v722 = vld [vmem:[%s474 + $0x158] sm:$0xff]
        %v723 = vld [vmem:[%s474 + $0x160] sm:$0xff]
        %v724 = vld [vmem:[%s474 + $0x168] sm:$0xff]
        %v725 = vld [vmem:[%s474 + $0x170] sm:$0xff]
        %v726 = vld [vmem:[%s474 + $0x178] sm:$0xff]
        %v727 = vld [vmem:[%s474 + $0x180] sm:$0xff]
        %v728 = vld [vmem:[%s474 + $0x188] sm:$0xff]
        %v729 = vld [vmem:[%s474 + $0x190] sm:$0xff]
        %v730 = vld [vmem:[%s474 + $0x198] sm:$0xff]
        %v731 = vld [vmem:[%s474 + $0x1a0] sm:$0xff]
        %v732 = vld [vmem:[%s474 + $0x1a8] sm:$0xff]
        %v733 = vld [vmem:[%s474 + $0x1b0] sm:$0xff]
        %v734 = vld [vmem:[%s474 + $0x1b8] sm:$0xff]
        %v735 = vld [vmem:[%s474 + $0x1c0] sm:$0xff]
        %v736 = vld [vmem:[%s474 + $0x1c8] sm:$0xff]
        %v737 = vld [vmem:[%s474 + $0x1d0] sm:$0xff]
        %v738 = vld [vmem:[%s474 + $0x1d8] sm:$0xff]
        %v739 = vld [vmem:[%s474 + $0x1e0] sm:$0xff]
        %v740 = vld [vmem:[%s474 + $0x1e8] sm:$0xff]
        %v741 = vld [vmem:[%s474 + $0x1f0] sm:$0xff]
        %v742 = vld [vmem:[%s474 + $0x1f8] sm:$0xff]
        %v807 = vunpack.c.l.b16 %v679
        %v808 = vunpack.c.h.b16 %v679
        %v809 = vunpack.c.l.b16 %v680
        %v810 = vunpack.c.h.b16 %v680
        %v811 = vunpack.c.l.b16 %v681
        %v812 = vunpack.c.h.b16 %v681
        %v813 = vunpack.c.l.b16 %v682
        %v814 = vunpack.c.h.b16 %v682
        %v815 = vunpack.c.l.b16 %v683
        %v816 = vunpack.c.h.b16 %v683
        %v817 = vunpack.c.l.b16 %v684
        %v818 = vunpack.c.h.b16 %v684
        %v819 = vunpack.c.l.b16 %v685
        %v820 = vunpack.c.h.b16 %v685
        %v821 = vunpack.c.l.b16 %v686
        %v822 = vunpack.c.h.b16 %v686
        %v823 = vunpack.c.l.b16 %v687
        %v824 = vunpack.c.h.b16 %v687
        %v825 = vunpack.c.l.b16 %v688
        %v826 = vunpack.c.h.b16 %v688
        %v827 = vunpack.c.l.b16 %v689
        %v828 = vunpack.c.h.b16 %v689
        %v829 = vunpack.c.l.b16 %v690
        %v830 = vunpack.c.h.b16 %v690
        %v831 = vunpack.c.l.b16 %v691
        %v832 = vunpack.c.h.b16 %v691
        %v833 = vunpack.c.l.b16 %v692
        %v834 = vunpack.c.h.b16 %v692
        %v835 = vunpack.c.l.b16 %v693
        %v836 = vunpack.c.h.b16 %v693
        %v837 = vunpack.c.l.b16 %v694
        %v838 = vunpack.c.h.b16 %v694
        %v839 = vunpack.c.l.b16 %v695
        %v840 = vunpack.c.h.b16 %v695
        %v841 = vunpack.c.l.b16 %v696
        %v842 = vunpack.c.h.b16 %v696
        %v843 = vunpack.c.l.b16 %v697
        %v844 = vunpack.c.h.b16 %v697
        %v845 = vunpack.c.l.b16 %v698
        %v846 = vunpack.c.h.b16 %v698
        %v847 = vunpack.c.l.b16 %v699
        %v848 = vunpack.c.h.b16 %v699
        %v849 = vunpack.c.l.b16 %v700
        %v850 = vunpack.c.h.b16 %v700
        %v851 = vunpack.c.l.b16 %v701
        %v852 = vunpack.c.h.b16 %v701
        %v853 = vunpack.c.l.b16 %v702
        %v854 = vunpack.c.h.b16 %v702
        %v855 = vunpack.c.l.b16 %v703
        %v856 = vunpack.c.h.b16 %v703
        %v857 = vunpack.c.l.b16 %v704
        %v858 = vunpack.c.h.b16 %v704
        %v859 = vunpack.c.l.b16 %v705
        %v860 = vunpack.c.h.b16 %v705
        %v861 = vunpack.c.l.b16 %v706
        %v862 = vunpack.c.h.b16 %v706
        %v863 = vunpack.c.l.b16 %v707
        %v864 = vunpack.c.h.b16 %v707
        %v865 = vunpack.c.l.b16 %v708
        %v866 = vunpack.c.h.b16 %v708
        %v867 = vunpack.c.l.b16 %v709
        %v868 = vunpack.c.h.b16 %v709
        %v869 = vunpack.c.l.b16 %v710
        %v870 = vunpack.c.h.b16 %v710
        %v871 = vunpack.c.l.b16 %v711
        %v872 = vunpack.c.h.b16 %v711
        %v873 = vunpack.c.l.b16 %v712
        %v874 = vunpack.c.h.b16 %v712
        %v875 = vunpack.c.l.b16 %v713
        %v876 = vunpack.c.h.b16 %v713
        %v877 = vunpack.c.l.b16 %v714
        %v878 = vunpack.c.h.b16 %v714
        %v879 = vunpack.c.l.b16 %v715
        %v880 = vunpack.c.h.b16 %v715
        %v881 = vunpack.c.l.b16 %v716
        %v882 = vunpack.c.h.b16 %v716
        %v883 = vunpack.c.l.b16 %v717
        %v884 = vunpack.c.h.b16 %v717
        %v885 = vunpack.c.l.b16 %v718
        %v886 = vunpack.c.h.b16 %v718
        %v887 = vunpack.c.l.b16 %v719
        %v888 = vunpack.c.h.b16 %v719
        %v889 = vunpack.c.l.b16 %v720
        %v890 = vunpack.c.h.b16 %v720
        %v891 = vunpack.c.l.b16 %v721
        %v892 = vunpack.c.h.b16 %v721
        %v893 = vunpack.c.l.b16 %v722
        %v894 = vunpack.c.h.b16 %v722
        %v895 = vunpack.c.l.b16 %v723
        %v896 = vunpack.c.h.b16 %v723
        %v897 = vunpack.c.l.b16 %v724
        %v898 = vunpack.c.h.b16 %v724
        %v899 = vunpack.c.l.b16 %v725
        %v900 = vunpack.c.h.b16 %v725
        %v901 = vunpack.c.l.b16 %v726
        %v902 = vunpack.c.h.b16 %v726
        %v903 = vunpack.c.l.b16 %v727
        %v904 = vunpack.c.h.b16 %v727
        %v905 = vunpack.c.l.b16 %v728
        %v906 = vunpack.c.h.b16 %v728
        %v907 = vunpack.c.l.b16 %v729
        %v908 = vunpack.c.h.b16 %v729
        %v909 = vunpack.c.l.b16 %v730
        %v910 = vunpack.c.h.b16 %v730
        %v911 = vunpack.c.l.b16 %v731
        %v912 = vunpack.c.h.b16 %v731
        %v913 = vunpack.c.l.b16 %v732
        %v914 = vunpack.c.h.b16 %v732
        %v915 = vunpack.c.l.b16 %v733
        %v916 = vunpack.c.h.b16 %v733
        %v917 = vunpack.c.l.b16 %v734
        %v918 = vunpack.c.h.b16 %v734
        %v919 = vunpack.c.l.b16 %v735
        %v920 = vunpack.c.h.b16 %v735
        %v921 = vunpack.c.l.b16 %v736
        %v922 = vunpack.c.h.b16 %v736
        %v923 = vunpack.c.l.b16 %v737
        %v924 = vunpack.c.h.b16 %v737
        %v925 = vunpack.c.l.b16 %v738
        %v926 = vunpack.c.h.b16 %v738
        %v927 = vunpack.c.l.b16 %v739
        %v928 = vunpack.c.h.b16 %v739
        %v929 = vunpack.c.l.b16 %v740
        %v930 = vunpack.c.h.b16 %v740
        %v931 = vunpack.c.l.b16 %v741
        %v932 = vunpack.c.h.b16 %v741
        %v933 = vunpack.c.l.b16 %v742
        %v934 = vunpack.c.h.b16 %v742
        %v935 = vpack.c.b16 %v811, %v807
        %v936 = vpack.c.b16 %v812, %v808
        %v937 = vpack.c.b16 %v813, %v809
        %v938 = vpack.c.b16 %v814, %v810
        %v939 = vpack.c.b16 %v819, %v815
        %v940 = vpack.c.b16 %v820, %v816
        %v941 = vpack.c.b16 %v821, %v817
        %v942 = vpack.c.b16 %v822, %v818
        %v943 = vpack.c.b16 %v827, %v823
        %v944 = vpack.c.b16 %v828, %v824
        %v945 = vpack.c.b16 %v829, %v825
        %v946 = vpack.c.b16 %v830, %v826
        %v947 = vpack.c.b16 %v835, %v831
        %v948 = vpack.c.b16 %v836, %v832
        %v949 = vpack.c.b16 %v837, %v833
        %v950 = vpack.c.b16 %v838, %v834
        %v951 = vpack.c.b16 %v843, %v839
        %v952 = vpack.c.b16 %v844, %v840
        %v953 = vpack.c.b16 %v845, %v841
        %v954 = vpack.c.b16 %v846, %v842
        %v955 = vpack.c.b16 %v851, %v847
        %v956 = vpack.c.b16 %v852, %v848
        %v957 = vpack.c.b16 %v853, %v849
        %v958 = vpack.c.b16 %v854, %v850
        %v959 = vpack.c.b16 %v859, %v855
        %v960 = vpack.c.b16 %v860, %v856
        %v961 = vpack.c.b16 %v861, %v857
        %v962 = vpack.c.b16 %v862, %v858
        %v963 = vpack.c.b16 %v867, %v863
        %v964 = vpack.c.b16 %v868, %v864
        %v965 = vpack.c.b16 %v869, %v865
        %v966 = vpack.c.b16 %v870, %v866
        %v967 = vpack.c.b16 %v875, %v871
        %v968 = vpack.c.b16 %v876, %v872
        %v969 = vpack.c.b16 %v877, %v873
        %v970 = vpack.c.b16 %v878, %v874
        %v971 = vpack.c.b16 %v883, %v879
        %v972 = vpack.c.b16 %v884, %v880
        %v973 = vpack.c.b16 %v885, %v881
        %v974 = vpack.c.b16 %v886, %v882
        %v975 = vpack.c.b16 %v891, %v887
        %v976 = vpack.c.b16 %v892, %v888
        %v977 = vpack.c.b16 %v893, %v889
        %v978 = vpack.c.b16 %v894, %v890
        %v979 = vpack.c.b16 %v899, %v895
        %v980 = vpack.c.b16 %v900, %v896
        %v981 = vpack.c.b16 %v901, %v897
        %v982 = vpack.c.b16 %v902, %v898
        %v983 = vpack.c.b16 %v907, %v903
        %v984 = vpack.c.b16 %v908, %v904
        %v985 = vpack.c.b16 %v909, %v905
        %v986 = vpack.c.b16 %v910, %v906
        %v987 = vpack.c.b16 %v915, %v911
        %v988 = vpack.c.b16 %v916, %v912
        %v989 = vpack.c.b16 %v917, %v913
        %v990 = vpack.c.b16 %v918, %v914
        %v991 = vpack.c.b16 %v923, %v919
        %v992 = vpack.c.b16 %v924, %v920
        %v993 = vpack.c.b16 %v925, %v921
        %v994 = vpack.c.b16 %v926, %v922
        %v995 = vpack.c.b16 %v931, %v927
        %v996 = vpack.c.b16 %v932, %v928
        %v997 = vpack.c.b16 %v933, %v929
        %v998 = vpack.c.b16 %v934, %v930
        %v1127 = vunpack.c.l.b16 %v583
        %v1128 = vunpack.c.l.b16 %v584
        %v1129 = vunpack.c.l.b16 %v585
        %v1130 = vunpack.c.l.b16 %v586
        %v1131 = vunpack.c.l.b16 %v587
        %v1132 = vunpack.c.l.b16 %v588
        %v1133 = vunpack.c.l.b16 %v589
        %v1134 = vunpack.c.l.b16 %v590
        %v1135 = vunpack.c.l.b16 %v591
        %v1136 = vunpack.c.l.b16 %v592
        %v1137 = vunpack.c.l.b16 %v593
        %v1138 = vunpack.c.l.b16 %v594
        %v1139 = vunpack.c.l.b16 %v595
        %v1140 = vunpack.c.l.b16 %v596
        %v1141 = vunpack.c.l.b16 %v597
        %v1142 = vunpack.c.l.b16 %v598
        %v1143 = vunpack.c.l.b16 %v599
        %v1144 = vunpack.c.l.b16 %v600
        %v1145 = vunpack.c.l.b16 %v601
        %v1146 = vunpack.c.l.b16 %v602
        %v1147 = vunpack.c.l.b16 %v603
        %v1148 = vunpack.c.l.b16 %v604
        %v1149 = vunpack.c.l.b16 %v605
        %v1150 = vunpack.c.l.b16 %v606
        %v1151 = vunpack.c.l.b16 %v607
        %v1152 = vunpack.c.l.b16 %v608
        %v1153 = vunpack.c.l.b16 %v609
        %v1154 = vunpack.c.l.b16 %v610
        %v1155 = vunpack.c.l.b16 %v611
        %v1156 = vunpack.c.l.b16 %v612
        %v1157 = vunpack.c.l.b16 %v613
        %v1158 = vunpack.c.l.b16 %v614
        %v1159 = vunpack.c.l.b16 %v615
        %v1160 = vunpack.c.l.b16 %v616
        %v1161 = vunpack.c.l.b16 %v617
        %v1162 = vunpack.c.l.b16 %v618
        %v1163 = vunpack.c.l.b16 %v619
        %v1164 = vunpack.c.l.b16 %v620
        %v1165 = vunpack.c.l.b16 %v621
        %v1166 = vunpack.c.l.b16 %v622
        %v1167 = vunpack.c.l.b16 %v623
        %v1168 = vunpack.c.l.b16 %v624
        %v1169 = vunpack.c.l.b16 %v625
        %v1170 = vunpack.c.l.b16 %v626
        %v1171 = vunpack.c.l.b16 %v627
        %v1172 = vunpack.c.l.b16 %v628
        %v1173 = vunpack.c.l.b16 %v629
        %v1174 = vunpack.c.l.b16 %v630
        %v1175 = vunpack.c.l.b16 %v631
        %v1176 = vunpack.c.l.b16 %v632
        %v1177 = vunpack.c.l.b16 %v633
        %v1178 = vunpack.c.l.b16 %v634
        %v1179 = vunpack.c.l.b16 %v635
        %v1180 = vunpack.c.l.b16 %v636
        %v1181 = vunpack.c.l.b16 %v637
        %v1182 = vunpack.c.l.b16 %v638
        %v1183 = vunpack.c.l.b16 %v639
        %v1184 = vunpack.c.l.b16 %v640
        %v1185 = vunpack.c.l.b16 %v641
        %v1186 = vunpack.c.l.b16 %v642
        %v1187 = vunpack.c.l.b16 %v643
        %v1188 = vunpack.c.l.b16 %v644
        %v1189 = vunpack.c.l.b16 %v645
        %v1190 = vunpack.c.l.b16 %v646
        %v1191 = vpack.c.b16 %v1128, %v1127
        %v1192 = vpack.c.b16 %v1130, %v1129
        %v1193 = vpack.c.b16 %v1132, %v1131
        %v1194 = vpack.c.b16 %v1134, %v1133
        %v1195 = vpack.c.b16 %v1136, %v1135
        %v1196 = vpack.c.b16 %v1138, %v1137
        %v1197 = vpack.c.b16 %v1140, %v1139
        %v1198 = vpack.c.b16 %v1142, %v1141
        %v1199 = vpack.c.b16 %v1144, %v1143
        %v1200 = vpack.c.b16 %v1146, %v1145
        %v1201 = vpack.c.b16 %v1148, %v1147
        %v1202 = vpack.c.b16 %v1150, %v1149
        %v1203 = vpack.c.b16 %v1152, %v1151
        %v1204 = vpack.c.b16 %v1154, %v1153
        %v1205 = vpack.c.b16 %v1156, %v1155
        %v1206 = vpack.c.b16 %v1158, %v1157
        %v1207 = vpack.c.b16 %v1160, %v1159
        %v1208 = vpack.c.b16 %v1162, %v1161
        %v1209 = vpack.c.b16 %v1164, %v1163
        %v1210 = vpack.c.b16 %v1166, %v1165
        %v1211 = vpack.c.b16 %v1168, %v1167
        %v1212 = vpack.c.b16 %v1170, %v1169
        %v1213 = vpack.c.b16 %v1172, %v1171
        %v1214 = vpack.c.b16 %v1174, %v1173
        %v1215 = vpack.c.b16 %v1176, %v1175
        %v1216 = vpack.c.b16 %v1178, %v1177
        %v1217 = vpack.c.b16 %v1180, %v1179
        %v1218 = vpack.c.b16 %v1182, %v1181
        %v1219 = vpack.c.b16 %v1184, %v1183
        %v1220 = vpack.c.b16 %v1186, %v1185
        %v1221 = vpack.c.b16 %v1188, %v1187
        %v1222 = vpack.c.b16 %v1190, %v1189
        %1255 = vmatpush.bf16.msra.mxu0 %v1198
        %1256 = vmatpush.bf16.msra.mxu0 %v1197
        %1257 = vmatpush.bf16.msra.mxu0 %v1196
        %1258 = vmatpush.bf16.msra.mxu0 %v1195
        %1259 = vmatpush.bf16.msra.mxu0 %v1194
        %1260 = vmatpush.bf16.msra.mxu0 %v1193
        %1261 = vmatpush.bf16.msra.mxu0 %v1192
        %1262 = vmatpush.bf16.msra.mxu0 %v1191
        %1263 = vmatmul.bf16.gmra.mxu0 %v935
        %v1264 = vpop.f32.mrf.mxu0
        %v1265 = vadd.f32 0.0, %v1264
        %v1266 = vpop.f32.mrf.mxu0
        %v1267 = vadd.f32 0.0, %v1266
        %1268 = vmatmul.bf16.gmra.mxu0 %v939
        %v1269 = vpop.f32.mrf.mxu0
        %v1270 = vadd.f32 0.0, %v1269
        %v1271 = vpop.f32.mrf.mxu0
        %v1272 = vadd.f32 0.0, %v1271
        %1273 = vmatmul.bf16.gmra.mxu0 %v943
        %v1274 = vpop.f32.mrf.mxu0
        %v1275 = vadd.f32 0.0, %v1274
        %v1276 = vpop.f32.mrf.mxu0
        %v1277 = vadd.f32 0.0, %v1276
        %1278 = vmatmul.bf16.gmra.mxu0 %v947
        %v1279 = vpop.f32.mrf.mxu0
        %v1280 = vadd.f32 0.0, %v1279
        %v1281 = vpop.f32.mrf.mxu0
        %v1282 = vadd.f32 0.0, %v1281
        %1283 = vmatmul.bf16.gmra.mxu0 %v951
        %v1284 = vpop.f32.mrf.mxu0
        %v1285 = vadd.f32 0.0, %v1284
        %v1286 = vpop.f32.mrf.mxu0
        %v1287 = vadd.f32 0.0, %v1286
        %1288 = vmatmul.bf16.gmra.mxu0 %v955
        %v1289 = vpop.f32.mrf.mxu0
        %v1290 = vadd.f32 0.0, %v1289
        %v1291 = vpop.f32.mrf.mxu0
        %v1292 = vadd.f32 0.0, %v1291
        %1293 = vmatmul.bf16.gmra.mxu0 %v959
        %v1294 = vpop.f32.mrf.mxu0
        %v1295 = vadd.f32 0.0, %v1294
        %v1296 = vpop.f32.mrf.mxu0
        %v1297 = vadd.f32 0.0, %v1296
        %1298 = vmatmul.bf16.gmra.mxu0 %v963
        %v1299 = vpop.f32.mrf.mxu0
        %v1300 = vadd.f32 0.0, %v1299
        %v1301 = vpop.f32.mrf.mxu0
        %v1302 = vadd.f32 0.0, %v1301
        %1303 = vmatmul.bf16.gmra.mxu0 %v967
        %v1304 = vpop.f32.mrf.mxu0
        %v1305 = vadd.f32 0.0, %v1304
        %v1306 = vpop.f32.mrf.mxu0
        %v1307 = vadd.f32 0.0, %v1306
        %1308 = vmatmul.bf16.gmra.mxu0 %v971
        %v1309 = vpop.f32.mrf.mxu0
        %v1310 = vadd.f32 0.0, %v1309
        %v1311 = vpop.f32.mrf.mxu0
        %v1312 = vadd.f32 0.0, %v1311
        %1313 = vmatmul.bf16.gmra.mxu0 %v975
        %v1314 = vpop.f32.mrf.mxu0
        %v1315 = vadd.f32 0.0, %v1314
        %v1316 = vpop.f32.mrf.mxu0
        %v1317 = vadd.f32 0.0, %v1316
        %1318 = vmatmul.bf16.gmra.mxu0 %v979
        %v1319 = vpop.f32.mrf.mxu0
        %v1320 = vadd.f32 0.0, %v1319
        %v1321 = vpop.f32.mrf.mxu0
        %v1322 = vadd.f32 0.0, %v1321
        %1323 = vmatmul.bf16.gmra.mxu0 %v983
        %v1324 = vpop.f32.mrf.mxu0
        %v1325 = vadd.f32 0.0, %v1324
        %v1326 = vpop.f32.mrf.mxu0
        %v1327 = vadd.f32 0.0, %v1326
        %1328 = vmatmul.bf16.gmra.mxu0 %v987
        %v1329 = vpop.f32.mrf.mxu0
        %v1330 = vadd.f32 0.0, %v1329
        %v1331 = vpop.f32.mrf.mxu0
        %v1332 = vadd.f32 0.0, %v1331
        %1333 = vmatmul.bf16.gmra.mxu0 %v991
        %v1334 = vpop.f32.mrf.mxu0
        %v1335 = vadd.f32 0.0, %v1334
        %v1336 = vpop.f32.mrf.mxu0
        %v1337 = vadd.f32 0.0, %v1336
        %1338 = vmatmul.bf16.gmra.mxu0 %v995
        %v1339 = vpop.f32.mrf.mxu0
        %v1340 = vadd.f32 0.0, %v1339
        %v1341 = vpop.f32.mrf.mxu0
        %v1342 = vadd.f32 0.0, %v1341
        %1343 = vdwg.mxu0
        %1344 = vmatpush.bf16.msra.mxu0 %v1206
        %1345 = vmatpush.bf16.msra.mxu0 %v1205
        %1346 = vmatpush.bf16.msra.mxu0 %v1204
        %1347 = vmatpush.bf16.msra.mxu0 %v1203
        %1348 = vmatpush.bf16.msra.mxu0 %v1202
        %1349 = vmatpush.bf16.msra.mxu0 %v1201
        %1350 = vmatpush.bf16.msra.mxu0 %v1200
        %1351 = vmatpush.bf16.msra.mxu0 %v1199
        %1352 = vmatmul.bf16.gmra.mxu0 %v936
        %v1353 = vpop.f32.mrf.mxu0
        %v1354 = vadd.f32 %v1265, %v1353
        %v1355 = vpop.f32.mrf.mxu0
        %v1356 = vadd.f32 %v1267, %v1355
        %1357 = vmatmul.bf16.gmra.mxu0 %v940
        %v1358 = vpop.f32.mrf.mxu0
        %v1359 = vadd.f32 %v1270, %v1358
        %v1360 = vpop.f32.mrf.mxu0
        %v1361 = vadd.f32 %v1272, %v1360
        %1362 = vmatmul.bf16.gmra.mxu0 %v944
        %v1363 = vpop.f32.mrf.mxu0
        %v1364 = vadd.f32 %v1275, %v1363
        %v1365 = vpop.f32.mrf.mxu0
        %v1366 = vadd.f32 %v1277, %v1365
        %1367 = vmatmul.bf16.gmra.mxu0 %v948
        %v1368 = vpop.f32.mrf.mxu0
        %v1369 = vadd.f32 %v1280, %v1368
        %v1370 = vpop.f32.mrf.mxu0
        %v1371 = vadd.f32 %v1282, %v1370
        %1372 = vmatmul.bf16.gmra.mxu0 %v952
        %v1373 = vpop.f32.mrf.mxu0
        %v1374 = vadd.f32 %v1285, %v1373
        %v1375 = vpop.f32.mrf.mxu0
        %v1376 = vadd.f32 %v1287, %v1375
        %1377 = vmatmul.bf16.gmra.mxu0 %v956
        %v1378 = vpop.f32.mrf.mxu0
        %v1379 = vadd.f32 %v1290, %v1378
        %v1380 = vpop.f32.mrf.mxu0
        %v1381 = vadd.f32 %v1292, %v1380
        %1382 = vmatmul.bf16.gmra.mxu0 %v960
        %v1383 = vpop.f32.mrf.mxu0
        %v1384 = vadd.f32 %v1295, %v1383
        %v1385 = vpop.f32.mrf.mxu0
        %v1386 = vadd.f32 %v1297, %v1385
        %1387 = vmatmul.bf16.gmra.mxu0 %v964
        %v1388 = vpop.f32.mrf.mxu0
        %v1389 = vadd.f32 %v1300, %v1388
        %v1390 = vpop.f32.mrf.mxu0
        %v1391 = vadd.f32 %v1302, %v1390
        %1392 = vmatmul.bf16.gmra.mxu0 %v968
        %v1393 = vpop.f32.mrf.mxu0
        %v1394 = vadd.f32 %v1305, %v1393
        %v1395 = vpop.f32.mrf.mxu0
        %v1396 = vadd.f32 %v1307, %v1395
        %1397 = vmatmul.bf16.gmra.mxu0 %v972
        %v1398 = vpop.f32.mrf.mxu0
        %v1399 = vadd.f32 %v1310, %v1398
        %v1400 = vpop.f32.mrf.mxu0
        %v1401 = vadd.f32 %v1312, %v1400
        %1402 = vmatmul.bf16.gmra.mxu0 %v976
        %v1403 = vpop.f32.mrf.mxu0
        %v1404 = vadd.f32 %v1315, %v1403
        %v1405 = vpop.f32.mrf.mxu0
        %v1406 = vadd.f32 %v1317, %v1405
        %1407 = vmatmul.bf16.gmra.mxu0 %v980
        %v1408 = vpop.f32.mrf.mxu0
        %v1409 = vadd.f32 %v1320, %v1408
        %v1410 = vpop.f32.mrf.mxu0
        %v1411 = vadd.f32 %v1322, %v1410
        %1412 = vmatmul.bf16.gmra.mxu0 %v984
        %v1413 = vpop.f32.mrf.mxu0
        %v1414 = vadd.f32 %v1325, %v1413
        %v1415 = vpop.f32.mrf.mxu0
        %v1416 = vadd.f32 %v1327, %v1415
        %1417 = vmatmul.bf16.gmra.mxu0 %v988
        %v1418 = vpop.f32.mrf.mxu0
        %v1419 = vadd.f32 %v1330, %v1418
        %v1420 = vpop.f32.mrf.mxu0
        %v1421 = vadd.f32 %v1332, %v1420
        %1422 = vmatmul.bf16.gmra.mxu0 %v992
        %v1423 = vpop.f32.mrf.mxu0
        %v1424 = vadd.f32 %v1335, %v1423
        %v1425 = vpop.f32.mrf.mxu0
        %v1426 = vadd.f32 %v1337, %v1425
        %1427 = vmatmul.bf16.gmra.mxu0 %v996
        %v1428 = vpop.f32.mrf.mxu0
        %v1429 = vadd.f32 %v1340, %v1428
        %v1430 = vpop.f32.mrf.mxu0
        %v1431 = vadd.f32 %v1342, %v1430
        %1432 = vdwg.mxu0
        %1433 = vmatpush.bf16.msra.mxu0 %v1214
        %1434 = vmatpush.bf16.msra.mxu0 %v1213
        %1435 = vmatpush.bf16.msra.mxu0 %v1212
        %1436 = vmatpush.bf16.msra.mxu0 %v1211
        %1437 = vmatpush.bf16.msra.mxu0 %v1210
        %1438 = vmatpush.bf16.msra.mxu0 %v1209
        %1439 = vmatpush.bf16.msra.mxu0 %v1208
        %1440 = vmatpush.bf16.msra.mxu0 %v1207
        %1441 = vmatmul.bf16.gmra.mxu0 %v937
        %v1442 = vpop.f32.mrf.mxu0
        %v1443 = vadd.f32 %v1354, %v1442
        %v1444 = vpop.f32.mrf.mxu0
        %v1445 = vadd.f32 %v1356, %v1444
        %1446 = vmatmul.bf16.gmra.mxu0 %v941
        %v1447 = vpop.f32.mrf.mxu0
        %v1448 = vadd.f32 %v1359, %v1447
        %v1449 = vpop.f32.mrf.mxu0
        %v1450 = vadd.f32 %v1361, %v1449
        %1451 = vmatmul.bf16.gmra.mxu0 %v945
        %v1452 = vpop.f32.mrf.mxu0
        %v1453 = vadd.f32 %v1364, %v1452
        %v1454 = vpop.f32.mrf.mxu0
        %v1455 = vadd.f32 %v1366, %v1454
        %1456 = vmatmul.bf16.gmra.mxu0 %v949
        %v1457 = vpop.f32.mrf.mxu0
        %v1458 = vadd.f32 %v1369, %v1457
        %v1459 = vpop.f32.mrf.mxu0
        %v1460 = vadd.f32 %v1371, %v1459
        %1461 = vmatmul.bf16.gmra.mxu0 %v953
        %v1462 = vpop.f32.mrf.mxu0
        %v1463 = vadd.f32 %v1374, %v1462
        %v1464 = vpop.f32.mrf.mxu0
        %v1465 = vadd.f32 %v1376, %v1464
        %1466 = vmatmul.bf16.gmra.mxu0 %v957
        %v1467 = vpop.f32.mrf.mxu0
        %v1468 = vadd.f32 %v1379, %v1467
        %v1469 = vpop.f32.mrf.mxu0
        %v1470 = vadd.f32 %v1381, %v1469
        %1471 = vmatmul.bf16.gmra.mxu0 %v961
        %v1472 = vpop.f32.mrf.mxu0
        %v1473 = vadd.f32 %v1384, %v1472
        %v1474 = vpop.f32.mrf.mxu0
        %v1475 = vadd.f32 %v1386, %v1474
        %1476 = vmatmul.bf16.gmra.mxu0 %v965
        %v1477 = vpop.f32.mrf.mxu0
        %v1478 = vadd.f32 %v1389, %v1477
        %v1479 = vpop.f32.mrf.mxu0
        %v1480 = vadd.f32 %v1391, %v1479
        %1481 = vmatmul.bf16.gmra.mxu0 %v969
        %v1482 = vpop.f32.mrf.mxu0
        %v1483 = vadd.f32 %v1394, %v1482
        %v1484 = vpop.f32.mrf.mxu0
        %v1485 = vadd.f32 %v1396, %v1484
        %1486 = vmatmul.bf16.gmra.mxu0 %v973
        %v1487 = vpop.f32.mrf.mxu0
        %v1488 = vadd.f32 %v1399, %v1487
        %v1489 = vpop.f32.mrf.mxu0
        %v1490 = vadd.f32 %v1401, %v1489
        %1491 = vmatmul.bf16.gmra.mxu0 %v977
        %v1492 = vpop.f32.mrf.mxu0
        %v1493 = vadd.f32 %v1404, %v1492
        %v1494 = vpop.f32.mrf.mxu0
        %v1495 = vadd.f32 %v1406, %v1494
        %1496 = vmatmul.bf16.gmra.mxu0 %v981
        %v1497 = vpop.f32.mrf.mxu0
        %v1498 = vadd.f32 %v1409, %v1497
        %v1499 = vpop.f32.mrf.mxu0
        %v1500 = vadd.f32 %v1411, %v1499
        %1501 = vmatmul.bf16.gmra.mxu0 %v985
        %v1502 = vpop.f32.mrf.mxu0
        %v1503 = vadd.f32 %v1414, %v1502
        %v1504 = vpop.f32.mrf.mxu0
        %v1505 = vadd.f32 %v1416, %v1504
        %1506 = vmatmul.bf16.gmra.mxu0 %v989
        %v1507 = vpop.f32.mrf.mxu0
        %v1508 = vadd.f32 %v1419, %v1507
        %v1509 = vpop.f32.mrf.mxu0
        %v1510 = vadd.f32 %v1421, %v1509
        %1511 = vmatmul.bf16.gmra.mxu0 %v993
        %v1512 = vpop.f32.mrf.mxu0
        %v1513 = vadd.f32 %v1424, %v1512
        %v1514 = vpop.f32.mrf.mxu0
        %v1515 = vadd.f32 %v1426, %v1514
        %1516 = vmatmul.bf16.gmra.mxu0 %v997
        %v1517 = vpop.f32.mrf.mxu0
        %v1518 = vadd.f32 %v1429, %v1517
        %v1519 = vpop.f32.mrf.mxu0
        %v1520 = vadd.f32 %v1431, %v1519
        %1521 = vdwg.mxu0
        %1522 = vmatpush.bf16.msra.mxu0 %v1222
        %1523 = vmatpush.bf16.msra.mxu0 %v1221
        %1524 = vmatpush.bf16.msra.mxu0 %v1220
        %1525 = vmatpush.bf16.msra.mxu0 %v1219
        %1526 = vmatpush.bf16.msra.mxu0 %v1218
        %1527 = vmatpush.bf16.msra.mxu0 %v1217
        %1528 = vmatpush.bf16.msra.mxu0 %v1216
        %1529 = vmatpush.bf16.msra.mxu0 %v1215
        %1530 = vmatmul.bf16.gmra.mxu0 %v938
        %v1531 = vpop.f32.mrf.mxu0
        %v1532 = vadd.f32 %v1443, %v1531
        %v1533 = vpop.f32.mrf.mxu0
        %v1534 = vadd.f32 %v1445, %v1533
        %1535 = vmatmul.bf16.gmra.mxu0 %v942
        %v1536 = vpop.f32.mrf.mxu0
        %v1537 = vadd.f32 %v1448, %v1536
        %v1538 = vpop.f32.mrf.mxu0
        %v1539 = vadd.f32 %v1450, %v1538
        %1540 = vmatmul.bf16.gmra.mxu0 %v946
        %v1541 = vpop.f32.mrf.mxu0
        %v1542 = vadd.f32 %v1453, %v1541
        %v1543 = vpop.f32.mrf.mxu0
        %v1544 = vadd.f32 %v1455, %v1543
        %1545 = vmatmul.bf16.gmra.mxu0 %v950
        %v1546 = vpop.f32.mrf.mxu0
        %v1547 = vadd.f32 %v1458, %v1546
        %v1548 = vpop.f32.mrf.mxu0
        %v1549 = vadd.f32 %v1460, %v1548
        %1550 = vmatmul.bf16.gmra.mxu0 %v954
        %v1551 = vpop.f32.mrf.mxu0
        %v1552 = vadd.f32 %v1463, %v1551
        %v1553 = vpop.f32.mrf.mxu0
        %v1554 = vadd.f32 %v1465, %v1553
        %1555 = vmatmul.bf16.gmra.mxu0 %v958
        %v1556 = vpop.f32.mrf.mxu0
        %v1557 = vadd.f32 %v1468, %v1556
        %v1558 = vpop.f32.mrf.mxu0
        %v1559 = vadd.f32 %v1470, %v1558
        %1560 = vmatmul.bf16.gmra.mxu0 %v962
        %v1561 = vpop.f32.mrf.mxu0
        %v1562 = vadd.f32 %v1473, %v1561
        %v1563 = vpop.f32.mrf.mxu0
        %v1564 = vadd.f32 %v1475, %v1563
        %1565 = vmatmul.bf16.gmra.mxu0 %v966
        %v1566 = vpop.f32.mrf.mxu0
        %v1567 = vadd.f32 %v1478, %v1566
        %v1568 = vpop.f32.mrf.mxu0
        %v1569 = vadd.f32 %v1480, %v1568
        %1570 = vmatmul.bf16.gmra.mxu0 %v970
        %v1571 = vpop.f32.mrf.mxu0
        %v1572 = vadd.f32 %v1483, %v1571
        %v1573 = vpop.f32.mrf.mxu0
        %v1574 = vadd.f32 %v1485, %v1573
        %1575 = vmatmul.bf16.gmra.mxu0 %v974
        %v1576 = vpop.f32.mrf.mxu0
        %v1577 = vadd.f32 %v1488, %v1576
        %v1578 = vpop.f32.mrf.mxu0
        %v1579 = vadd.f32 %v1490, %v1578
        %1580 = vmatmul.bf16.gmra.mxu0 %v978
        %v1581 = vpop.f32.mrf.mxu0
        %v1582 = vadd.f32 %v1493, %v1581
        %v1583 = vpop.f32.mrf.mxu0
        %v1584 = vadd.f32 %v1495, %v1583
        %1585 = vmatmul.bf16.gmra.mxu0 %v982
        %v1586 = vpop.f32.mrf.mxu0
        %v1587 = vadd.f32 %v1498, %v1586
        %v1588 = vpop.f32.mrf.mxu0
        %v1589 = vadd.f32 %v1500, %v1588
        %1590 = vmatmul.bf16.gmra.mxu0 %v986
        %v1591 = vpop.f32.mrf.mxu0
        %v1592 = vadd.f32 %v1503, %v1591
        %v1593 = vpop.f32.mrf.mxu0
        %v1594 = vadd.f32 %v1505, %v1593
        %1595 = vmatmul.bf16.gmra.mxu0 %v990
        %v1596 = vpop.f32.mrf.mxu0
        %v1597 = vadd.f32 %v1508, %v1596
        %v1598 = vpop.f32.mrf.mxu0
        %v1599 = vadd.f32 %v1510, %v1598
        %1600 = vmatmul.bf16.gmra.mxu0 %v994
        %v1601 = vpop.f32.mrf.mxu0
        %v1602 = vadd.f32 %v1513, %v1601
        %v1603 = vpop.f32.mrf.mxu0
        %v1604 = vadd.f32 %v1515, %v1603
        %1605 = vmatmul.bf16.gmra.mxu0 %v998
        %v1606 = vpop.f32.mrf.mxu0
        %v1607 = vadd.f32 %v1518, %v1606
        %v1608 = vpop.f32.mrf.mxu0
        %v1609 = vadd.f32 %v1520, %v1608
        %1610 = vdwg.mxu0
        %v1611 = vadd.f32 %v647, %v1532
        %v1612 = vadd.f32 %v648, %v1534
        %v1613 = vadd.f32 %v649, %v1537
        %v1614 = vadd.f32 %v650, %v1539
        %v1615 = vadd.f32 %v651, %v1542
        %v1616 = vadd.f32 %v652, %v1544
        %v1617 = vadd.f32 %v653, %v1547
        %v1618 = vadd.f32 %v654, %v1549
        %v1619 = vadd.f32 %v655, %v1552
        %v1620 = vadd.f32 %v656, %v1554
        %v1621 = vadd.f32 %v657, %v1557
        %v1622 = vadd.f32 %v658, %v1559
        %v1623 = vadd.f32 %v659, %v1562
        %v1624 = vadd.f32 %v660, %v1564
        %v1625 = vadd.f32 %v661, %v1567
        %v1626 = vadd.f32 %v662, %v1569
        %v1627 = vadd.f32 %v663, %v1572
        %v1628 = vadd.f32 %v664, %v1574
        %v1629 = vadd.f32 %v665, %v1577
        %v1630 = vadd.f32 %v666, %v1579
        %v1631 = vadd.f32 %v667, %v1582
        %v1632 = vadd.f32 %v668, %v1584
        %v1633 = vadd.f32 %v669, %v1587
        %v1634 = vadd.f32 %v670, %v1589
        %v1635 = vadd.f32 %v671, %v1592
        %v1636 = vadd.f32 %v672, %v1594
        %v1637 = vadd.f32 %v673, %v1597
        %v1638 = vadd.f32 %v674, %v1599
        %v1639 = vadd.f32 %v675, %v1602
        %v1640 = vadd.f32 %v676, %v1604
        %v1641 = vadd.f32 %v677, %v1607
        %v1642 = vadd.f32 %v678, %v1609
        %1643 = vst [vmem:[#allocation2] sm:$0xff] %v1611
        %1644 = vst [vmem:[#allocation2 + $0x8] sm:$0xff] %v1612
        %1645 = vst [vmem:[#allocation2 + $0x10] sm:$0xff] %v1613
        %1646 = vst [vmem:[#allocation2 + $0x18] sm:$0xff] %v1614
        %1647 = vst [vmem:[#allocation2 + $0x20] sm:$0xff] %v1615
        %1648 = vst [vmem:[#allocation2 + $0x28] sm:$0xff] %v1616
        %1649 = vst [vmem:[#allocation2 + $0x30] sm:$0xff] %v1617
        %1650 = vst [vmem:[#allocation2 + $0x38] sm:$0xff] %v1618
        %1651 = vst [vmem:[#allocation2 + $0x40] sm:$0xff] %v1619
        %1652 = vst [vmem:[#allocation2 + $0x48] sm:$0xff] %v1620
        %1653 = vst [vmem:[#allocation2 + $0x50] sm:$0xff] %v1621
        %1654 = vst [vmem:[#allocation2 + $0x58] sm:$0xff] %v1622
        %1655 = vst [vmem:[#allocation2 + $0x60] sm:$0xff] %v1623
        %1656 = vst [vmem:[#allocation2 + $0x68] sm:$0xff] %v1624
        %1657 = vst [vmem:[#allocation2 + $0x70] sm:$0xff] %v1625
        %1658 = vst [vmem:[#allocation2 + $0x78] sm:$0xff] %v1626
        %1659 = vst [vmem:[#allocation2 + $0x80] sm:$0xff] %v1627
        %1660 = vst [vmem:[#allocation2 + $0x88] sm:$0xff] %v1628
        %1661 = vst [vmem:[#allocation2 + $0x90] sm:$0xff] %v1629
        %1662 = vst [vmem:[#allocation2 + $0x98] sm:$0xff] %v1630
        %1663 = vst [vmem:[#allocation2 + $0xa0] sm:$0xff] %v1631
        %1664 = vst [vmem:[#allocation2 + $0xa8] sm:$0xff] %v1632
        %1665 = vst [vmem:[#allocation2 + $0xb0] sm:$0xff] %v1633
        %1666 = vst [vmem:[#allocation2 + $0xb8] sm:$0xff] %v1634
        %1667 = vst [vmem:[#allocation2 + $0xc0] sm:$0xff] %v1635
        %1668 = vst [vmem:[#allocation2 + $0xc8] sm:$0xff] %v1636
        %1669 = vst [vmem:[#allocation2 + $0xd0] sm:$0xff] %v1637
        %1670 = vst [vmem:[#allocation2 + $0xd8] sm:$0xff] %v1638
        %1671 = vst [vmem:[#allocation2 + $0xe0] sm:$0xff] %v1639
        %1672 = vst [vmem:[#allocation2 + $0xe8] sm:$0xff] %v1640
        %1673 = vst [vmem:[#allocation2 + $0xf0] sm:$0xff] %v1641
        %1674 = vst [vmem:[#allocation2 + $0xf8] sm:$0xff] %v1642
        %s1675 = smul.u32 %s25, 256
        %v1676 = vlaneseq
        %v1677 = vshrl.u32 %v1676, 7
        %v1678 = vadd.s32 %v1677, 8
        %v1679 = vadd.s32 %v1677, 16
        %v1680 = vadd.s32 %v1677, 24
        %v1681 = vadd.s32 %v1677, 32
        %v1682 = vadd.s32 %v1677, 40
        %v1683 = vadd.s32 %v1677, 48
        %v1684 = vadd.s32 %v1677, 56
        %v1685 = vadd.s32 %v1677, 64
        %v1686 = vadd.s32 %v1677, 72
        %v1687 = vadd.s32 %v1677, 80
        %v1688 = vadd.s32 %v1677, 88
        %v1689 = vadd.s32 %v1677, 96
        %v1690 = vadd.s32 %v1677, 104
        %v1691 = vadd.s32 %v1677, 112
        %v1692 = vadd.s32 %v1677, 120
        %v1693 = vadd.s32 %v1677, 128
        %v1694 = vadd.s32 %v1677, 136
        %v1695 = vadd.s32 %v1677, 144
        %v1696 = vadd.s32 %v1677, 152
        %v1697 = vadd.s32 %v1677, 160
        %v1698 = vadd.s32 %v1677, 168
        %v1699 = vadd.s32 %v1677, 176
        %v1700 = vadd.s32 %v1677, 184
        %v1701 = vadd.s32 %v1677, 192
        %v1702 = vadd.s32 %v1677, 200
        %v1703 = vadd.s32 %v1677, 208
        %v1704 = vadd.s32 %v1677, 216
        %v1705 = vadd.s32 %v1677, 224
        %v1706 = vadd.s32 %v1677, 232
        %v1707 = vadd.s32 %v1677, 240
        %v1708 = vadd.s32 %v1677, 248
        %v1709 = vstv %s1675
        %v1710 = vadd.s32 %v1709, %v1677
        %v1711 = vadd.s32 %v1709, %v1678
        %v1712 = vadd.s32 %v1709, %v1679
        %v1713 = vadd.s32 %v1709, %v1680
        %v1714 = vadd.s32 %v1709, %v1681
        %v1715 = vadd.s32 %v1709, %v1682
        %v1716 = vadd.s32 %v1709, %v1683
        %v1717 = vadd.s32 %v1709, %v1684
        %v1718 = vadd.s32 %v1709, %v1685
        %v1719 = vadd.s32 %v1709, %v1686
        %v1720 = vadd.s32 %v1709, %v1687
        %v1721 = vadd.s32 %v1709, %v1688
        %v1722 = vadd.s32 %v1709, %v1689
        %v1723 = vadd.s32 %v1709, %v1690
        %v1724 = vadd.s32 %v1709, %v1691
        %v1725 = vadd.s32 %v1709, %v1692
        %v1726 = vadd.s32 %v1709, %v1693
        %v1727 = vadd.s32 %v1709, %v1694
        %v1728 = vadd.s32 %v1709, %v1695
        %v1729 = vadd.s32 %v1709, %v1696
        %v1730 = vadd.s32 %v1709, %v1697
        %v1731 = vadd.s32 %v1709, %v1698
        %v1732 = vadd.s32 %v1709, %v1699
        %v1733 = vadd.s32 %v1709, %v1700
        %v1734 = vadd.s32 %v1709, %v1701
        %v1735 = vadd.s32 %v1709, %v1702
        %v1736 = vadd.s32 %v1709, %v1703
        %v1737 = vadd.s32 %v1709, %v1704
        %v1738 = vadd.s32 %v1709, %v1705
        %v1739 = vadd.s32 %v1709, %v1706
        %v1740 = vadd.s32 %v1709, %v1707
        %v1741 = vadd.s32 %v1709, %v1708
        %vm1742 = vcmp.lt.s32.totalorder %v1710, 600
        %vm1743 = vcmp.lt.s32.totalorder %v1711, 600
        %vm1744 = vcmp.lt.s32.totalorder %v1712, 600
        %vm1745 = vcmp.lt.s32.totalorder %v1713, 600
        %vm1746 = vcmp.lt.s32.totalorder %v1714, 600
        %vm1747 = vcmp.lt.s32.totalorder %v1715, 600
        %vm1748 = vcmp.lt.s32.totalorder %v1716, 600
        %vm1749 = vcmp.lt.s32.totalorder %v1717, 600
        %vm1750 = vcmp.lt.s32.totalorder %v1718, 600
        %vm1751 = vcmp.lt.s32.totalorder %v1719, 600
        %vm1752 = vcmp.lt.s32.totalorder %v1720, 600
        %vm1753 = vcmp.lt.s32.totalorder %v1721, 600
        %vm1754 = vcmp.lt.s32.totalorder %v1722, 600
        %vm1755 = vcmp.lt.s32.totalorder %v1723, 600
        %vm1756 = vcmp.lt.s32.totalorder %v1724, 600
        %vm1757 = vcmp.lt.s32.totalorder %v1725, 600
        %vm1758 = vcmp.lt.s32.totalorder %v1726, 600
        %vm1759 = vcmp.lt.s32.totalorder %v1727, 600
        %vm1760 = vcmp.lt.s32.totalorder %v1728, 600
        %vm1761 = vcmp.lt.s32.totalorder %v1729, 600
        %vm1762 = vcmp.lt.s32.totalorder %v1730, 600
        %vm1763 = vcmp.lt.s32.totalorder %v1731, 600
        %vm1764 = vcmp.lt.s32.totalorder %v1732, 600
        %vm1765 = vcmp.lt.s32.totalorder %v1733, 600
        %vm1766 = vcmp.lt.s32.totalorder %v1734, 600
        %vm1767 = vcmp.lt.s32.totalorder %v1735, 600
        %vm1768 = vcmp.lt.s32.totalorder %v1736, 600
        %vm1769 = vcmp.lt.s32.totalorder %v1737, 600
        %vm1770 = vcmp.lt.s32.totalorder %v1738, 600
        %vm1771 = vcmp.lt.s32.totalorder %v1739, 600
        %vm1772 = vcmp.lt.s32.totalorder %v1740, 600
        %vm1773 = vcmp.lt.s32.totalorder %v1741, 600
        %v1774 = vsel %vm1742, 1, 0
        %v1775 = vsel %vm1743, 1, 0
        %v1776 = vsel %vm1744, 1, 0
        %v1777 = vsel %vm1745, 1, 0
        %v1778 = vsel %vm1746, 1, 0
        %v1779 = vsel %vm1747, 1, 0
        %v1780 = vsel %vm1748, 1, 0
        %v1781 = vsel %vm1749, 1, 0
        %v1782 = vsel %vm1750, 1, 0
        %v1783 = vsel %vm1751, 1, 0
        %v1784 = vsel %vm1752, 1, 0
        %v1785 = vsel %vm1753, 1, 0
        %v1786 = vsel %vm1754, 1, 0
        %v1787 = vsel %vm1755, 1, 0
        %v1788 = vsel %vm1756, 1, 0
        %v1789 = vsel %vm1757, 1, 0
        %v1790 = vsel %vm1758, 1, 0
        %v1791 = vsel %vm1759, 1, 0
        %v1792 = vsel %vm1760, 1, 0
        %v1793 = vsel %vm1761, 1, 0
        %v1794 = vsel %vm1762, 1, 0
        %v1795 = vsel %vm1763, 1, 0
        %v1796 = vsel %vm1764, 1, 0
        %v1797 = vsel %vm1765, 1, 0
        %v1798 = vsel %vm1766, 1, 0
        %v1799 = vsel %vm1767, 1, 0
        %v1800 = vsel %vm1768, 1, 0
        %v1801 = vsel %vm1769, 1, 0
        %v1802 = vsel %vm1770, 1, 0
        %v1803 = vsel %vm1771, 1, 0
        %v1804 = vsel %vm1772, 1, 0
        %v1805 = vsel %vm1773, 1, 0
        %v1806 = vcvt.s32.f32 %v1774
        %v1807 = vcvt.s32.f32 %v1775
        %v1808 = vcvt.s32.f32 %v1776
        %v1809 = vcvt.s32.f32 %v1777
        %v1810 = vcvt.s32.f32 %v1778
        %v1811 = vcvt.s32.f32 %v1779
        %v1812 = vcvt.s32.f32 %v1780
        %v1813 = vcvt.s32.f32 %v1781
        %v1814 = vcvt.s32.f32 %v1782
        %v1815 = vcvt.s32.f32 %v1783
        %v1816 = vcvt.s32.f32 %v1784
        %v1817 = vcvt.s32.f32 %v1785
        %v1818 = vcvt.s32.f32 %v1786
        %v1819 = vcvt.s32.f32 %v1787
        %v1820 = vcvt.s32.f32 %v1788
        %v1821 = vcvt.s32.f32 %v1789
        %v1822 = vcvt.s32.f32 %v1790
        %v1823 = vcvt.s32.f32 %v1791
        %v1824 = vcvt.s32.f32 %v1792
        %v1825 = vcvt.s32.f32 %v1793
        %v1826 = vcvt.s32.f32 %v1794
        %v1827 = vcvt.s32.f32 %v1795
        %v1828 = vcvt.s32.f32 %v1796
        %v1829 = vcvt.s32.f32 %v1797
        %v1830 = vcvt.s32.f32 %v1798
        %v1831 = vcvt.s32.f32 %v1799
        %v1832 = vcvt.s32.f32 %v1800
        %v1833 = vcvt.s32.f32 %v1801
        %v1834 = vcvt.s32.f32 %v1802
        %v1835 = vcvt.s32.f32 %v1803
        %v1836 = vcvt.s32.f32 %v1804
        %v1837 = vcvt.s32.f32 %v1805
        %p1838 = scmp.eq.s32.totalorder %s26, 1
        // Predicated region
        $region76: #{simclr_forward.3} parent=66 // pred_check
          %p1839 = pneg %p1838
        $region77: #{simclr_forward.3} parent=66 // pred_check_branch
          %1841 = sbr.rel (%p1839) target = $region79
        $region78: #{simclr_forward.3} parent=66 // pred_region
          %v1842 = vld [vmem:[#allocation2] sm:$0xff]
          %v1843 = vld [vmem:[#allocation2 + $0x8] sm:$0xff]
          %v1844 = vld [vmem:[#allocation2 + $0x10] sm:$0xff]
          %v1845 = vld [vmem:[#allocation2 + $0x18] sm:$0xff]
          %v1846 = vld [vmem:[#allocation2 + $0x20] sm:$0xff]
          %v1847 = vld [vmem:[#allocation2 + $0x28] sm:$0xff]
          %v1848 = vld [vmem:[#allocation2 + $0x30] sm:$0xff]
          %v1849 = vld [vmem:[#allocation2 + $0x38] sm:$0xff]
          %v1850 = vld [vmem:[#allocation2 + $0x40] sm:$0xff]
          %v1851 = vld [vmem:[#allocation2 + $0x48] sm:$0xff]
          %v1852 = vld [vmem:[#allocation2 + $0x50] sm:$0xff]
          %v1853 = vld [vmem:[#allocation2 + $0x58] sm:$0xff]
          %v1854 = vld [vmem:[#allocation2 + $0x60] sm:$0xff]
          %v1855 = vld [vmem:[#allocation2 + $0x68] sm:$0xff]
          %v1856 = vld [vmem:[#allocation2 + $0x70] sm:$0xff]
          %v1857 = vld [vmem:[#allocation2 + $0x78] sm:$0xff]
          %v1858 = vld [vmem:[#allocation2 + $0x80] sm:$0xff]
          %v1859 = vld [vmem:[#allocation2 + $0x88] sm:$0xff]
          %v1860 = vld [vmem:[#allocation2 + $0x90] sm:$0xff]
          %v1861 = vld [vmem:[#allocation2 + $0x98] sm:$0xff]
          %v1862 = vld [vmem:[#allocation2 + $0xa0] sm:$0xff]
          %v1863 = vld [vmem:[#allocation2 + $0xa8] sm:$0xff]
          %v1864 = vld [vmem:[#allocation2 + $0xb0] sm:$0xff]
          %v1865 = vld [vmem:[#allocation2 + $0xb8] sm:$0xff]
          %v1866 = vld [vmem:[#allocation2 + $0xc0] sm:$0xff]
          %v1867 = vld [vmem:[#allocation2 + $0xc8] sm:$0xff]
          %v1868 = vld [vmem:[#allocation2 + $0xd0] sm:$0xff]
          %v1869 = vld [vmem:[#allocation2 + $0xd8] sm:$0xff]
          %v1870 = vld [vmem:[#allocation2 + $0xe0] sm:$0xff]
          %v1871 = vld [vmem:[#allocation2 + $0xe8] sm:$0xff]
          %v1872 = vld [vmem:[#allocation2 + $0xf0] sm:$0xff]
          %v1873 = vld [vmem:[#allocation2 + $0xf8] sm:$0xff]
          %v1874 = vpack.c.bf16 %v1843, %v1842
          %v1875 = vpack.c.bf16 %v1845, %v1844
          %v1876 = vpack.c.bf16 %v1847, %v1846
          %v1877 = vpack.c.bf16 %v1849, %v1848
          %v1878 = vpack.c.bf16 %v1851, %v1850
          %v1879 = vpack.c.bf16 %v1853, %v1852
          %v1880 = vpack.c.bf16 %v1855, %v1854
          %v1881 = vpack.c.bf16 %v1857, %v1856
          %v1882 = vpack.c.bf16 %v1859, %v1858
          %v1883 = vpack.c.bf16 %v1861, %v1860
          %v1884 = vpack.c.bf16 %v1863, %v1862
          %v1885 = vpack.c.bf16 %v1865, %v1864
          %v1886 = vpack.c.bf16 %v1867, %v1866
          %v1887 = vpack.c.bf16 %v1869, %v1868
          %v1888 = vpack.c.bf16 %v1871, %v1870
          %v1889 = vpack.c.bf16 %v1873, %v1872
          %v1890 = vld [vmem:[%s3] sm:$0xf]
          %v1891 = vld [vmem:[%s3 + $0x4] sm:$0xf]
          %v1892 = vld [vmem:[%s3 + $0x8] sm:$0xf]
          %v1893 = vld [vmem:[%s3 + $0xc] sm:$0xf]
          %v1894 = vld [vmem:[%s3 + $0x10] sm:$0xf]
          %v1895 = vld [vmem:[%s3 + $0x14] sm:$0xf]
          %v1896 = vld [vmem:[%s3 + $0x18] sm:$0xf]
          %v1897 = vld [vmem:[%s3 + $0x1c] sm:$0xf]
          %v1898 = vld [vmem:[%s3 + $0x20] sm:$0xf]
          %v1899 = vld [vmem:[%s3 + $0x24] sm:$0xf]
          %v1900 = vld [vmem:[%s3 + $0x28] sm:$0xf]
          %v1901 = vld [vmem:[%s3 + $0x2c] sm:$0xf]
          %v1902 = vld [vmem:[%s3 + $0x30] sm:$0xf]
          %v1903 = vld [vmem:[%s3 + $0x34] sm:$0xf]
          %v1904 = vld [vmem:[%s3 + $0x38] sm:$0xf]
          %v1905 = vld [vmem:[%s3 + $0x3c] sm:$0xf]
          %v1906 = vld [vmem:[%s4] sm:$0x1]
          %v1908 = vperm.slane %v1906, 0
          %v1926 = vunpack.c.l.b16 %v1890
          %v1927 = vunpack.c.l.b16 %v1891
          %v1928 = vunpack.c.l.b16 %v1892
          %v1929 = vunpack.c.l.b16 %v1893
          %v1930 = vunpack.c.l.b16 %v1894
          %v1931 = vunpack.c.l.b16 %v1895
          %v1932 = vunpack.c.l.b16 %v1896
          %v1933 = vunpack.c.l.b16 %v1897
          %v1934 = vunpack.c.l.b16 %v1898
          %v1935 = vunpack.c.l.b16 %v1899
          %v1936 = vunpack.c.l.b16 %v1900
          %v1937 = vunpack.c.l.b16 %v1901
          %v1938 = vunpack.c.l.b16 %v1902
          %v1939 = vunpack.c.l.b16 %v1903
          %v1940 = vunpack.c.l.b16 %v1904
          %v1941 = vunpack.c.l.b16 %v1905
          %v1942 = vpack.c.b16 %v1927, %v1926
          %v1943 = vpack.c.b16 %v1929, %v1928
          %v1944 = vpack.c.b16 %v1931, %v1930
          %v1945 = vpack.c.b16 %v1933, %v1932
          %v1946 = vpack.c.b16 %v1935, %v1934
          %v1947 = vpack.c.b16 %v1937, %v1936
          %v1948 = vpack.c.b16 %v1939, %v1938
          %v1949 = vpack.c.b16 %v1941, %v1940
          %1958 = vmatpush.bf16.msra.mxu0 %v1949
          %1959 = vmatpush.bf16.msra.mxu0 %v1948
          %1960 = vmatpush.bf16.msra.mxu0 %v1947
          %1961 = vmatpush.bf16.msra.mxu0 %v1946
          %1962 = vmatpush.bf16.msra.mxu0 %v1945
          %1963 = vmatpush.bf16.msra.mxu0 %v1944
          %1964 = vmatpush.bf16.msra.mxu0 %v1943
          %1965 = vmatpush.bf16.msra.mxu0 %v1942
          %1966 = vmatmul.bf16.gmra.mxu0 %v1874
          %v1967 = vpop.f32.mrf.mxu0
          %v1968 = vadd.f32 %v1908, %v1967
          %v1969 = vpop.f32.mrf.mxu0
          %v1970 = vadd.f32 %v1908, %v1969
          %1971 = vmatmul.bf16.gmra.mxu0 %v1875
          %v1972 = vpop.f32.mrf.mxu0
          %v1973 = vadd.f32 %v1908, %v1972
          %v1974 = vpop.f32.mrf.mxu0
          %v1975 = vadd.f32 %v1908, %v1974
          %1976 = vmatmul.bf16.gmra.mxu0 %v1876
          %v1977 = vpop.f32.mrf.mxu0
          %v1978 = vadd.f32 %v1908, %v1977
          %v1979 = vpop.f32.mrf.mxu0
          %v1980 = vadd.f32 %v1908, %v1979
          %1981 = vmatmul.bf16.gmra.mxu0 %v1877
          %v1982 = vpop.f32.mrf.mxu0
          %v1983 = vadd.f32 %v1908, %v1982
          %v1984 = vpop.f32.mrf.mxu0
          %v1985 = vadd.f32 %v1908, %v1984
          %1986 = vmatmul.bf16.gmra.mxu0 %v1878
          %v1987 = vpop.f32.mrf.mxu0
          %v1988 = vadd.f32 %v1908, %v1987
          %v1989 = vpop.f32.mrf.mxu0
          %v1990 = vadd.f32 %v1908, %v1989
          %1991 = vmatmul.bf16.gmra.mxu0 %v1879
          %v1992 = vpop.f32.mrf.mxu0
          %v1993 = vadd.f32 %v1908, %v1992
          %v1994 = vpop.f32.mrf.mxu0
          %v1995 = vadd.f32 %v1908, %v1994
          %1996 = vmatmul.bf16.gmra.mxu0 %v1880
          %v1997 = vpop.f32.mrf.mxu0
          %v1998 = vadd.f32 %v1908, %v1997
          %v1999 = vpop.f32.mrf.mxu0
          %v2000 = vadd.f32 %v1908, %v1999
          %2001 = vmatmul.bf16.gmra.mxu0 %v1881
          %v2002 = vpop.f32.mrf.mxu0
          %v2003 = vadd.f32 %v1908, %v2002
          %v2004 = vpop.f32.mrf.mxu0
          %v2005 = vadd.f32 %v1908, %v2004
          %2006 = vmatmul.bf16.gmra.mxu0 %v1882
          %v2007 = vpop.f32.mrf.mxu0
          %v2008 = vadd.f32 %v1908, %v2007
          %v2009 = vpop.f32.mrf.mxu0
          %v2010 = vadd.f32 %v1908, %v2009
          %2011 = vmatmul.bf16.gmra.mxu0 %v1883
          %v2012 = vpop.f32.mrf.mxu0
          %v2013 = vadd.f32 %v1908, %v2012
          %v2014 = vpop.f32.mrf.mxu0
          %v2015 = vadd.f32 %v1908, %v2014
          %2016 = vmatmul.bf16.gmra.mxu0 %v1884
          %v2017 = vpop.f32.mrf.mxu0
          %v2018 = vadd.f32 %v1908, %v2017
          %v2019 = vpop.f32.mrf.mxu0
          %v2020 = vadd.f32 %v1908, %v2019
          %2021 = vmatmul.bf16.gmra.mxu0 %v1885
          %v2022 = vpop.f32.mrf.mxu0
          %v2023 = vadd.f32 %v1908, %v2022
          %v2024 = vpop.f32.mrf.mxu0
          %v2025 = vadd.f32 %v1908, %v2024
          %2026 = vmatmul.bf16.gmra.mxu0 %v1886
          %v2027 = vpop.f32.mrf.mxu0
          %v2028 = vadd.f32 %v1908, %v2027
          %v2029 = vpop.f32.mrf.mxu0
          %v2030 = vadd.f32 %v1908, %v2029
          %2031 = vmatmul.bf16.gmra.mxu0 %v1887
          %v2032 = vpop.f32.mrf.mxu0
          %v2033 = vadd.f32 %v1908, %v2032
          %v2034 = vpop.f32.mrf.mxu0
          %v2035 = vadd.f32 %v1908, %v2034
          %2036 = vmatmul.bf16.gmra.mxu0 %v1888
          %v2037 = vpop.f32.mrf.mxu0
          %v2038 = vadd.f32 %v1908, %v2037
          %v2039 = vpop.f32.mrf.mxu0
          %v2040 = vadd.f32 %v1908, %v2039
          %2041 = vmatmul.bf16.gmra.mxu0 %v1889
          %v2042 = vpop.f32.mrf.mxu0
          %v2043 = vadd.f32 %v1908, %v2042
          %v2044 = vpop.f32.mrf.mxu0
          %v2045 = vadd.f32 %v1908, %v2044
          %2046 = vdwg.mxu0
          %v2047 = vmax.f32 %v1968, 0.0
          %v2048 = vmax.f32 %v1970, 0.0
          %v2049 = vmax.f32 %v1973, 0.0
          %v2050 = vmax.f32 %v1975, 0.0
          %v2051 = vmax.f32 %v1978, 0.0
          %v2052 = vmax.f32 %v1980, 0.0
          %v2053 = vmax.f32 %v1983, 0.0
          %v2054 = vmax.f32 %v1985, 0.0
          %v2055 = vmax.f32 %v1988, 0.0
          %v2056 = vmax.f32 %v1990, 0.0
          %v2057 = vmax.f32 %v1993, 0.0
          %v2058 = vmax.f32 %v1995, 0.0
          %v2059 = vmax.f32 %v1998, 0.0
          %v2060 = vmax.f32 %v2000, 0.0
          %v2061 = vmax.f32 %v2003, 0.0
          %v2062 = vmax.f32 %v2005, 0.0
          %v2063 = vmax.f32 %v2008, 0.0
          %v2064 = vmax.f32 %v2010, 0.0
          %v2065 = vmax.f32 %v2013, 0.0
          %v2066 = vmax.f32 %v2015, 0.0
          %v2067 = vmax.f32 %v2018, 0.0
          %v2068 = vmax.f32 %v2020, 0.0
          %v2069 = vmax.f32 %v2023, 0.0
          %v2070 = vmax.f32 %v2025, 0.0
          %v2071 = vmax.f32 %v2028, 0.0
          %v2072 = vmax.f32 %v2030, 0.0
          %v2073 = vmax.f32 %v2033, 0.0
          %v2074 = vmax.f32 %v2035, 0.0
          %v2075 = vmax.f32 %v2038, 0.0
          %v2076 = vmax.f32 %v2040, 0.0
          %v2077 = vmax.f32 %v2043, 0.0
          %v2078 = vmax.f32 %v2045, 0.0
          %v2079 = vpack.c.bf16 %v2048, %v2047
          %v2080 = vpack.c.bf16 %v2050, %v2049
          %v2081 = vpack.c.bf16 %v2052, %v2051
          %v2082 = vpack.c.bf16 %v2054, %v2053
          %v2083 = vpack.c.bf16 %v2056, %v2055
          %v2084 = vpack.c.bf16 %v2058, %v2057
          %v2085 = vpack.c.bf16 %v2060, %v2059
          %v2086 = vpack.c.bf16 %v2062, %v2061
          %v2087 = vpack.c.bf16 %v2064, %v2063
          %v2088 = vpack.c.bf16 %v2066, %v2065
          %v2089 = vpack.c.bf16 %v2068, %v2067
          %v2090 = vpack.c.bf16 %v2070, %v2069
          %v2091 = vpack.c.bf16 %v2072, %v2071
          %v2092 = vpack.c.bf16 %v2074, %v2073
          %v2093 = vpack.c.bf16 %v2076, %v2075
          %v2094 = vpack.c.bf16 %v2078, %v2077
          %v2095 = vld [vmem:[%s5] sm:$0xf]
          %v2096 = vld [vmem:[%s5 + $0x4] sm:$0xf]
          %v2097 = vld [vmem:[%s5 + $0x8] sm:$0xf]
          %v2098 = vld [vmem:[%s5 + $0xc] sm:$0xf]
          %v2099 = vld [vmem:[%s5 + $0x10] sm:$0xf]
          %v2100 = vld [vmem:[%s5 + $0x14] sm:$0xf]
          %v2101 = vld [vmem:[%s5 + $0x18] sm:$0xf]
          %v2102 = vld [vmem:[%s5 + $0x1c] sm:$0xf]
          %v2103 = vld [vmem:[%s5 + $0x20] sm:$0xf]
          %v2104 = vld [vmem:[%s5 + $0x24] sm:$0xf]
          %v2105 = vld [vmem:[%s5 + $0x28] sm:$0xf]
          %v2106 = vld [vmem:[%s5 + $0x2c] sm:$0xf]
          %v2107 = vld [vmem:[%s5 + $0x30] sm:$0xf]
          %v2108 = vld [vmem:[%s5 + $0x34] sm:$0xf]
          %v2109 = vld [vmem:[%s5 + $0x38] sm:$0xf]
          %v2110 = vld [vmem:[%s5 + $0x3c] sm:$0xf]
          %v2111 = vld [vmem:[%s6] sm:$0x1]
          %v2113 = vperm.slane %v2111, 0
          %v2131 = vunpack.c.l.b16 %v2095
          %v2132 = vunpack.c.l.b16 %v2096
          %v2133 = vunpack.c.l.b16 %v2097
          %v2134 = vunpack.c.l.b16 %v2098
          %v2135 = vunpack.c.l.b16 %v2099
          %v2136 = vunpack.c.l.b16 %v2100
          %v2137 = vunpack.c.l.b16 %v2101
          %v2138 = vunpack.c.l.b16 %v2102
          %v2139 = vunpack.c.l.b16 %v2103
          %v2140 = vunpack.c.l.b16 %v2104
          %v2141 = vunpack.c.l.b16 %v2105
          %v2142 = vunpack.c.l.b16 %v2106
          %v2143 = vunpack.c.l.b16 %v2107
          %v2144 = vunpack.c.l.b16 %v2108
          %v2145 = vunpack.c.l.b16 %v2109
          %v2146 = vunpack.c.l.b16 %v2110
          %v2147 = vpack.c.b16 %v2132, %v2131
          %v2148 = vpack.c.b16 %v2134, %v2133
          %v2149 = vpack.c.b16 %v2136, %v2135
          %v2150 = vpack.c.b16 %v2138, %v2137
          %v2151 = vpack.c.b16 %v2140, %v2139
          %v2152 = vpack.c.b16 %v2142, %v2141
          %v2153 = vpack.c.b16 %v2144, %v2143
          %v2154 = vpack.c.b16 %v2146, %v2145
          %2163 = vmatpush.bf16.msra.mxu0 %v2154
          %2164 = vmatpush.bf16.msra.mxu0 %v2153
          %2165 = vmatpush.bf16.msra.mxu0 %v2152
          %2166 = vmatpush.bf16.msra.mxu0 %v2151
          %2167 = vmatpush.bf16.msra.mxu0 %v2150
          %2168 = vmatpush.bf16.msra.mxu0 %v2149
          %2169 = vmatpush.bf16.msra.mxu0 %v2148
          %2170 = vmatpush.bf16.msra.mxu0 %v2147
          %2171 = vmatmul.bf16.gmra.mxu0 %v2079
          %v2172 = vpop.f32.mrf.mxu0
          %v2173 = vadd.f32 %v2113, %v2172
          %v2174 = vpop.f32.mrf.mxu0
          %v2175 = vadd.f32 %v2113, %v2174
          %2176 = vmatmul.bf16.gmra.mxu0 %v2080
          %v2177 = vpop.f32.mrf.mxu0
          %v2178 = vadd.f32 %v2113, %v2177
          %v2179 = vpop.f32.mrf.mxu0
          %v2180 = vadd.f32 %v2113, %v2179
          %2181 = vmatmul.bf16.gmra.mxu0 %v2081
          %v2182 = vpop.f32.mrf.mxu0
          %v2183 = vadd.f32 %v2113, %v2182
          %v2184 = vpop.f32.mrf.mxu0
          %v2185 = vadd.f32 %v2113, %v2184
          %2186 = vmatmul.bf16.gmra.mxu0 %v2082
          %v2187 = vpop.f32.mrf.mxu0
          %v2188 = vadd.f32 %v2113, %v2187
          %v2189 = vpop.f32.mrf.mxu0
          %v2190 = vadd.f32 %v2113, %v2189
          %2191 = vmatmul.bf16.gmra.mxu0 %v2083
          %v2192 = vpop.f32.mrf.mxu0
          %v2193 = vadd.f32 %v2113, %v2192
          %v2194 = vpop.f32.mrf.mxu0
          %v2195 = vadd.f32 %v2113, %v2194
          %2196 = vmatmul.bf16.gmra.mxu0 %v2084
          %v2197 = vpop.f32.mrf.mxu0
          %v2198 = vadd.f32 %v2113, %v2197
          %v2199 = vpop.f32.mrf.mxu0
          %v2200 = vadd.f32 %v2113, %v2199
          %2201 = vmatmul.bf16.gmra.mxu0 %v2085
          %v2202 = vpop.f32.mrf.mxu0
          %v2203 = vadd.f32 %v2113, %v2202
          %v2204 = vpop.f32.mrf.mxu0
          %v2205 = vadd.f32 %v2113, %v2204
          %2206 = vmatmul.bf16.gmra.mxu0 %v2086
          %v2207 = vpop.f32.mrf.mxu0
          %v2208 = vadd.f32 %v2113, %v2207
          %v2209 = vpop.f32.mrf.mxu0
          %v2210 = vadd.f32 %v2113, %v2209
          %2211 = vmatmul.bf16.gmra.mxu0 %v2087
          %v2212 = vpop.f32.mrf.mxu0
          %v2213 = vadd.f32 %v2113, %v2212
          %v2214 = vpop.f32.mrf.mxu0
          %v2215 = vadd.f32 %v2113, %v2214
          %2216 = vmatmul.bf16.gmra.mxu0 %v2088
          %v2217 = vpop.f32.mrf.mxu0
          %v2218 = vadd.f32 %v2113, %v2217
          %v2219 = vpop.f32.mrf.mxu0
          %v2220 = vadd.f32 %v2113, %v2219
          %2221 = vmatmul.bf16.gmra.mxu0 %v2089
          %v2222 = vpop.f32.mrf.mxu0
          %v2223 = vadd.f32 %v2113, %v2222
          %v2224 = vpop.f32.mrf.mxu0
          %v2225 = vadd.f32 %v2113, %v2224
          %2226 = vmatmul.bf16.gmra.mxu0 %v2090
          %v2227 = vpop.f32.mrf.mxu0
          %v2228 = vadd.f32 %v2113, %v2227
          %v2229 = vpop.f32.mrf.mxu0
          %v2230 = vadd.f32 %v2113, %v2229
          %2231 = vmatmul.bf16.gmra.mxu0 %v2091
          %v2232 = vpop.f32.mrf.mxu0
          %v2233 = vadd.f32 %v2113, %v2232
          %v2234 = vpop.f32.mrf.mxu0
          %v2235 = vadd.f32 %v2113, %v2234
          %2236 = vmatmul.bf16.gmra.mxu0 %v2092
          %v2237 = vpop.f32.mrf.mxu0
          %v2238 = vadd.f32 %v2113, %v2237
          %v2239 = vpop.f32.mrf.mxu0
          %v2240 = vadd.f32 %v2113, %v2239
          %2241 = vmatmul.bf16.gmra.mxu0 %v2093
          %v2242 = vpop.f32.mrf.mxu0
          %v2243 = vadd.f32 %v2113, %v2242
          %v2244 = vpop.f32.mrf.mxu0
          %v2245 = vadd.f32 %v2113, %v2244
          %2246 = vmatmul.bf16.gmra.mxu0 %v2094
          %v2247 = vpop.f32.mrf.mxu0
          %v2248 = vadd.f32 %v2113, %v2247
          %v2249 = vpop.f32.mrf.mxu0
          %v2250 = vadd.f32 %v2113, %v2249
          %2251 = vdwg.mxu0
          %v2252 = vmax.f32 %v2173, 0.0
          %v2253 = vmax.f32 %v2175, 0.0
          %v2254 = vmax.f32 %v2178, 0.0
          %v2255 = vmax.f32 %v2180, 0.0
          %v2256 = vmax.f32 %v2183, 0.0
          %v2257 = vmax.f32 %v2185, 0.0
          %v2258 = vmax.f32 %v2188, 0.0
          %v2259 = vmax.f32 %v2190, 0.0
          %v2260 = vmax.f32 %v2193, 0.0
          %v2261 = vmax.f32 %v2195, 0.0
          %v2262 = vmax.f32 %v2198, 0.0
          %v2263 = vmax.f32 %v2200, 0.0
          %v2264 = vmax.f32 %v2203, 0.0
          %v2265 = vmax.f32 %v2205, 0.0
          %v2266 = vmax.f32 %v2208, 0.0
          %v2267 = vmax.f32 %v2210, 0.0
          %v2268 = vmax.f32 %v2213, 0.0
          %v2269 = vmax.f32 %v2215, 0.0
          %v2270 = vmax.f32 %v2218, 0.0
          %v2271 = vmax.f32 %v2220, 0.0
          %v2272 = vmax.f32 %v2223, 0.0
          %v2273 = vmax.f32 %v2225, 0.0
          %v2274 = vmax.f32 %v2228, 0.0
          %v2275 = vmax.f32 %v2230, 0.0
          %v2276 = vmax.f32 %v2233, 0.0
          %v2277 = vmax.f32 %v2235, 0.0
          %v2278 = vmax.f32 %v2238, 0.0
          %v2279 = vmax.f32 %v2240, 0.0
          %v2280 = vmax.f32 %v2243, 0.0
          %v2281 = vmax.f32 %v2245, 0.0
          %v2282 = vmax.f32 %v2248, 0.0
          %v2283 = vmax.f32 %v2250, 0.0
          %2284 = vst [vmem:[%s532] sm:$0xff] %v2252
          %2285 = vst [vmem:[%s532 + $0x8] sm:$0xff] %v2253
          %2286 = vst [vmem:[%s532 + $0x10] sm:$0xff] %v2254
          %2287 = vst [vmem:[%s532 + $0x18] sm:$0xff] %v2255
          %2288 = vst [vmem:[%s532 + $0x20] sm:$0xff] %v2256
          %2289 = vst [vmem:[%s532 + $0x28] sm:$0xff] %v2257
          %2290 = vst [vmem:[%s532 + $0x30] sm:$0xff] %v2258
          %2291 = vst [vmem:[%s532 + $0x38] sm:$0xff] %v2259
          %2292 = vst [vmem:[%s532 + $0x40] sm:$0xff] %v2260
          %2293 = vst [vmem:[%s532 + $0x48] sm:$0xff] %v2261
          %2294 = vst [vmem:[%s532 + $0x50] sm:$0xff] %v2262
          %2295 = vst [vmem:[%s532 + $0x58] sm:$0xff] %v2263
          %2296 = vst [vmem:[%s532 + $0x60] sm:$0xff] %v2264
          %2297 = vst [vmem:[%s532 + $0x68] sm:$0xff] %v2265
          %2298 = vst [vmem:[%s532 + $0x70] sm:$0xff] %v2266
          %2299 = vst [vmem:[%s532 + $0x78] sm:$0xff] %v2267
          %2300 = vst [vmem:[%s532 + $0x80] sm:$0xff] %v2268
          %2301 = vst [vmem:[%s532 + $0x88] sm:$0xff] %v2269
          %2302 = vst [vmem:[%s532 + $0x90] sm:$0xff] %v2270
          %2303 = vst [vmem:[%s532 + $0x98] sm:$0xff] %v2271
          %2304 = vst [vmem:[%s532 + $0xa0] sm:$0xff] %v2272
          %2305 = vst [vmem:[%s532 + $0xa8] sm:$0xff] %v2273
          %2306 = vst [vmem:[%s532 + $0xb0] sm:$0xff] %v2274
          %2307 = vst [vmem:[%s532 + $0xb8] sm:$0xff] %v2275
          %2308 = vst [vmem:[%s532 + $0xc0] sm:$0xff] %v2276
          %2309 = vst [vmem:[%s532 + $0xc8] sm:$0xff] %v2277
          %2310 = vst [vmem:[%s532 + $0xd0] sm:$0xff] %v2278
          %2311 = vst [vmem:[%s532 + $0xd8] sm:$0xff] %v2279
          %2312 = vst [vmem:[%s532 + $0xe0] sm:$0xff] %v2280
          %2313 = vst [vmem:[%s532 + $0xe8] sm:$0xff] %v2281
          %2314 = vst [vmem:[%s532 + $0xf0] sm:$0xff] %v2282
          %2315 = vst [vmem:[%s532 + $0xf8] sm:$0xff] %v2283
          %v2316 = vmul.f32 %v2252, %v1806
          %v2317 = vmul.f32 %v2253, %v1807
          %v2318 = vmul.f32 %v2254, %v1808
          %v2319 = vmul.f32 %v2255, %v1809
          %v2320 = vmul.f32 %v2256, %v1810
          %v2321 = vmul.f32 %v2257, %v1811
          %v2322 = vmul.f32 %v2258, %v1812
          %v2323 = vmul.f32 %v2259, %v1813
          %v2324 = vmul.f32 %v2260, %v1814
          %v2325 = vmul.f32 %v2261, %v1815
          %v2326 = vmul.f32 %v2262, %v1816
          %v2327 = vmul.f32 %v2263, %v1817
          %v2328 = vmul.f32 %v2264, %v1818
          %v2329 = vmul.f32 %v2265, %v1819
          %v2330 = vmul.f32 %v2266, %v1820
          %v2331 = vmul.f32 %v2267, %v1821
          %v2332 = vmul.f32 %v2268, %v1822
          %v2333 = vmul.f32 %v2269, %v1823
          %v2334 = vmul.f32 %v2270, %v1824
          %v2335 = vmul.f32 %v2271, %v1825
          %v2336 = vmul.f32 %v2272, %v1826
          %v2337 = vmul.f32 %v2273, %v1827
          %v2338 = vmul.f32 %v2274, %v1828
          %v2339 = vmul.f32 %v2275, %v1829
          %v2340 = vmul.f32 %v2276, %v1830
          %v2341 = vmul.f32 %v2277, %v1831
          %v2342 = vmul.f32 %v2278, %v1832
          %v2343 = vmul.f32 %v2279, %v1833
          %v2344 = vmul.f32 %v2280, %v1834
          %v2345 = vmul.f32 %v2281, %v1835
          %v2346 = vmul.f32 %v2282, %v1836
          %v2347 = vmul.f32 %v2283, %v1837
          %v2348 = vadd.f32 %v2316, %v2317
          %v2349 = vadd.f32 %v2348, %v2318
          %v2350 = vadd.f32 %v2349, %v2319
          %v2351 = vadd.f32 %v2350, %v2320
          %v2352 = vadd.f32 %v2351, %v2321
          %v2353 = vadd.f32 %v2352, %v2322
          %v2354 = vadd.f32 %v2353, %v2323
          %v2355 = vadd.f32 %v2354, %v2324
          %v2356 = vadd.f32 %v2355, %v2325
          %v2357 = vadd.f32 %v2356, %v2326
          %v2358 = vadd.f32 %v2357, %v2327
          %v2359 = vadd.f32 %v2358, %v2328
          %v2360 = vadd.f32 %v2359, %v2329
          %v2361 = vadd.f32 %v2360, %v2330
          %v2362 = vadd.f32 %v2361, %v2331
          %v2363 = vadd.f32 %v2362, %v2332
          %v2364 = vadd.f32 %v2363, %v2333
          %v2365 = vadd.f32 %v2364, %v2334
          %v2366 = vadd.f32 %v2365, %v2335
          %v2367 = vadd.f32 %v2366, %v2336
          %v2368 = vadd.f32 %v2367, %v2337
          %v2369 = vadd.f32 %v2368, %v2338
          %v2370 = vadd.f32 %v2369, %v2339
          %v2371 = vadd.f32 %v2370, %v2340
          %v2372 = vadd.f32 %v2371, %v2341
          %v2373 = vadd.f32 %v2372, %v2342
          %v2374 = vadd.f32 %v2373, %v2343
          %v2375 = vadd.f32 %v2374, %v2344
          %v2376 = vadd.f32 %v2375, %v2345
          %v2377 = vadd.f32 %v2376, %v2346
          %v2378 = vadd.f32 %v2377, %v2347
          %v2379 = vrot.slane %v2378, 4
          %v2380 = vadd.f32 %v2378, %v2379
          %v2381 = vrot.slane %v2380, 2
          %v2382 = vadd.f32 %v2380, %v2381
          %v2383 = vrot.slane %v2382, 1
          %v2384 = vadd.f32 %v2382, %v2383
          %v2385 = vmul.f32 %v2316, %v2316
          %v2386 = vmul.f32 %v2317, %v2317
          %v2387 = vmul.f32 %v2318, %v2318
          %v2388 = vmul.f32 %v2319, %v2319
          %v2389 = vmul.f32 %v2320, %v2320
          %v2390 = vmul.f32 %v2321, %v2321
          %v2391 = vmul.f32 %v2322, %v2322
          %v2392 = vmul.f32 %v2323, %v2323
          %v2393 = vmul.f32 %v2324, %v2324
          %v2394 = vmul.f32 %v2325, %v2325
          %v2395 = vmul.f32 %v2326, %v2326
          %v2396 = vmul.f32 %v2327, %v2327
          %v2397 = vmul.f32 %v2328, %v2328
          %v2398 = vmul.f32 %v2329, %v2329
          %v2399 = vmul.f32 %v2330, %v2330
          %v2400 = vmul.f32 %v2331, %v2331
          %v2401 = vmul.f32 %v2332, %v2332
          %v2402 = vmul.f32 %v2333, %v2333
          %v2403 = vmul.f32 %v2334, %v2334
          %v2404 = vmul.f32 %v2335, %v2335
          %v2405 = vmul.f32 %v2336, %v2336
          %v2406 = vmul.f32 %v2337, %v2337
          %v2407 = vmul.f32 %v2338, %v2338
          %v2408 = vmul.f32 %v2339, %v2339
          %v2409 = vmul.f32 %v2340, %v2340
          %v2410 = vmul.f32 %v2341, %v2341
          %v2411 = vmul.f32 %v2342, %v2342
          %v2412 = vmul.f32 %v2343, %v2343
          %v2413 = vmul.f32 %v2344, %v2344
          %v2414 = vmul.f32 %v2345, %v2345
          %v2415 = vmul.f32 %v2346, %v2346
          %v2416 = vmul.f32 %v2347, %v2347
          %v2417 = vadd.f32 %v2385, %v2386
          %v2418 = vadd.f32 %v2417, %v2387
          %v2419 = vadd.f32 %v2418, %v2388
          %v2420 = vadd.f32 %v2419, %v2389
          %v2421 = vadd.f32 %v2420, %v2390
          %v2422 = vadd.f32 %v2421, %v2391
          %v2423 = vadd.f32 %v2422, %v2392
          %v2424 = vadd.f32 %v2423, %v2393
          %v2425 = vadd.f32 %v2424, %v2394
          %v2426 = vadd.f32 %v2425, %v2395
          %v2427 = vadd.f32 %v2426, %v2396
          %v2428 = vadd.f32 %v2427, %v2397
          %v2429 = vadd.f32 %v2428, %v2398
          %v2430 = vadd.f32 %v2429, %v2399
          %v2431 = vadd.f32 %v2430, %v2400
          %v2432 = vadd.f32 %v2431, %v2401
          %v2433 = vadd.f32 %v2432, %v2402
          %v2434 = vadd.f32 %v2433, %v2403
          %v2435 = vadd.f32 %v2434, %v2404
          %v2436 = vadd.f32 %v2435, %v2405
          %v2437 = vadd.f32 %v2436, %v2406
          %v2438 = vadd.f32 %v2437, %v2407
          %v2439 = vadd.f32 %v2438, %v2408
          %v2440 = vadd.f32 %v2439, %v2409
          %v2441 = vadd.f32 %v2440, %v2410
          %v2442 = vadd.f32 %v2441, %v2411
          %v2443 = vadd.f32 %v2442, %v2412
          %v2444 = vadd.f32 %v2443, %v2413
          %v2445 = vadd.f32 %v2444, %v2414
          %v2446 = vadd.f32 %v2445, %v2415
          %v2447 = vadd.f32 %v2446, %v2416
          %v2448 = vrot.slane %v2447, 4
          %v2449 = vadd.f32 %v2447, %v2448
          %v2450 = vrot.slane %v2449, 2
          %v2451 = vadd.f32 %v2449, %v2450
          %v2452 = vrot.slane %v2451, 1
          %v2453 = vadd.f32 %v2451, %v2452
          %vm2454 = vcmask 1040384
          %v2455 = vsel %vm2454, %v2384, %v2453
          %2456 = vst [vmem:[%s537] sm:$0x3] %v2455
          %v2457 = vld [vmem:[%s526] sm:$0xff]
          %v2458 = vpack.c.bf16 %v2253, %v2252
          %v2459 = vpack.c.bf16 %v2255, %v2254
          %v2460 = vpack.c.bf16 %v2257, %v2256
          %v2461 = vpack.c.bf16 %v2259, %v2258
          %v2462 = vpack.c.bf16 %v2261, %v2260
          %v2463 = vpack.c.bf16 %v2263, %v2262
          %v2464 = vpack.c.bf16 %v2265, %v2264
          %v2465 = vpack.c.bf16 %v2267, %v2266
          %v2466 = vpack.c.bf16 %v2269, %v2268
          %v2467 = vpack.c.bf16 %v2271, %v2270
          %v2468 = vpack.c.bf16 %v2273, %v2272
          %v2469 = vpack.c.bf16 %v2275, %v2274
          %v2470 = vpack.c.bf16 %v2277, %v2276
          %v2471 = vpack.c.bf16 %v2279, %v2278
          %v2472 = vpack.c.bf16 %v2281, %v2280
          %v2473 = vpack.c.bf16 %v2283, %v2282
          %v2475 = vunpack.c.l.b16 %v2457
          %v2476 = vunpack.c.h.b16 %v2457
          %v2477 = vpack.c.b16 %v2475, %v2475
          %v2478 = vpack.c.b16 %v2476, %v2476
          %2481 = vmatpush.bf16.msra.mxu0 %v2465
          %2482 = vmatpush.bf16.msra.mxu0 %v2464
          %2483 = vmatpush.bf16.msra.mxu0 %v2463
          %2484 = vmatpush.bf16.msra.mxu0 %v2462
          %2485 = vmatpush.bf16.msra.mxu0 %v2461
          %2486 = vmatpush.bf16.msra.mxu0 %v2460
          %2487 = vmatpush.bf16.msra.mxu0 %v2459
          %2488 = vmatpush.bf16.msra.mxu0 %v2458
          %2489 = vmatmul.bf16.gmra.mxu0 %v2477
          %v2490 = vpop.f32.mrf.mxu0
          %v2491 = vadd.f32 0.0, %v2490
          %v2492 = vpop.f32.mrf.mxu0
          %2493 = vdwg.mxu0
          %2494 = vmatpush.bf16.msra.mxu0 %v2473
          %2495 = vmatpush.bf16.msra.mxu0 %v2472
          %2496 = vmatpush.bf16.msra.mxu0 %v2471
          %2497 = vmatpush.bf16.msra.mxu0 %v2470
          %2498 = vmatpush.bf16.msra.mxu0 %v2469
          %2499 = vmatpush.bf16.msra.mxu0 %v2468
          %2500 = vmatpush.bf16.msra.mxu0 %v2467
          %2501 = vmatpush.bf16.msra.mxu0 %v2466
          %2502 = vmatmul.bf16.gmra.mxu0 %v2478
          %v2503 = vpop.f32.mrf.mxu0
          %v2504 = vadd.f32 %v2491, %v2503
          %v2505 = vpop.f32.mrf.mxu0
          %2506 = vdwg.mxu0
          %2507 = vst [vmem:[%s541] sm:$0xff] %v2504
        $region79: #{simclr_forward.3} parent=66 // pred_fallthru
          _
        %s2508 = smul.u32 32, %s25
        %p2509 = scmp.lt.s32.totalorder %s2508, 127
        %s2510 = scalar_select %p2509, %s2508, 127
        %s2511 = smul.addr %s2510, 8
        %s2512 = scalar_lea.vmem %s7, %s2511
        %p2513 = scmp.lt.s32.totalorder %s25, 3
        %s2514 = scalar_select %p2513, %s25, 3
        %s2515 = smul.addr %s2514, 2
        %s2516 = scalar_lea.vmem %s8, %s2515
        %p2517 = scmp.lt.s32.totalorder %s25, 3
        %s2518 = scalar_select %p2517, %s25, 3
        %s2519 = smul.addr %s2518, 8
        %s2520 = scalar_lea.vmem %s9, %s2519
        // Predicated region
        $region80: #{simclr_forward.3} parent=66 // pred_check
          %p2521 = pneg %p210
        $region81: #{simclr_forward.3} parent=66 // pred_check_branch
          %2523 = sbr.rel (%p2521) target = $region83
        $region82: #{simclr_forward.3} parent=66 // pred_region
          %s2524 = smul.u32 32, %s25
        $region83: #{simclr_forward.3} parent=66 // pred_fallthru
          _
        // Predicated region
        $region84: #{simclr_forward.3} parent=66 // pred_check
          %p2525 = pneg %p236
        $region85: #{simclr_forward.3} parent=66 // pred_check_branch
          %2527 = sbr.rel (%p2525) target = $region87
        $region86: #{simclr_forward.3} parent=66 // pred_region
          _
        $region87: #{simclr_forward.3} parent=66 // pred_fallthru
          _
        // Predicated region
        $region88: #{simclr_forward.3} parent=66 // pred_check
          %p2528 = pneg %p262
        $region89: #{simclr_forward.3} parent=66 // pred_check_branch
          %2530 = sbr.rel (%p2528) target = $region91
        $region90: #{simclr_forward.3} parent=66 // pred_region
          _
        $region91: #{simclr_forward.3} parent=66 // pred_fallthru
          _
      $region67: #{simclr_forward.3} parent=5 // pred_fallthru
        _
      %p2531 = scmp.le.s32.totalorder 2, %s16
      // Predicated region
      $region92: #{simclr_forward.3} parent=5 // pred_check
        %p2532 = pneg %p2531
      $region93: #{simclr_forward.3} parent=5 // pred_check_branch
        %2534 = sbr.rel (%p2532) target = $region95
      $region94: #{simclr_forward.3} parent=5 // pred_region
        %s2535 = ssub.s32 %s16, 2
        // Predicated region
        $region96: #{simclr_forward.3} parent=94 // pred_check
          %p2536 = pneg %p216
        $region97: #{simclr_forward.3} parent=94 // pred_check_branch
          %2538 = sbr.rel (%p2536) target = $region99
        $region98: #{simclr_forward.3} parent=94 // pred_region
          %s2539 = smul.u32 32, %s27
          %p2540 = scmp.lt.s32.totalorder %s2539, 127
          %s2541 = scalar_select %p2540, %s2539, 127
          %s2542 = smul.addr %s2541, 8
          %s2543 = scalar_lea.vmem %s7, %s2542
        $region99: #{simclr_forward.3} parent=94 // pred_fallthru
          _
        // Predicated region
        $region100: #{simclr_forward.3} parent=94 // pred_check
          %p2544 = pneg %p242
        $region101: #{simclr_forward.3} parent=94 // pred_check_branch
          %2546 = sbr.rel (%p2544) target = $region103
        $region102: #{simclr_forward.3} parent=94 // pred_region
          %p2547 = scmp.lt.s32.totalorder %s27, 3
          %s2548 = scalar_select %p2547, %s27, 3
          %s2549 = smul.addr %s2548, 2
          %s2550 = scalar_lea.vmem %s8, %s2549
        $region103: #{simclr_forward.3} parent=94 // pred_fallthru
          _
        // Predicated region
        $region104: #{simclr_forward.3} parent=94 // pred_check
          %p2551 = pneg %p268
        $region105: #{simclr_forward.3} parent=94 // pred_check_branch
          %2553 = sbr.rel (%p2551) target = $region107
        $region106: #{simclr_forward.3} parent=94 // pred_region
          %p2554 = scmp.lt.s32.totalorder %s27, 3
          %s2555 = scalar_select %p2554, %s27, 3
          %s2556 = smul.addr %s2555, 8
          %s2557 = scalar_lea.vmem %s9, %s2556
        $region107: #{simclr_forward.3} parent=94 // pred_fallthru
          _
      $region95: #{simclr_forward.3} parent=5 // pred_fallthru
        _
    $region6: #{simclr_forward.3} parent=1 // loop_footer
      %s20 = sadd.s32 1, %s16
    $region7: #{simclr_forward.3} parent=1 // loop_footer_branch
      %15 = sbr.rel target = $region3
    $region8: #{simclr_forward.3} parent=1 // loop_exit
      _

// kernel: simclr_forward.4
$region0: #{simclr_forward.4}
  #allocation0 [shape = 'u32[]', space=smem, size = 0x4, offset = 0x4, fixed_abs, tag = 'smem constant byte address 0x4 - core index']
  #allocation1 [shape = 'u32[72,128]{1,0:T(1,128)}', space=vmem, size = 0x9000, scoped, tag = 'internal scratch']
  #allocation2 [shape = 'f32[256,128]{1,0:T(8,128)}', space=vmem, size = 0x20000, scoped, tag = 'scratch operand']
  %s0 = inlined_call_operand.vmem [shape: bf16[1024,1024], index: 0, kind: input, shape index: {}]
  %s1 = inlined_call_operand.vmem [shape: bf16[1024,128], index: 1, kind: input, shape index: {}]
  %s2 = inlined_call_operand.vmem [shape: bf16[8,1024], index: 2, kind: input, shape index: {}]
  %s3 = inlined_call_operand.vmem [shape: bf16[128,128], index: 3, kind: input, shape index: {}]
  %s4 = inlined_call_operand.vmem [shape: f32[1,128], index: 4, kind: input, shape index: {}]
  %s5 = inlined_call_operand.vmem [shape: bf16[128,128], index: 5, kind: input, shape index: {}]
  %s6 = inlined_call_operand.vmem [shape: f32[1,128], index: 6, kind: input, shape index: {}]
  %s7 = inlined_call_operand.hbm [shape: f32[1024,128], index: 7, kind: output, shape index: {0}]
  %s8 = inlined_call_operand.vmem [shape: f32[4,2,128], index: 8, kind: output, shape index: {1}]
  %s9 = inlined_call_operand.vmem [shape: f32[4,8,128], index: 9, kind: output, shape index: {2}]
  %10 = xla_tuple %s7, %s8, %s9
  %s11 = sld [smem:[#allocation0]]
  $region108: #{simclr_forward.4} parent=0
    _
  %s13 = ssub.s32 1, %s11
  %s14 = scalar_select 0, %s13, %s11
  $region1: #{simclr_forward.4} parent=0
    #allocation3 [shape = 'u8[524288]{0}', space=vmem, size = 0x80000, scoped, tag = 'input window, operand 0']
    #allocation4 [shape = 'u8[262144]{0}', space=vmem, size = 0x40000, scoped, tag = 'output window, operand 0']
    #allocation5 [shape = 's32[2]{0}', space=sflag, size = 0x8, scoped, tag = 'scoped memory for simclr_forward.4']
    %15 = vsyncpa [#allocation5], 0
    %s16 = scalar_lea.sflag [#allocation5], 1
    %17 = vsyncpa %s16, 0
    loop: start=0, step=1, limit=10
    $region2: #{simclr_forward.4} parent=1 // loop_pre_header
      _
    $region3: #{simclr_forward.4} parent=1 // loop_header
      %s19 = sphi 0, %s23
      %p20 = scmp.ge.s32.totalorder %s19, 10
      %s26 = sphi 0, %s38
      %s27 = sphi 0, %s34
      %s28 = sphi 0, %s26
      %s29 = sphi 0, %s27
      %s30 = sphi 0, %s28
      %s31 = sphi 0, %s29
      %s43 = sphi 0, %s45
      %s46 = sphi 0, %s43
      %s47 = sphi 0, %s46
      %s63 = sphi 0, %s47
      %s67 = sphi 0, %s67
      %s69 = sphi 0, %s67
      %s70 = sphi 0, %s69
      %s84 = sphi 0, %s70
      %s90 = sphi 0, %s92
      %s93 = sphi 0, %s90
      %s94 = sphi 0, %s93
      %s110 = sphi 0, %s94
      %s114 = sphi 0, %s114
      %s116 = sphi 0, %s114
      %s117 = sphi 0, %s116
      %s131 = sphi 0, %s117
      %s135 = sphi 0, %s135
      %s137 = sphi 0, %s135
      %s138 = sphi 0, %s137
      %s152 = sphi 0, %s138
      %s156 = sphi 0, %s156
      %s158 = sphi 0, %s156
      %s159 = sphi 0, %s158
      %s173 = sphi 0, %s159
      %s177 = sphi 0, %s177
      %s179 = sphi 0, %s177
      %s180 = sphi 0, %s179
      %s194 = sphi 0, %s180
      %s200 = sphi 0, %s202
      %s203 = sphi 0, %s200
      %s204 = sphi 0, %s203
      %s220 = sphi 0, %s204
      %s226 = sphi 0, %s228
      %s229 = sphi 0, %s226
      %s230 = sphi 0, %s229
      %s246 = sphi 0, %s230
      %s252 = sphi 0, %s254
      %s255 = sphi 0, %s252
      %s256 = sphi 0, %s255
      %s272 = sphi 0, %s256
    $region4: #{simclr_forward.4} parent=1 // loop_header_branch
      %22 = sbr.rel (%p20) target = $region8
    $region5: #{simclr_forward.4} parent=1 // loop_body
      %s24 = ssub.s32 %s19, 1
      %s25 = ssub.s32 %s19, 2
      %s32 = sadd.s32 1, %s27
      %p33 = scmp.ge.s32.totalorder %s32, 2
      %s34 = scalar_select %p33, 0, %s32
      %s35 = sadd.s32 1, %s26
      %s36 = scalar_select %p33, %s35, %s26
      %p37 = scmp.ge.s32.totalorder %s36, 4
      %s38 = scalar_select %p37, 0, %s36
      %s39 = ssub.s32 %s26, %s38
      %s40 = ssub.s32 %s27, %s34
      %s41 = sor.u32 %s39, %s40
      %p42 = scmp.eq.s32.totalorder %s41, 0
      %s44 = sadd.s32 %s43, 1
      %s45 = scalar_select %p42, %s43, %s44
      %p48 = pneg %p42
      %p49 = scmp.eq.s32.totalorder %s19, 7
      %p50 = por %p48, %p49
      %p51 = scmp.ne.s32.totalorder %s43, %s46
      %p52 = scmp.eq.s32.totalorder %s19, 0
      %p53 = por %p51, %p52
      %p54 = scmp.ne.s32.totalorder %s43, %s46
      %p55 = scmp.eq.s32.totalorder %s24, 7
      %p56 = por %p54, %p55
      %p57 = scmp.ne.s32.totalorder %s46, %s47
      %p58 = scmp.eq.s32.totalorder %s24, 0
      %p59 = por %p57, %p58
      %p60 = scmp.ne.s32.totalorder %s46, %s47
      %p61 = scmp.eq.s32.totalorder %s25, 7
      %p62 = por %p60, %p61
      %p64 = scmp.ne.s32.totalorder %s47, %s63
      %p65 = scmp.eq.s32.totalorder %s25, 0
      %p66 = por %p64, %p65
      %s68 = sadd.s32 %s67, 1
      %p71 = scmp.eq.s32.totalorder %s19, 7
      %p72 = scmp.ne.s32.totalorder %s67, %s69
      %p73 = scmp.eq.s32.totalorder %s19, 0
      %p74 = por %p72, %p73
      %p75 = scmp.ne.s32.totalorder %s67, %s69
      %p76 = scmp.eq.s32.totalorder %s24, 7
      %p77 = por %p75, %p76
      %p78 = scmp.ne.s32.totalorder %s69, %s70
      %p79 = scmp.eq.s32.totalorder %s24, 0
      %p80 = por %p78, %p79
      %p81 = scmp.ne.s32.totalorder %s69, %s70
      %p82 = scmp.eq.s32.totalorder %s25, 7
      %p83 = por %p81, %p82
      %p85 = scmp.ne.s32.totalorder %s70, %s84
      %p86 = scmp.eq.s32.totalorder %s25, 0
      %p87 = por %p85, %p86
      %s88 = ssub.s32 %s26, %s38
      %p89 = scmp.eq.s32.totalorder %s88, 0
      %s91 = sadd.s32 %s90, 1
      %s92 = scalar_select %p89, %s90, %s91
      %p95 = pneg %p89
      %p96 = scmp.eq.s32.totalorder %s19, 7
      %p97 = por %p95, %p96
      %p98 = scmp.ne.s32.totalorder %s90, %s93
      %p99 = scmp.eq.s32.totalorder %s19, 0
      %p100 = por %p98, %p99
      %p101 = scmp.ne.s32.totalorder %s90, %s93
      %p102 = scmp.eq.s32.totalorder %s24, 7
      %p103 = por %p101, %p102
      %p104 = scmp.ne.s32.totalorder %s93, %s94
      %p105 = scmp.eq.s32.totalorder %s24, 0
      %p106 = por %p104, %p105
      %p107 = scmp.ne.s32.totalorder %s93, %s94
      %p108 = scmp.eq.s32.totalorder %s25, 7
      %p109 = por %p107, %p108
      %p111 = scmp.ne.s32.totalorder %s94, %s110
      %p112 = scmp.eq.s32.totalorder %s25, 0
      %p113 = por %p111, %p112
      %s115 = sadd.s32 %s114, 1
      %p118 = scmp.eq.s32.totalorder %s19, 7
      %p119 = scmp.ne.s32.totalorder %s114, %s116
      %p120 = scmp.eq.s32.totalorder %s19, 0
      %p121 = por %p119, %p120
      %p122 = scmp.ne.s32.totalorder %s114, %s116
      %p123 = scmp.eq.s32.totalorder %s24, 7
      %p124 = por %p122, %p123
      %p125 = scmp.ne.s32.totalorder %s116, %s117
      %p126 = scmp.eq.s32.totalorder %s24, 0
      %p127 = por %p125, %p126
      %p128 = scmp.ne.s32.totalorder %s116, %s117
      %p129 = scmp.eq.s32.totalorder %s25, 7
      %p130 = por %p128, %p129
      %p132 = scmp.ne.s32.totalorder %s117, %s131
      %p133 = scmp.eq.s32.totalorder %s25, 0
      %p134 = por %p132, %p133
      %s136 = sadd.s32 %s135, 1
      %p139 = scmp.eq.s32.totalorder %s19, 7
      %p140 = scmp.ne.s32.totalorder %s135, %s137
      %p141 = scmp.eq.s32.totalorder %s19, 0
      %p142 = por %p140, %p141
      %p143 = scmp.ne.s32.totalorder %s135, %s137
      %p144 = scmp.eq.s32.totalorder %s24, 7
      %p145 = por %p143, %p144
      %p146 = scmp.ne.s32.totalorder %s137, %s138
      %p147 = scmp.eq.s32.totalorder %s24, 0
      %p148 = por %p146, %p147
      %p149 = scmp.ne.s32.totalorder %s137, %s138
      %p150 = scmp.eq.s32.totalorder %s25, 7
      %p151 = por %p149, %p150
      %p153 = scmp.ne.s32.totalorder %s138, %s152
      %p154 = scmp.eq.s32.totalorder %s25, 0
      %p155 = por %p153, %p154
      %s157 = sadd.s32 %s156, 1
      %p160 = scmp.eq.s32.totalorder %s19, 7
      %p161 = scmp.ne.s32.totalorder %s156, %s158
      %p162 = scmp.eq.s32.totalorder %s19, 0
      %p163 = por %p161, %p162
      %p164 = scmp.ne.s32.totalorder %s156, %s158
      %p165 = scmp.eq.s32.totalorder %s24, 7
      %p166 = por %p164, %p165
      %p167 = scmp.ne.s32.totalorder %s158, %s159
      %p168 = scmp.eq.s32.totalorder %s24, 0
      %p169 = por %p167, %p168
      %p170 = scmp.ne.s32.totalorder %s158, %s159
      %p171 = scmp.eq.s32.totalorder %s25, 7
      %p172 = por %p170, %p171
      %p174 = scmp.ne.s32.totalorder %s159, %s173
      %p175 = scmp.eq.s32.totalorder %s25, 0
      %p176 = por %p174, %p175
      %s178 = sadd.s32 %s177, 1
      %p181 = scmp.eq.s32.totalorder %s19, 7
      %p182 = scmp.ne.s32.totalorder %s177, %s179
      %p183 = scmp.eq.s32.totalorder %s19, 0
      %p184 = por %p182, %p183
      %p185 = scmp.ne.s32.totalorder %s177, %s179
      %p186 = scmp.eq.s32.totalorder %s24, 7
      %p187 = por %p185, %p186
      %p188 = scmp.ne.s32.totalorder %s179, %s180
      %p189 = scmp.eq.s32.totalorder %s24, 0
      %p190 = por %p188, %p189
      %p191 = scmp.ne.s32.totalorder %s179, %s180
      %p192 = scmp.eq.s32.totalorder %s25, 7
      %p193 = por %p191, %p192
      %p195 = scmp.ne.s32.totalorder %s180, %s194
      %p196 = scmp.eq.s32.totalorder %s25, 0
      %p197 = por %p195, %p196
      %s198 = ssub.s32 %s26, %s38
      %p199 = scmp.eq.s32.totalorder %s198, 0
      %s201 = sadd.s32 %s200, 1
      %s202 = scalar_select %p199, %s200, %s201
      %p205 = pneg %p199
      %p206 = scmp.eq.s32.totalorder %s19, 7
      %p207 = por %p205, %p206
      %p208 = scmp.ne.s32.totalorder %s200, %s203
      %p209 = scmp.eq.s32.totalorder %s19, 0
      %p210 = por %p208, %p209
      %p211 = scmp.ne.s32.totalorder %s200, %s203
      %p212 = scmp.eq.s32.totalorder %s24, 7
      %p213 = por %p211, %p212
      %p214 = scmp.ne.s32.totalorder %s203, %s204
      %p215 = scmp.eq.s32.totalorder %s24, 0
      %p216 = por %p214, %p215
      %p217 = scmp.ne.s32.totalorder %s203, %s204
      %p218 = scmp.eq.s32.totalorder %s25, 7
      %p219 = por %p217, %p218
      %p221 = scmp.ne.s32.totalorder %s204, %s220
      %p222 = scmp.eq.s32.totalorder %s25, 0
      %p223 = por %p221, %p222
      %s224 = ssub.s32 %s26, %s38
      %p225 = scmp.eq.s32.totalorder %s224, 0
      %s227 = sadd.s32 %s226, 1
      %s228 = scalar_select %p225, %s226, %s227
      %p231 = pneg %p225
      %p232 = scmp.eq.s32.totalorder %s19, 7
      %p233 = por %p231, %p232
      %p234 = scmp.ne.s32.totalorder %s226, %s229
      %p235 = scmp.eq.s32.totalorder %s19, 0
      %p236 = por %p234, %p235
      %p237 = scmp.ne.s32.totalorder %s226, %s229
      %p238 = scmp.eq.s32.totalorder %s24, 7
      %p239 = por %p237, %p238
      %p240 = scmp.ne.s32.totalorder %s229, %s230
      %p241 = scmp.eq.s32.totalorder %s24, 0
      %p242 = por %p240, %p241
      %p243 = scmp.ne.s32.totalorder %s229, %s230
      %p244 = scmp.eq.s32.totalorder %s25, 7
      %p245 = por %p243, %p244
      %p247 = scmp.ne.s32.totalorder %s230, %s246
      %p248 = scmp.eq.s32.totalorder %s25, 0
      %p249 = por %p247, %p248
      %s250 = ssub.s32 %s26, %s38
      %p251 = scmp.eq.s32.totalorder %s250, 0
      %s253 = sadd.s32 %s252, 1
      %s254 = scalar_select %p251, %s252, %s253
      %p257 = pneg %p251
      %p258 = scmp.eq.s32.totalorder %s19, 7
      %p259 = por %p257, %p258
      %p260 = scmp.ne.s32.totalorder %s252, %s255
      %p261 = scmp.eq.s32.totalorder %s19, 0
      %p262 = por %p260, %p261
      %p263 = scmp.ne.s32.totalorder %s252, %s255
      %p264 = scmp.eq.s32.totalorder %s24, 7
      %p265 = por %p263, %p264
      %p266 = scmp.ne.s32.totalorder %s255, %s256
      %p267 = scmp.eq.s32.totalorder %s24, 0
      %p268 = por %p266, %p267
      %p269 = scmp.ne.s32.totalorder %s255, %s256
      %p270 = scmp.eq.s32.totalorder %s25, 7
      %p271 = por %p269, %p270
      %p273 = scmp.ne.s32.totalorder %s256, %s272
      %p274 = scmp.eq.s32.totalorder %s25, 0
      %p275 = por %p273, %p274
      %p276 = scmp.le.s32.totalorder 1, %s19
      %p277 = scmp.lt.s32.totalorder %s19, 9
      %p278 = pnand %p276, %p277
      %p279 = pneg %p278
      // Predicated region
      $region9: #{simclr_forward.4} parent=5 // pred_check
        _
      $region10: #{simclr_forward.4} parent=5 // pred_check_branch
        %281 = sbr.rel (%p278) target = $region12
      $region11: #{simclr_forward.4} parent=5 // pred_region
        %s282 = ssub.s32 %s19, 1
        // Predicated region
        $region13: #{simclr_forward.4} parent=11 // pred_check
          %p283 = pneg %p80
        $region14: #{simclr_forward.4} parent=11 // pred_check_branch
          %285 = sbr.rel (%p283) target = $region16
        $region15: #{simclr_forward.4} parent=11 // pred_region
          _
        $region16: #{simclr_forward.4} parent=11 // pred_fallthru
          _
        // Predicated region
        $region17: #{simclr_forward.4} parent=11 // pred_check
          %p286 = pneg %p127
        $region18: #{simclr_forward.4} parent=11 // pred_check_branch
          %288 = sbr.rel (%p286) target = $region20
        $region19: #{simclr_forward.4} parent=11 // pred_region
          _
        $region20: #{simclr_forward.4} parent=11 // pred_fallthru
          _
        // Predicated region
        $region21: #{simclr_forward.4} parent=11 // pred_check
          %p289 = pneg %p148
        $region22: #{simclr_forward.4} parent=11 // pred_check_branch
          %291 = sbr.rel (%p289) target = $region24
        $region23: #{simclr_forward.4} parent=11 // pred_region
          _
        $region24: #{simclr_forward.4} parent=11 // pred_fallthru
          _
        // Predicated region
        $region25: #{simclr_forward.4} parent=11 // pred_check
          %p292 = pneg %p169
        $region26: #{simclr_forward.4} parent=11 // pred_check_branch
          %294 = sbr.rel (%p292) target = $region28
        $region27: #{simclr_forward.4} parent=11 // pred_region
          _
        $region28: #{simclr_forward.4} parent=11 // pred_fallthru
          _
        // Predicated region
        $region29: #{simclr_forward.4} parent=11 // pred_check
          %p295 = pneg %p190
        $region30: #{simclr_forward.4} parent=11 // pred_check_branch
          %297 = sbr.rel (%p295) target = $region32
        $region31: #{simclr_forward.4} parent=11 // pred_region
          _
        $region32: #{simclr_forward.4} parent=11 // pred_fallthru
          _
      $region12: #{simclr_forward.4} parent=5 // pred_fallthru
        _
      %p298 = scmp.lt.s32.totalorder %s19, 8
      // Predicated region
      $region33: #{simclr_forward.4} parent=5 // pred_check
        %p299 = pneg %p298
      $region34: #{simclr_forward.4} parent=5 // pred_check_branch
        %301 = sbr.rel (%p299) target = $region36
      $region35: #{simclr_forward.4} parent=5 // pred_region
        // Predicated region
        $region37: #{simclr_forward.4} parent=35 // pred_check
          %p302 = pneg %p53
        $region38: #{simclr_forward.4} parent=35 // pred_check_branch
          %304 = sbr.rel (%p302) target = $region40
        $region39: #{simclr_forward.4} parent=35 // pred_region
          %s305 = sand.u32 %s43, 1
          %s306 = sand.u32 %s43, 1
          %s307 = smul.addr %s306, 512
          %s308 = scalar_lea.vmem [#allocation3], %s307
          %s309 = smul.u32 32, %s26
          %s310 = smul.u32 4, %s27
          %s311 = smul.addr %s309, 8
          %s312 = sadd.s32 %s310, %s311
          %s313 = smul.addr %s312, 4
          %s314 = scalar_lea.vmem %s0, %s313
          // Predicated region
          $region41: #{simclr_forward.4} parent=39 // pred_check
            _
          $region42: #{simclr_forward.4} parent=39 // pred_check_branch
            %316 = sbr.rel (0) target = $region44
          $region43: #{simclr_forward.4} parent=39 // pred_region
            // Predicated region
            $region45: #{simclr_forward.4} parent=43 // pred_check
              _
            $region46: #{simclr_forward.4} parent=43 // pred_check_branch
              %318 = sbr.rel (0) target = $region48
            $region47: #{simclr_forward.4} parent=43 // pred_region
              loop: start=0, step=1, limit=1
              $region49: #{simclr_forward.4} parent=47 // loop_pre_header
                _
              $region50: #{simclr_forward.4} parent=47 // loop_header
                %s320 = sphi 0, %s324
                %p321 = scmp.ge.s32.totalorder %s320, 1
                %s325 = sphi %s314, %s314
                %s326 = sphi %s308, %s308
              $region51: #{simclr_forward.4} parent=47 // loop_header_branch
                %323 = sbr.rel (%p321) target = $region55
              $region52: #{simclr_forward.4} parent=47 // loop_body
                %v327 = vld [vmem:[%s325] sm:$0xff]
                %328 = vst [vmem:[%s326] sm:$0xff] %v327
                %v329 = vld [vmem:[%s325 + $0x8] sm:$0xff]
                %330 = vst [vmem:[%s326 + $0x8] sm:$0xff] %v329
                %v331 = vld [vmem:[%s325 + $0x20] sm:$0xff]
                %332 = vst [vmem:[%s326 + $0x10] sm:$0xff] %v331
                %v333 = vld [vmem:[%s325 + $0x28] sm:$0xff]
                %334 = vst [vmem:[%s326 + $0x18] sm:$0xff] %v333
                %v335 = vld [vmem:[%s325 + $0x40] sm:$0xff]
                %336 = vst [vmem:[%s326 + $0x20] sm:$0xff] %v335
                %v337 = vld [vmem:[%s325 + $0x48] sm:$0xff]
                %338 = vst [vmem:[%s326 + $0x28] sm:$0xff] %v337
                %v339 = vld [vmem:[%s325 + $0x60] sm:$0xff]
                %340 = vst [vmem:[%s326 + $0x30] sm:$0xff] %v339
                %v341 = vld [vmem:[%s325 + $0x68] sm:$0xff]
                %342 = vst [vmem:[%s326 + $0x38] sm:$0xff] %v341
                %v343 = vld [vmem:[%s325 + $0x80] sm:$0xff]
                %344 = vst [vmem:[%s326 + $0x40] sm:$0xff] %v343
                %v345 = vld [vmem:[%s325 + $0x88] sm:$0xff]
                %346 = vst [vmem:[%s326 + $0x48] sm:$0xff] %v345
                %v347 = vld [vmem:[%s325 + $0xa0] sm:$0xff]
                %348 = vst [vmem:[%s326 + $0x50] sm:$0xff] %v347
                %v349 = vld [vmem:[%s325 + $0xa8] sm:$0xff]
                %350 = vst [vmem:[%s326 + $0x58] sm:$0xff] %v349
                %v351 = vld [vmem:[%s325 + $0xc0] sm:$0xff]
                %352 = vst [vmem:[%s326 + $0x60] sm:$0xff] %v351
                %v353 = vld [vmem:[%s325 + $0xc8] sm:$0xff]
                %354 = vst [vmem:[%s326 + $0x68] sm:$0xff] %v353
                %v355 = vld [vmem:[%s325 + $0xe0] sm:$0xff]
                %356 = vst [vmem:[%s326 + $0x70] sm:$0xff] %v355
                %v357 = vld [vmem:[%s325 + $0xe8] sm:$0xff]
                %358 = vst [vmem:[%s326 + $0x78] sm:$0xff] %v357
                %v359 = vld [vmem:[%s325 + $0x100] sm:$0xff]
                %360 = vst [vmem:[%s326 + $0x80] sm:$0xff] %v359
                %v361 = vld [vmem:[%s325 + $0x108] sm:$0xff]
                %362 = vst [vmem:[%s326 + $0x88] sm:$0xff] %v361
                %v363 = vld [vmem:[%s325 + $0x120] sm:$0xff]
                %364 = vst [vmem:[%s326 + $0x90] sm:$0xff] %v363
                %v365 = vld [vmem:[%s325 + $0x128] sm:$0xff]
                %366 = vst [vmem:[%s326 + $0x98] sm:$0xff] %v365
                %v367 = vld [vmem:[%s325 + $0x140] sm:$0xff]
                %368 = vst [vmem:[%s326 + $0xa0] sm:$0xff] %v367
                %v369 = vld [vmem:[%s325 + $0x148] sm:$0xff]
                %370 = vst [vmem:[%s326 + $0xa8] sm:$0xff] %v369
                %v371 = vld [vmem:[%s325 + $0x160] sm:$0xff]
                %372 = vst [vmem:[%s326 + $0xb0] sm:$0xff] %v371
                %v373 = vld [vmem:[%s325 + $0x168] sm:$0xff]
                %374 = vst [vmem:[%s326 + $0xb8] sm:$0xff] %v373
                %v375 = vld [vmem:[%s325 + $0x180] sm:$0xff]
                %376 = vst [vmem:[%s326 + $0xc0] sm:$0xff] %v375
                %v377 = vld [vmem:[%s325 + $0x188] sm:$0xff]
                %378 = vst [vmem:[%s326 + $0xc8] sm:$0xff] %v377
                %v379 = vld [vmem:[%s325 + $0x1a0] sm:$0xff]
                %380 = vst [vmem:[%s326 + $0xd0] sm:$0xff] %v379
                %v381 = vld [vmem:[%s325 + $0x1a8] sm:$0xff]
                %382 = vst [vmem:[%s326 + $0xd8] sm:$0xff] %v381
                %v383 = vld [vmem:[%s325 + $0x1c0] sm:$0xff]
                %384 = vst [vmem:[%s326 + $0xe0] sm:$0xff] %v383
                %v385 = vld [vmem:[%s325 + $0x1c8] sm:$0xff]
                %386 = vst [vmem:[%s326 + $0xe8] sm:$0xff] %v385
                %v387 = vld [vmem:[%s325 + $0x1e0] sm:$0xff]
                %388 = vst [vmem:[%s326 + $0xf0] sm:$0xff] %v387
                %v389 = vld [vmem:[%s325 + $0x1e8] sm:$0xff]
                %390 = vst [vmem:[%s326 + $0xf8] sm:$0xff] %v389
                %v391 = vld [vmem:[%s325 + $0x200] sm:$0xff]
                %392 = vst [vmem:[%s326 + $0x100] sm:$0xff] %v391
                %v393 = vld [vmem:[%s325 + $0x208] sm:$0xff]
                %394 = vst [vmem:[%s326 + $0x108] sm:$0xff] %v393
                %v395 = vld [vmem:[%s325 + $0x220] sm:$0xff]
                %396 = vst [vmem:[%s326 + $0x110] sm:$0xff] %v395
                %v397 = vld [vmem:[%s325 + $0x228] sm:$0xff]
                %398 = vst [vmem:[%s326 + $0x118] sm:$0xff] %v397
                %v399 = vld [vmem:[%s325 + $0x240] sm:$0xff]
                %400 = vst [vmem:[%s326 + $0x120] sm:$0xff] %v399
                %v401 = vld [vmem:[%s325 + $0x248] sm:$0xff]
                %402 = vst [vmem:[%s326 + $0x128] sm:$0xff] %v401
                %v403 = vld [vmem:[%s325 + $0x260] sm:$0xff]
                %404 = vst [vmem:[%s326 + $0x130] sm:$0xff] %v403
                %v405 = vld [vmem:[%s325 + $0x268] sm:$0xff]
                %406 = vst [vmem:[%s326 + $0x138] sm:$0xff] %v405
                %v407 = vld [vmem:[%s325 + $0x280] sm:$0xff]
                %408 = vst [vmem:[%s326 + $0x140] sm:$0xff] %v407
                %v409 = vld [vmem:[%s325 + $0x288] sm:$0xff]
                %410 = vst [vmem:[%s326 + $0x148] sm:$0xff] %v409
                %v411 = vld [vmem:[%s325 + $0x2a0] sm:$0xff]
                %412 = vst [vmem:[%s326 + $0x150] sm:$0xff] %v411
                %v413 = vld [vmem:[%s325 + $0x2a8] sm:$0xff]
                %414 = vst [vmem:[%s326 + $0x158] sm:$0xff] %v413
                %v415 = vld [vmem:[%s325 + $0x2c0] sm:$0xff]
                %416 = vst [vmem:[%s326 + $0x160] sm:$0xff] %v415
                %v417 = vld [vmem:[%s325 + $0x2c8] sm:$0xff]
                %418 = vst [vmem:[%s326 + $0x168] sm:$0xff] %v417
                %v419 = vld [vmem:[%s325 + $0x2e0] sm:$0xff]
                %420 = vst [vmem:[%s326 + $0x170] sm:$0xff] %v419
                %v421 = vld [vmem:[%s325 + $0x2e8] sm:$0xff]
                %422 = vst [vmem:[%s326 + $0x178] sm:$0xff] %v421
                %v423 = vld [vmem:[%s325 + $0x300] sm:$0xff]
                %424 = vst [vmem:[%s326 + $0x180] sm:$0xff] %v423
                %v425 = vld [vmem:[%s325 + $0x308] sm:$0xff]
                %426 = vst [vmem:[%s326 + $0x188] sm:$0xff] %v425
                %v427 = vld [vmem:[%s325 + $0x320] sm:$0xff]
                %428 = vst [vmem:[%s326 + $0x190] sm:$0xff] %v427
                %v429 = vld [vmem:[%s325 + $0x328] sm:$0xff]
                %430 = vst [vmem:[%s326 + $0x198] sm:$0xff] %v429
                %v431 = vld [vmem:[%s325 + $0x340] sm:$0xff]
                %432 = vst [vmem:[%s326 + $0x1a0] sm:$0xff] %v431
                %v433 = vld [vmem:[%s325 + $0x348] sm:$0xff]
                %434 = vst [vmem:[%s326 + $0x1a8] sm:$0xff] %v433
                %v435 = vld [vmem:[%s325 + $0x360] sm:$0xff]
                %436 = vst [vmem:[%s326 + $0x1b0] sm:$0xff] %v435
                %v437 = vld [vmem:[%s325 + $0x368] sm:$0xff]
                %438 = vst [vmem:[%s326 + $0x1b8] sm:$0xff] %v437
                %v439 = vld [vmem:[%s325 + $0x380] sm:$0xff]
                %440 = vst [vmem:[%s326 + $0x1c0] sm:$0xff] %v439
                %v441 = vld [vmem:[%s325 + $0x388] sm:$0xff]
                %442 = vst [vmem:[%s326 + $0x1c8] sm:$0xff] %v441
                %v443 = vld [vmem:[%s325 + $0x3a0] sm:$0xff]
                %444 = vst [vmem:[%s326 + $0x1d0] sm:$0xff] %v443
                %v445 = vld [vmem:[%s325 + $0x3a8] sm:$0xff]
                %446 = vst [vmem:[%s326 + $0x1d8] sm:$0xff] %v445
                %v447 = vld [vmem:[%s325 + $0x3c0] sm:$0xff]
                %448 = vst [vmem:[%s326 + $0x1e0] sm:$0xff] %v447
                %v449 = vld [vmem:[%s325 + $0x3c8] sm:$0xff]
                %450 = vst [vmem:[%s326 + $0x1e8] sm:$0xff] %v449
                %v451 = vld [vmem:[%s325 + $0x3e0] sm:$0xff]
                %452 = vst [vmem:[%s326 + $0x1f0] sm:$0xff] %v451
                %v453 = vld [vmem:[%s325 + $0x3e8] sm:$0xff]
                %454 = vst [vmem:[%s326 + $0x1f8] sm:$0xff] %v453
              $region53: #{simclr_forward.4} parent=47 // loop_footer
                %s324 = sadd.s32 1, %s320
              $region54: #{simclr_forward.4} parent=47 // loop_footer_branch
                %319 = sbr.rel target = $region50
              $region55: #{simclr_forward.4} parent=47 // loop_exit
                _
            $region48: #{simclr_forward.4} parent=43 // pred_fallthru
              _
            // Predicated region
            $region56: #{simclr_forward.4} parent=43 // pred_check
              _
            $region57: #{simclr_forward.4} parent=43 // pred_check_branch
              %456 = sbr.rel target = $region59
            $region58: #{simclr_forward.4} parent=43 // pred_region
              _
            $region59: #{simclr_forward.4} parent=43 // pred_fallthru
              _
          $region44: #{simclr_forward.4} parent=39 // pred_fallthru
            _
          %457 = vnop
        $region40: #{simclr_forward.4} parent=35 // pred_fallthru
          _
        // Predicated region
        $region60: #{simclr_forward.4} parent=35 // pred_check
          %p458 = pneg %p100
        $region61: #{simclr_forward.4} parent=35 // pred_check_branch
          %460 = sbr.rel (%p458) target = $region63
        $region62: #{simclr_forward.4} parent=35 // pred_region
          %s461 = smul.u32 2, %s26
          %p462 = scmp.lt.s32.totalorder %s461, 7
          %s463 = scalar_select %p462, %s461, 7
          %s464 = smul.addr %s463, 4
          %s465 = scalar_lea.vmem %s2, %s464
          %s466 = smul.u32 2, %s26
        $region63: #{simclr_forward.4} parent=35 // pred_fallthru
          _
      $region36: #{simclr_forward.4} parent=5 // pred_fallthru
        _
      %p467 = scmp.le.s32.totalorder 1, %s19
      %p468 = scmp.lt.s32.totalorder %s19, 9
      %p469 = pnand %p467, %p468
      %p470 = pneg %p469
      // Predicated region
      $region64: #{simclr_forward.4} parent=5 // pred_check
        _
      $region65: #{simclr_forward.4} parent=5 // pred_check_branch
        %472 = sbr.rel (%p469) target = $region67
      $region66: #{simclr_forward.4} parent=5 // pred_region
        %s473 = ssub.s32 %s19, 1
        %s474 = sand.u32 %s46, 1
        %s475 = sand.u32 %s46, 1
        %s476 = smul.addr %s475, 512
        %s477 = scalar_lea.vmem [#allocation3], %s476
        // Predicated region
        $region68: #{simclr_forward.4} parent=66 // pred_check
          %p478 = pneg %p59
        $region69: #{simclr_forward.4} parent=66 // pred_check_branch
          %480 = sbr.rel (%p478) target = $region71
        $region70: #{simclr_forward.4} parent=66 // pred_region
          _
        $region71: #{simclr_forward.4} parent=66 // pred_fallthru
          _
        %s481 = sand.u32 %s46, 1
        %s482 = sand.u32 %s46, 1
        %s483 = smul.addr %s482, 512
        %s484 = scalar_lea.vmem [#allocation3], %s483
        %p485 = pneg %p59
        %p486 = pneg %p56
        %p487 = pneg %p80
        %p488 = pneg %p77
        %s489 = smul.u32 2, %s28
        %p490 = scmp.lt.s32.totalorder %s489, 7
        %s491 = scalar_select %p490, %s489, 7
        %s492 = smul.addr %s491, 4
        %s493 = scalar_lea.vmem %s2, %s492
        %p494 = pneg %p106
        %p495 = pneg %p103
        %p496 = pneg %p127
        %p497 = pneg %p124
        %p498 = pneg %p148
        %p499 = pneg %p145
        %p500 = pneg %p169
        %p501 = pneg %p166
        %p502 = pneg %p190
        %p503 = pneg %p187
        %p504 = pneg %p216
        %p505 = pneg %p213
        %s506 = sand.u32 %s203, 1
        %s507 = scalar_lea.sflag [#allocation5], %s506
        %s508 = sand.u32 %s203, 1
        %s509 = smul.addr %s508, 256
        %s510 = scalar_lea.vmem [#allocation4], %s509
        %p511 = pneg %p242
        %p512 = pneg %p239
        %p513 = scmp.lt.s32.totalorder %s28, 3
        %s514 = scalar_select %p513, %s28, 3
        %s515 = smul.addr %s514, 2
        %s516 = scalar_lea.vmem %s8, %s515
        %p517 = pneg %p268
        %p518 = pneg %p265
        %p519 = scmp.lt.s32.totalorder %s28, 3
        %s520 = scalar_select %p519, %s28, 3
        %s521 = smul.addr %s520, 8
        %s522 = scalar_lea.vmem %s9, %s521
        %s523 = smul.u32 32, %s28
        %s524 = smul.u32 4, %s29
        %s525 = smul.u32 2, %s28
        %p526 = scmp.lt.s32.totalorder %s525, 7
        %s527 = scalar_select %p526, %s525, 7
        %s528 = smul.addr %s527, 4
        %s529 = scalar_lea.vmem %s2, %s528
        %s530 = smul.u32 2, %s28
        %s531 = smul.u32 32, %s28
        %p532 = scmp.lt.s32.totalorder %s28, 3
        %s533 = scalar_select %p532, %s28, 3
        %s534 = smul.addr %s533, 2
        %s535 = scalar_lea.vmem %s8, %s534
        %p536 = scmp.lt.s32.totalorder %s28, 3
        %s537 = scalar_select %p536, %s28, 3
        %s538 = smul.addr %s537, 8
        %s539 = scalar_lea.vmem %s9, %s538
        %p540 = scmp.eq.s32.totalorder %s29, 0
        // Predicated region
        $region72: #{simclr_forward.4} parent=66 // pred_check
          %p541 = pneg %p540
        $region73: #{simclr_forward.4} parent=66 // pred_check_branch
          %543 = sbr.rel (%p541) target = $region75
        $region74: #{simclr_forward.4} parent=66 // pred_region
          %544 = vst [vmem:[#allocation2] sm:$0xff] 0.0
          %545 = vst [vmem:[#allocation2 + $0x8] sm:$0xff] 0.0
          %546 = vst [vmem:[#allocation2 + $0x10] sm:$0xff] 0.0
          %547 = vst [vmem:[#allocation2 + $0x18] sm:$0xff] 0.0
          %548 = vst [vmem:[#allocation2 + $0x20] sm:$0xff] 0.0
          %549 = vst [vmem:[#allocation2 + $0x28] sm:$0xff] 0.0
          %550 = vst [vmem:[#allocation2 + $0x30] sm:$0xff] 0.0
          %551 = vst [vmem:[#allocation2 + $0x38] sm:$0xff] 0.0
          %552 = vst [vmem:[#allocation2 + $0x40] sm:$0xff] 0.0
          %553 = vst [vmem:[#allocation2 + $0x48] sm:$0xff] 0.0
          %554 = vst [vmem:[#allocation2 + $0x50] sm:$0xff] 0.0
          %555 = vst [vmem:[#allocation2 + $0x58] sm:$0xff] 0.0
          %556 = vst [vmem:[#allocation2 + $0x60] sm:$0xff] 0.0
          %557 = vst [vmem:[#allocation2 + $0x68] sm:$0xff] 0.0
          %558 = vst [vmem:[#allocation2 + $0x70] sm:$0xff] 0.0
          %559 = vst [vmem:[#allocation2 + $0x78] sm:$0xff] 0.0
          %560 = vst [vmem:[#allocation2 + $0x80] sm:$0xff] 0.0
          %561 = vst [vmem:[#allocation2 + $0x88] sm:$0xff] 0.0
          %562 = vst [vmem:[#allocation2 + $0x90] sm:$0xff] 0.0
          %563 = vst [vmem:[#allocation2 + $0x98] sm:$0xff] 0.0
          %564 = vst [vmem:[#allocation2 + $0xa0] sm:$0xff] 0.0
          %565 = vst [vmem:[#allocation2 + $0xa8] sm:$0xff] 0.0
          %566 = vst [vmem:[#allocation2 + $0xb0] sm:$0xff] 0.0
          %567 = vst [vmem:[#allocation2 + $0xb8] sm:$0xff] 0.0
          %568 = vst [vmem:[#allocation2 + $0xc0] sm:$0xff] 0.0
          %569 = vst [vmem:[#allocation2 + $0xc8] sm:$0xff] 0.0
          %570 = vst [vmem:[#allocation2 + $0xd0] sm:$0xff] 0.0
          %571 = vst [vmem:[#allocation2 + $0xd8] sm:$0xff] 0.0
          %572 = vst [vmem:[#allocation2 + $0xe0] sm:$0xff] 0.0
          %573 = vst [vmem:[#allocation2 + $0xe8] sm:$0xff] 0.0
          %574 = vst [vmem:[#allocation2 + $0xf0] sm:$0xff] 0.0
          %575 = vst [vmem:[#allocation2 + $0xf8] sm:$0xff] 0.0
        $region75: #{simclr_forward.4} parent=66 // pred_fallthru
          _
        %s576 = smul.u32 %s29, 512
        %s577 = sshra.s32 %s576, 3
        %s578 = sand.u32 %s576, 7
        %s579 = smul.addr %s577, 4
        %s580 = scalar_lea.vmem %s1, %s579
        %v581 = vld [vmem:[%s580] sm:$0xf]
        %v582 = vld [vmem:[%s580 + $0x4] sm:$0xf]
        %v583 = vld [vmem:[%s580 + $0x8] sm:$0xf]
        %v584 = vld [vmem:[%s580 + $0xc] sm:$0xf]
        %v585 = vld [vmem:[%s580 + $0x10] sm:$0xf]
        %v586 = vld [vmem:[%s580 + $0x14] sm:$0xf]
        %v587 = vld [vmem:[%s580 + $0x18] sm:$0xf]
        %v588 = vld [vmem:[%s580 + $0x1c] sm:$0xf]
        %v589 = vld [vmem:[%s580 + $0x20] sm:$0xf]
        %v590 = vld [vmem:[%s580 + $0x24] sm:$0xf]
        %v591 = vld [vmem:[%s580 + $0x28] sm:$0xf]
        %v592 = vld [vmem:[%s580 + $0x2c] sm:$0xf]
        %v593 = vld [vmem:[%s580 + $0x30] sm:$0xf]
        %v594 = vld [vmem:[%s580 + $0x34] sm:$0xf]
        %v595 = vld [vmem:[%s580 + $0x38] sm:$0xf]
        %v596 = vld [vmem:[%s580 + $0x3c] sm:$0xf]
        %v597 = vld [vmem:[%s580 + $0x40] sm:$0xf]
        %v598 = vld [vmem:[%s580 + $0x44] sm:$0xf]
        %v599 = vld [vmem:[%s580 + $0x48] sm:$0xf]
        %v600 = vld [vmem:[%s580 + $0x4c] sm:$0xf]
        %v601 = vld [vmem:[%s580 + $0x50] sm:$0xf]
        %v602 = vld [vmem:[%s580 + $0x54] sm:$0xf]
        %v603 = vld [vmem:[%s580 + $0x58] sm:$0xf]
        %v604 = vld [vmem:[%s580 + $0x5c] sm:$0xf]
        %v605 = vld [vmem:[%s580 + $0x60] sm:$0xf]
        %v606 = vld [vmem:[%s580 + $0x64] sm:$0xf]
        %v607 = vld [vmem:[%s580 + $0x68] sm:$0xf]
        %v608 = vld [vmem:[%s580 + $0x6c] sm:$0xf]
        %v609 = vld [vmem:[%s580 + $0x70] sm:$0xf]
        %v610 = vld [vmem:[%s580 + $0x74] sm:$0xf]
        %v611 = vld [vmem:[%s580 + $0x78] sm:$0xf]
        %v612 = vld [vmem:[%s580 + $0x7c] sm:$0xf]
        %v613 = vld [vmem:[%s580 + $0x80] sm:$0xf]
        %v614 = vld [vmem:[%s580 + $0x84] sm:$0xf]
        %v615 = vld [vmem:[%s580 + $0x88] sm:$0xf]
        %v616 = vld [vmem:[%s580 + $0x8c] sm:$0xf]
        %v617 = vld [vmem:[%s580 + $0x90] sm:$0xf]
        %v618 = vld [vmem:[%s580 + $0x94] sm:$0xf]
        %v619 = vld [vmem:[%s580 + $0x98] sm:$0xf]
        %v620 = vld [vmem:[%s580 + $0x9c] sm:$0xf]
        %v621 = vld [vmem:[%s580 + $0xa0] sm:$0xf]
        %v622 = vld [vmem:[%s580 + $0xa4] sm:$0xf]
        %v623 = vld [vmem:[%s580 + $0xa8] sm:$0xf]
        %v624 = vld [vmem:[%s580 + $0xac] sm:$0xf]
        %v625 = vld [vmem:[%s580 + $0xb0] sm:$0xf]
        %v626 = vld [vmem:[%s580 + $0xb4] sm:$0xf]
        %v627 = vld [vmem:[%s580 + $0xb8] sm:$0xf]
        %v628 = vld [vmem:[%s580 + $0xbc] sm:$0xf]
        %v629 = vld [vmem:[%s580 + $0xc0] sm:$0xf]
        %v630 = vld [vmem:[%s580 + $0xc4] sm:$0xf]
        %v631 = vld [vmem:[%s580 + $0xc8] sm:$0xf]
        %v632 = vld [vmem:[%s580 + $0xcc] sm:$0xf]
        %v633 = vld [vmem:[%s580 + $0xd0] sm:$0xf]
        %v634 = vld [vmem:[%s580 + $0xd4] sm:$0xf]
        %v635 = vld [vmem:[%s580 + $0xd8] sm:$0xf]
        %v636 = vld [vmem:[%s580 + $0xdc] sm:$0xf]
        %v637 = vld [vmem:[%s580 + $0xe0] sm:$0xf]
        %v638 = vld [vmem:[%s580 + $0xe4] sm:$0xf]
        %v639 = vld [vmem:[%s580 + $0xe8] sm:$0xf]
        %v640 = vld [vmem:[%s580 + $0xec] sm:$0xf]
        %v641 = vld [vmem:[%s580 + $0xf0] sm:$0xf]
        %v642 = vld [vmem:[%s580 + $0xf4] sm:$0xf]
        %v643 = vld [vmem:[%s580 + $0xf8] sm:$0xf]
        %v644 = vld [vmem:[%s580 + $0xfc] sm:$0xf]
        %v645 = vld [vmem:[#allocation2] sm:$0xff]
        %v646 = vld [vmem:[#allocation2 + $0x8] sm:$0xff]
        %v647 = vld [vmem:[#allocation2 + $0x10] sm:$0xff]
        %v648 = vld [vmem:[#allocation2 + $0x18] sm:$0xff]
        %v649 = vld [vmem:[#allocation2 + $0x20] sm:$0xff]
        %v650 = vld [vmem:[#allocation2 + $0x28] sm:$0xff]
        %v651 = vld [vmem:[#allocation2 + $0x30] sm:$0xff]
        %v652 = vld [vmem:[#allocation2 + $0x38] sm:$0xff]
        %v653 = vld [vmem:[#allocation2 + $0x40] sm:$0xff]
        %v654 = vld [vmem:[#allocation2 + $0x48] sm:$0xff]
        %v655 = vld [vmem:[#allocation2 + $0x50] sm:$0xff]
        %v656 = vld [vmem:[#allocation2 + $0x58] sm:$0xff]
        %v657 = vld [vmem:[#allocation2 + $0x60] sm:$0xff]
        %v658 = vld [vmem:[#allocation2 + $0x68] sm:$0xff]
        %v659 = vld [vmem:[#allocation2 + $0x70] sm:$0xff]
        %v660 = vld [vmem:[#allocation2 + $0x78] sm:$0xff]
        %v661 = vld [vmem:[#allocation2 + $0x80] sm:$0xff]
        %v662 = vld [vmem:[#allocation2 + $0x88] sm:$0xff]
        %v663 = vld [vmem:[#allocation2 + $0x90] sm:$0xff]
        %v664 = vld [vmem:[#allocation2 + $0x98] sm:$0xff]
        %v665 = vld [vmem:[#allocation2 + $0xa0] sm:$0xff]
        %v666 = vld [vmem:[#allocation2 + $0xa8] sm:$0xff]
        %v667 = vld [vmem:[#allocation2 + $0xb0] sm:$0xff]
        %v668 = vld [vmem:[#allocation2 + $0xb8] sm:$0xff]
        %v669 = vld [vmem:[#allocation2 + $0xc0] sm:$0xff]
        %v670 = vld [vmem:[#allocation2 + $0xc8] sm:$0xff]
        %v671 = vld [vmem:[#allocation2 + $0xd0] sm:$0xff]
        %v672 = vld [vmem:[#allocation2 + $0xd8] sm:$0xff]
        %v673 = vld [vmem:[#allocation2 + $0xe0] sm:$0xff]
        %v674 = vld [vmem:[#allocation2 + $0xe8] sm:$0xff]
        %v675 = vld [vmem:[#allocation2 + $0xf0] sm:$0xff]
        %v676 = vld [vmem:[#allocation2 + $0xf8] sm:$0xff]
        %v677 = vld [vmem:[%s477] sm:$0xff]
        %v678 = vld [vmem:[%s477 + $0x8] sm:$0xff]
        %v679 = vld [vmem:[%s477 + $0x10] sm:$0xff]
        %v680 = vld [vmem:[%s477 + $0x18] sm:$0xff]
        %v681 = vld [vmem:[%s477 + $0x20] sm:$0xff]
        %v682 = vld [vmem:[%s477 + $0x28] sm:$0xff]
        %v683 = vld [vmem:[%s477 + $0x30] sm:$0xff]
        %v684 = vld [vmem:[%s477 + $0x38] sm:$0xff]
        %v685 = vld [vmem:[%s477 + $0x40] sm:$0xff]
        %v686 = vld [vmem:[%s477 + $0x48] sm:$0xff]
        %v687 = vld [vmem:[%s477 + $0x50] sm:$0xff]
        %v688 = vld [vmem:[%s477 + $0x58] sm:$0xff]
        %v689 = vld [vmem:[%s477 + $0x60] sm:$0xff]
        %v690 = vld [vmem:[%s477 + $0x68] sm:$0xff]
        %v691 = vld [vmem:[%s477 + $0x70] sm:$0xff]
        %v692 = vld [vmem:[%s477 + $0x78] sm:$0xff]
        %v693 = vld [vmem:[%s477 + $0x80] sm:$0xff]
        %v694 = vld [vmem:[%s477 + $0x88] sm:$0xff]
        %v695 = vld [vmem:[%s477 + $0x90] sm:$0xff]
        %v696 = vld [vmem:[%s477 + $0x98] sm:$0xff]
        %v697 = vld [vmem:[%s477 + $0xa0] sm:$0xff]
        %v698 = vld [vmem:[%s477 + $0xa8] sm:$0xff]
        %v699 = vld [vmem:[%s477 + $0xb0] sm:$0xff]
        %v700 = vld [vmem:[%s477 + $0xb8] sm:$0xff]
        %v701 = vld [vmem:[%s477 + $0xc0] sm:$0xff]
        %v702 = vld [vmem:[%s477 + $0xc8] sm:$0xff]
        %v703 = vld [vmem:[%s477 + $0xd0] sm:$0xff]
        %v704 = vld [vmem:[%s477 + $0xd8] sm:$0xff]
        %v705 = vld [vmem:[%s477 + $0xe0] sm:$0xff]
        %v706 = vld [vmem:[%s477 + $0xe8] sm:$0xff]
        %v707 = vld [vmem:[%s477 + $0xf0] sm:$0xff]
        %v708 = vld [vmem:[%s477 + $0xf8] sm:$0xff]
        %v709 = vld [vmem:[%s477 + $0x100] sm:$0xff]
        %v710 = vld [vmem:[%s477 + $0x108] sm:$0xff]
        %v711 = vld [vmem:[%s477 + $0x110] sm:$0xff]
        %v712 = vld [vmem:[%s477 + $0x118] sm:$0xff]
        %v713 = vld [vmem:[%s477 + $0x120] sm:$0xff]
        %v714 = vld [vmem:[%s477 + $0x128] sm:$0xff]
        %v715 = vld [vmem:[%s477 + $0x130] sm:$0xff]
        %v716 = vld [vmem:[%s477 + $0x138] sm:$0xff]
        %v717 = vld [vmem:[%s477 + $0x140] sm:$0xff]
        %v718 = vld [vmem:[%s477 + $0x148] sm:$0xff]
        %v719 = vld [vmem:[%s477 + $0x150] sm:$0xff]
        %v720 = vld [vmem:[%s477 + $0x158] sm:$0xff]
        %v721 = vld [vmem:[%s477 + $0x160] sm:$0xff]
        %v722 = vld [vmem:[%s477 + $0x168] sm:$0xff]
        %v723 = vld [vmem:[%s477 + $0x170] sm:$0xff]
        %v724 = vld [vmem:[%s477 + $0x178] sm:$0xff]
        %v725 = vld [vmem:[%s477 + $0x180] sm:$0xff]
        %v726 = vld [vmem:[%s477 + $0x188] sm:$0xff]
        %v727 = vld [vmem:[%s477 + $0x190] sm:$0xff]
        %v728 = vld [vmem:[%s477 + $0x198] sm:$0xff]
        %v729 = vld [vmem:[%s477 + $0x1a0] sm:$0xff]
        %v730 = vld [vmem:[%s477 + $0x1a8] sm:$0xff]
        %v731 = vld [vmem:[%s477 + $0x1b0] sm:$0xff]
        %v732 = vld [vmem:[%s477 + $0x1b8] sm:$0xff]
        %v733 = vld [vmem:[%s477 + $0x1c0] sm:$0xff]
        %v734 = vld [vmem:[%s477 + $0x1c8] sm:$0xff]
        %v735 = vld [vmem:[%s477 + $0x1d0] sm:$0xff]
        %v736 = vld [vmem:[%s477 + $0x1d8] sm:$0xff]
        %v737 = vld [vmem:[%s477 + $0x1e0] sm:$0xff]
        %v738 = vld [vmem:[%s477 + $0x1e8] sm:$0xff]
        %v739 = vld [vmem:[%s477 + $0x1f0] sm:$0xff]
        %v740 = vld [vmem:[%s477 + $0x1f8] sm:$0xff]
        %v805 = vunpack.c.l.b16 %v677
        %v806 = vunpack.c.h.b16 %v677
        %v807 = vunpack.c.l.b16 %v678
        %v808 = vunpack.c.h.b16 %v678
        %v809 = vunpack.c.l.b16 %v679
        %v810 = vunpack.c.h.b16 %v679
        %v811 = vunpack.c.l.b16 %v680
        %v812 = vunpack.c.h.b16 %v680
        %v813 = vunpack.c.l.b16 %v681
        %v814 = vunpack.c.h.b16 %v681
        %v815 = vunpack.c.l.b16 %v682
        %v816 = vunpack.c.h.b16 %v682
        %v817 = vunpack.c.l.b16 %v683
        %v818 = vunpack.c.h.b16 %v683
        %v819 = vunpack.c.l.b16 %v684
        %v820 = vunpack.c.h.b16 %v684
        %v821 = vunpack.c.l.b16 %v685
        %v822 = vunpack.c.h.b16 %v685
        %v823 = vunpack.c.l.b16 %v686
        %v824 = vunpack.c.h.b16 %v686
        %v825 = vunpack.c.l.b16 %v687
        %v826 = vunpack.c.h.b16 %v687
        %v827 = vunpack.c.l.b16 %v688
        %v828 = vunpack.c.h.b16 %v688
        %v829 = vunpack.c.l.b16 %v689
        %v830 = vunpack.c.h.b16 %v689
        %v831 = vunpack.c.l.b16 %v690
        %v832 = vunpack.c.h.b16 %v690
        %v833 = vunpack.c.l.b16 %v691
        %v834 = vunpack.c.h.b16 %v691
        %v835 = vunpack.c.l.b16 %v692
        %v836 = vunpack.c.h.b16 %v692
        %v837 = vunpack.c.l.b16 %v693
        %v838 = vunpack.c.h.b16 %v693
        %v839 = vunpack.c.l.b16 %v694
        %v840 = vunpack.c.h.b16 %v694
        %v841 = vunpack.c.l.b16 %v695
        %v842 = vunpack.c.h.b16 %v695
        %v843 = vunpack.c.l.b16 %v696
        %v844 = vunpack.c.h.b16 %v696
        %v845 = vunpack.c.l.b16 %v697
        %v846 = vunpack.c.h.b16 %v697
        %v847 = vunpack.c.l.b16 %v698
        %v848 = vunpack.c.h.b16 %v698
        %v849 = vunpack.c.l.b16 %v699
        %v850 = vunpack.c.h.b16 %v699
        %v851 = vunpack.c.l.b16 %v700
        %v852 = vunpack.c.h.b16 %v700
        %v853 = vunpack.c.l.b16 %v701
        %v854 = vunpack.c.h.b16 %v701
        %v855 = vunpack.c.l.b16 %v702
        %v856 = vunpack.c.h.b16 %v702
        %v857 = vunpack.c.l.b16 %v703
        %v858 = vunpack.c.h.b16 %v703
        %v859 = vunpack.c.l.b16 %v704
        %v860 = vunpack.c.h.b16 %v704
        %v861 = vunpack.c.l.b16 %v705
        %v862 = vunpack.c.h.b16 %v705
        %v863 = vunpack.c.l.b16 %v706
        %v864 = vunpack.c.h.b16 %v706
        %v865 = vunpack.c.l.b16 %v707
        %v866 = vunpack.c.h.b16 %v707
        %v867 = vunpack.c.l.b16 %v708
        %v868 = vunpack.c.h.b16 %v708
        %v869 = vunpack.c.l.b16 %v709
        %v870 = vunpack.c.h.b16 %v709
        %v871 = vunpack.c.l.b16 %v710
        %v872 = vunpack.c.h.b16 %v710
        %v873 = vunpack.c.l.b16 %v711
        %v874 = vunpack.c.h.b16 %v711
        %v875 = vunpack.c.l.b16 %v712
        %v876 = vunpack.c.h.b16 %v712
        %v877 = vunpack.c.l.b16 %v713
        %v878 = vunpack.c.h.b16 %v713
        %v879 = vunpack.c.l.b16 %v714
        %v880 = vunpack.c.h.b16 %v714
        %v881 = vunpack.c.l.b16 %v715
        %v882 = vunpack.c.h.b16 %v715
        %v883 = vunpack.c.l.b16 %v716
        %v884 = vunpack.c.h.b16 %v716
        %v885 = vunpack.c.l.b16 %v717
        %v886 = vunpack.c.h.b16 %v717
        %v887 = vunpack.c.l.b16 %v718
        %v888 = vunpack.c.h.b16 %v718
        %v889 = vunpack.c.l.b16 %v719
        %v890 = vunpack.c.h.b16 %v719
        %v891 = vunpack.c.l.b16 %v720
        %v892 = vunpack.c.h.b16 %v720
        %v893 = vunpack.c.l.b16 %v721
        %v894 = vunpack.c.h.b16 %v721
        %v895 = vunpack.c.l.b16 %v722
        %v896 = vunpack.c.h.b16 %v722
        %v897 = vunpack.c.l.b16 %v723
        %v898 = vunpack.c.h.b16 %v723
        %v899 = vunpack.c.l.b16 %v724
        %v900 = vunpack.c.h.b16 %v724
        %v901 = vunpack.c.l.b16 %v725
        %v902 = vunpack.c.h.b16 %v725
        %v903 = vunpack.c.l.b16 %v726
        %v904 = vunpack.c.h.b16 %v726
        %v905 = vunpack.c.l.b16 %v727
        %v906 = vunpack.c.h.b16 %v727
        %v907 = vunpack.c.l.b16 %v728
        %v908 = vunpack.c.h.b16 %v728
        %v909 = vunpack.c.l.b16 %v729
        %v910 = vunpack.c.h.b16 %v729
        %v911 = vunpack.c.l.b16 %v730
        %v912 = vunpack.c.h.b16 %v730
        %v913 = vunpack.c.l.b16 %v731
        %v914 = vunpack.c.h.b16 %v731
        %v915 = vunpack.c.l.b16 %v732
        %v916 = vunpack.c.h.b16 %v732
        %v917 = vunpack.c.l.b16 %v733
        %v918 = vunpack.c.h.b16 %v733
        %v919 = vunpack.c.l.b16 %v734
        %v920 = vunpack.c.h.b16 %v734
        %v921 = vunpack.c.l.b16 %v735
        %v922 = vunpack.c.h.b16 %v735
        %v923 = vunpack.c.l.b16 %v736
        %v924 = vunpack.c.h.b16 %v736
        %v925 = vunpack.c.l.b16 %v737
        %v926 = vunpack.c.h.b16 %v737
        %v927 = vunpack.c.l.b16 %v738
        %v928 = vunpack.c.h.b16 %v738
        %v929 = vunpack.c.l.b16 %v739
        %v930 = vunpack.c.h.b16 %v739
        %v931 = vunpack.c.l.b16 %v740
        %v932 = vunpack.c.h.b16 %v740
        %v933 = vpack.c.b16 %v809, %v805
        %v934 = vpack.c.b16 %v810, %v806
        %v935 = vpack.c.b16 %v811, %v807
        %v936 = vpack.c.b16 %v812, %v808
        %v937 = vpack.c.b16 %v817, %v813
        %v938 = vpack.c.b16 %v818, %v814
        %v939 = vpack.c.b16 %v819, %v815
        %v940 = vpack.c.b16 %v820, %v816
        %v941 = vpack.c.b16 %v825, %v821
        %v942 = vpack.c.b16 %v826, %v822
        %v943 = vpack.c.b16 %v827, %v823
        %v944 = vpack.c.b16 %v828, %v824
        %v945 = vpack.c.b16 %v833, %v829
        %v946 = vpack.c.b16 %v834, %v830
        %v947 = vpack.c.b16 %v835, %v831
        %v948 = vpack.c.b16 %v836, %v832
        %v949 = vpack.c.b16 %v841, %v837
        %v950 = vpack.c.b16 %v842, %v838
        %v951 = vpack.c.b16 %v843, %v839
        %v952 = vpack.c.b16 %v844, %v840
        %v953 = vpack.c.b16 %v849, %v845
        %v954 = vpack.c.b16 %v850, %v846
        %v955 = vpack.c.b16 %v851, %v847
        %v956 = vpack.c.b16 %v852, %v848
        %v957 = vpack.c.b16 %v857, %v853
        %v958 = vpack.c.b16 %v858, %v854
        %v959 = vpack.c.b16 %v859, %v855
        %v960 = vpack.c.b16 %v860, %v856
        %v961 = vpack.c.b16 %v865, %v861
        %v962 = vpack.c.b16 %v866, %v862
        %v963 = vpack.c.b16 %v867, %v863
        %v964 = vpack.c.b16 %v868, %v864
        %v965 = vpack.c.b16 %v873, %v869
        %v966 = vpack.c.b16 %v874, %v870
        %v967 = vpack.c.b16 %v875, %v871
        %v968 = vpack.c.b16 %v876, %v872
        %v969 = vpack.c.b16 %v881, %v877
        %v970 = vpack.c.b16 %v882, %v878
        %v971 = vpack.c.b16 %v883, %v879
        %v972 = vpack.c.b16 %v884, %v880
        %v973 = vpack.c.b16 %v889, %v885
        %v974 = vpack.c.b16 %v890, %v886
        %v975 = vpack.c.b16 %v891, %v887
        %v976 = vpack.c.b16 %v892, %v888
        %v977 = vpack.c.b16 %v897, %v893
        %v978 = vpack.c.b16 %v898, %v894
        %v979 = vpack.c.b16 %v899, %v895
        %v980 = vpack.c.b16 %v900, %v896
        %v981 = vpack.c.b16 %v905, %v901
        %v982 = vpack.c.b16 %v906, %v902
        %v983 = vpack.c.b16 %v907, %v903
        %v984 = vpack.c.b16 %v908, %v904
        %v985 = vpack.c.b16 %v913, %v909
        %v986 = vpack.c.b16 %v914, %v910
        %v987 = vpack.c.b16 %v915, %v911
        %v988 = vpack.c.b16 %v916, %v912
        %v989 = vpack.c.b16 %v921, %v917
        %v990 = vpack.c.b16 %v922, %v918
        %v991 = vpack.c.b16 %v923, %v919
        %v992 = vpack.c.b16 %v924, %v920
        %v993 = vpack.c.b16 %v929, %v925
        %v994 = vpack.c.b16 %v930, %v926
        %v995 = vpack.c.b16 %v931, %v927
        %v996 = vpack.c.b16 %v932, %v928
        %v1125 = vunpack.c.l.b16 %v581
        %v1126 = vunpack.c.l.b16 %v582
        %v1127 = vunpack.c.l.b16 %v583
        %v1128 = vunpack.c.l.b16 %v584
        %v1129 = vunpack.c.l.b16 %v585
        %v1130 = vunpack.c.l.b16 %v586
        %v1131 = vunpack.c.l.b16 %v587
        %v1132 = vunpack.c.l.b16 %v588
        %v1133 = vunpack.c.l.b16 %v589
        %v1134 = vunpack.c.l.b16 %v590
        %v1135 = vunpack.c.l.b16 %v591
        %v1136 = vunpack.c.l.b16 %v592
        %v1137 = vunpack.c.l.b16 %v593
        %v1138 = vunpack.c.l.b16 %v594
        %v1139 = vunpack.c.l.b16 %v595
        %v1140 = vunpack.c.l.b16 %v596
        %v1141 = vunpack.c.l.b16 %v597
        %v1142 = vunpack.c.l.b16 %v598
        %v1143 = vunpack.c.l.b16 %v599
        %v1144 = vunpack.c.l.b16 %v600
        %v1145 = vunpack.c.l.b16 %v601
        %v1146 = vunpack.c.l.b16 %v602
        %v1147 = vunpack.c.l.b16 %v603
        %v1148 = vunpack.c.l.b16 %v604
        %v1149 = vunpack.c.l.b16 %v605
        %v1150 = vunpack.c.l.b16 %v606
        %v1151 = vunpack.c.l.b16 %v607
        %v1152 = vunpack.c.l.b16 %v608
        %v1153 = vunpack.c.l.b16 %v609
        %v1154 = vunpack.c.l.b16 %v610
        %v1155 = vunpack.c.l.b16 %v611
        %v1156 = vunpack.c.l.b16 %v612
        %v1157 = vunpack.c.l.b16 %v613
        %v1158 = vunpack.c.l.b16 %v614
        %v1159 = vunpack.c.l.b16 %v615
        %v1160 = vunpack.c.l.b16 %v616
        %v1161 = vunpack.c.l.b16 %v617
        %v1162 = vunpack.c.l.b16 %v618
        %v1163 = vunpack.c.l.b16 %v619
        %v1164 = vunpack.c.l.b16 %v620
        %v1165 = vunpack.c.l.b16 %v621
        %v1166 = vunpack.c.l.b16 %v622
        %v1167 = vunpack.c.l.b16 %v623
        %v1168 = vunpack.c.l.b16 %v624
        %v1169 = vunpack.c.l.b16 %v625
        %v1170 = vunpack.c.l.b16 %v626
        %v1171 = vunpack.c.l.b16 %v627
        %v1172 = vunpack.c.l.b16 %v628
        %v1173 = vunpack.c.l.b16 %v629
        %v1174 = vunpack.c.l.b16 %v630
        %v1175 = vunpack.c.l.b16 %v631
        %v1176 = vunpack.c.l.b16 %v632
        %v1177 = vunpack.c.l.b16 %v633
        %v1178 = vunpack.c.l.b16 %v634
        %v1179 = vunpack.c.l.b16 %v635
        %v1180 = vunpack.c.l.b16 %v636
        %v1181 = vunpack.c.l.b16 %v637
        %v1182 = vunpack.c.l.b16 %v638
        %v1183 = vunpack.c.l.b16 %v639
        %v1184 = vunpack.c.l.b16 %v640
        %v1185 = vunpack.c.l.b16 %v641
        %v1186 = vunpack.c.l.b16 %v642
        %v1187 = vunpack.c.l.b16 %v643
        %v1188 = vunpack.c.l.b16 %v644
        %v1189 = vpack.c.b16 %v1126, %v1125
        %v1190 = vpack.c.b16 %v1128, %v1127
        %v1191 = vpack.c.b16 %v1130, %v1129
        %v1192 = vpack.c.b16 %v1132, %v1131
        %v1193 = vpack.c.b16 %v1134, %v1133
        %v1194 = vpack.c.b16 %v1136, %v1135
        %v1195 = vpack.c.b16 %v1138, %v1137
        %v1196 = vpack.c.b16 %v1140, %v1139
        %v1197 = vpack.c.b16 %v1142, %v1141
        %v1198 = vpack.c.b16 %v1144, %v1143
        %v1199 = vpack.c.b16 %v1146, %v1145
        %v1200 = vpack.c.b16 %v1148, %v1147
        %v1201 = vpack.c.b16 %v1150, %v1149
        %v1202 = vpack.c.b16 %v1152, %v1151
        %v1203 = vpack.c.b16 %v1154, %v1153
        %v1204 = vpack.c.b16 %v1156, %v1155
        %v1205 = vpack.c.b16 %v1158, %v1157
        %v1206 = vpack.c.b16 %v1160, %v1159
        %v1207 = vpack.c.b16 %v1162, %v1161
        %v1208 = vpack.c.b16 %v1164, %v1163
        %v1209 = vpack.c.b16 %v1166, %v1165
        %v1210 = vpack.c.b16 %v1168, %v1167
        %v1211 = vpack.c.b16 %v1170, %v1169
        %v1212 = vpack.c.b16 %v1172, %v1171
        %v1213 = vpack.c.b16 %v1174, %v1173
        %v1214 = vpack.c.b16 %v1176, %v1175
        %v1215 = vpack.c.b16 %v1178, %v1177
        %v1216 = vpack.c.b16 %v1180, %v1179
        %v1217 = vpack.c.b16 %v1182, %v1181
        %v1218 = vpack.c.b16 %v1184, %v1183
        %v1219 = vpack.c.b16 %v1186, %v1185
        %v1220 = vpack.c.b16 %v1188, %v1187
        %1253 = vmatpush.bf16.msra.mxu0 %v1196
        %1254 = vmatpush.bf16.msra.mxu0 %v1195
        %1255 = vmatpush.bf16.msra.mxu0 %v1194
        %1256 = vmatpush.bf16.msra.mxu0 %v1193
        %1257 = vmatpush.bf16.msra.mxu0 %v1192
        %1258 = vmatpush.bf16.msra.mxu0 %v1191
        %1259 = vmatpush.bf16.msra.mxu0 %v1190
        %1260 = vmatpush.bf16.msra.mxu0 %v1189
        %1261 = vmatmul.bf16.gmra.mxu0 %v933
        %v1262 = vpop.f32.mrf.mxu0
        %v1263 = vadd.f32 0.0, %v1262
        %v1264 = vpop.f32.mrf.mxu0
        %v1265 = vadd.f32 0.0, %v1264
        %1266 = vmatmul.bf16.gmra.mxu0 %v937
        %v1267 = vpop.f32.mrf.mxu0
        %v1268 = vadd.f32 0.0, %v1267
        %v1269 = vpop.f32.mrf.mxu0
        %v1270 = vadd.f32 0.0, %v1269
        %1271 = vmatmul.bf16.gmra.mxu0 %v941
        %v1272 = vpop.f32.mrf.mxu0
        %v1273 = vadd.f32 0.0, %v1272
        %v1274 = vpop.f32.mrf.mxu0
        %v1275 = vadd.f32 0.0, %v1274
        %1276 = vmatmul.bf16.gmra.mxu0 %v945
        %v1277 = vpop.f32.mrf.mxu0
        %v1278 = vadd.f32 0.0, %v1277
        %v1279 = vpop.f32.mrf.mxu0
        %v1280 = vadd.f32 0.0, %v1279
        %1281 = vmatmul.bf16.gmra.mxu0 %v949
        %v1282 = vpop.f32.mrf.mxu0
        %v1283 = vadd.f32 0.0, %v1282
        %v1284 = vpop.f32.mrf.mxu0
        %v1285 = vadd.f32 0.0, %v1284
        %1286 = vmatmul.bf16.gmra.mxu0 %v953
        %v1287 = vpop.f32.mrf.mxu0
        %v1288 = vadd.f32 0.0, %v1287
        %v1289 = vpop.f32.mrf.mxu0
        %v1290 = vadd.f32 0.0, %v1289
        %1291 = vmatmul.bf16.gmra.mxu0 %v957
        %v1292 = vpop.f32.mrf.mxu0
        %v1293 = vadd.f32 0.0, %v1292
        %v1294 = vpop.f32.mrf.mxu0
        %v1295 = vadd.f32 0.0, %v1294
        %1296 = vmatmul.bf16.gmra.mxu0 %v961
        %v1297 = vpop.f32.mrf.mxu0
        %v1298 = vadd.f32 0.0, %v1297
        %v1299 = vpop.f32.mrf.mxu0
        %v1300 = vadd.f32 0.0, %v1299
        %1301 = vmatmul.bf16.gmra.mxu0 %v965
        %v1302 = vpop.f32.mrf.mxu0
        %v1303 = vadd.f32 0.0, %v1302
        %v1304 = vpop.f32.mrf.mxu0
        %v1305 = vadd.f32 0.0, %v1304
        %1306 = vmatmul.bf16.gmra.mxu0 %v969
        %v1307 = vpop.f32.mrf.mxu0
        %v1308 = vadd.f32 0.0, %v1307
        %v1309 = vpop.f32.mrf.mxu0
        %v1310 = vadd.f32 0.0, %v1309
        %1311 = vmatmul.bf16.gmra.mxu0 %v973
        %v1312 = vpop.f32.mrf.mxu0
        %v1313 = vadd.f32 0.0, %v1312
        %v1314 = vpop.f32.mrf.mxu0
        %v1315 = vadd.f32 0.0, %v1314
        %1316 = vmatmul.bf16.gmra.mxu0 %v977
        %v1317 = vpop.f32.mrf.mxu0
        %v1318 = vadd.f32 0.0, %v1317
        %v1319 = vpop.f32.mrf.mxu0
        %v1320 = vadd.f32 0.0, %v1319
        %1321 = vmatmul.bf16.gmra.mxu0 %v981
        %v1322 = vpop.f32.mrf.mxu0
        %v1323 = vadd.f32 0.0, %v1322
        %v1324 = vpop.f32.mrf.mxu0
        %v1325 = vadd.f32 0.0, %v1324
        %1326 = vmatmul.bf16.gmra.mxu0 %v985
        %v1327 = vpop.f32.mrf.mxu0
        %v1328 = vadd.f32 0.0, %v1327
        %v1329 = vpop.f32.mrf.mxu0
        %v1330 = vadd.f32 0.0, %v1329
        %1331 = vmatmul.bf16.gmra.mxu0 %v989
        %v1332 = vpop.f32.mrf.mxu0
        %v1333 = vadd.f32 0.0, %v1332
        %v1334 = vpop.f32.mrf.mxu0
        %v1335 = vadd.f32 0.0, %v1334
        %1336 = vmatmul.bf16.gmra.mxu0 %v993
        %v1337 = vpop.f32.mrf.mxu0
        %v1338 = vadd.f32 0.0, %v1337
        %v1339 = vpop.f32.mrf.mxu0
        %v1340 = vadd.f32 0.0, %v1339
        %1341 = vdwg.mxu0
        %1342 = vmatpush.bf16.msra.mxu0 %v1204
        %1343 = vmatpush.bf16.msra.mxu0 %v1203
        %1344 = vmatpush.bf16.msra.mxu0 %v1202
        %1345 = vmatpush.bf16.msra.mxu0 %v1201
        %1346 = vmatpush.bf16.msra.mxu0 %v1200
        %1347 = vmatpush.bf16.msra.mxu0 %v1199
        %1348 = vmatpush.bf16.msra.mxu0 %v1198
        %1349 = vmatpush.bf16.msra.mxu0 %v1197
        %1350 = vmatmul.bf16.gmra.mxu0 %v934
        %v1351 = vpop.f32.mrf.mxu0
        %v1352 = vadd.f32 %v1263, %v1351
        %v1353 = vpop.f32.mrf.mxu0
        %v1354 = vadd.f32 %v1265, %v1353
        %1355 = vmatmul.bf16.gmra.mxu0 %v938
        %v1356 = vpop.f32.mrf.mxu0
        %v1357 = vadd.f32 %v1268, %v1356
        %v1358 = vpop.f32.mrf.mxu0
        %v1359 = vadd.f32 %v1270, %v1358
        %1360 = vmatmul.bf16.gmra.mxu0 %v942
        %v1361 = vpop.f32.mrf.mxu0
        %v1362 = vadd.f32 %v1273, %v1361
        %v1363 = vpop.f32.mrf.mxu0
        %v1364 = vadd.f32 %v1275, %v1363
        %1365 = vmatmul.bf16.gmra.mxu0 %v946
        %v1366 = vpop.f32.mrf.mxu0
        %v1367 = vadd.f32 %v1278, %v1366
        %v1368 = vpop.f32.mrf.mxu0
        %v1369 = vadd.f32 %v1280, %v1368
        %1370 = vmatmul.bf16.gmra.mxu0 %v950
        %v1371 = vpop.f32.mrf.mxu0
        %v1372 = vadd.f32 %v1283, %v1371
        %v1373 = vpop.f32.mrf.mxu0
        %v1374 = vadd.f32 %v1285, %v1373
        %1375 = vmatmul.bf16.gmra.mxu0 %v954
        %v1376 = vpop.f32.mrf.mxu0
        %v1377 = vadd.f32 %v1288, %v1376
        %v1378 = vpop.f32.mrf.mxu0
        %v1379 = vadd.f32 %v1290, %v1378
        %1380 = vmatmul.bf16.gmra.mxu0 %v958
        %v1381 = vpop.f32.mrf.mxu0
        %v1382 = vadd.f32 %v1293, %v1381
        %v1383 = vpop.f32.mrf.mxu0
        %v1384 = vadd.f32 %v1295, %v1383
        %1385 = vmatmul.bf16.gmra.mxu0 %v962
        %v1386 = vpop.f32.mrf.mxu0
        %v1387 = vadd.f32 %v1298, %v1386
        %v1388 = vpop.f32.mrf.mxu0
        %v1389 = vadd.f32 %v1300, %v1388
        %1390 = vmatmul.bf16.gmra.mxu0 %v966
        %v1391 = vpop.f32.mrf.mxu0
        %v1392 = vadd.f32 %v1303, %v1391
        %v1393 = vpop.f32.mrf.mxu0
        %v1394 = vadd.f32 %v1305, %v1393
        %1395 = vmatmul.bf16.gmra.mxu0 %v970
        %v1396 = vpop.f32.mrf.mxu0
        %v1397 = vadd.f32 %v1308, %v1396
        %v1398 = vpop.f32.mrf.mxu0
        %v1399 = vadd.f32 %v1310, %v1398
        %1400 = vmatmul.bf16.gmra.mxu0 %v974
        %v1401 = vpop.f32.mrf.mxu0
        %v1402 = vadd.f32 %v1313, %v1401
        %v1403 = vpop.f32.mrf.mxu0
        %v1404 = vadd.f32 %v1315, %v1403
        %1405 = vmatmul.bf16.gmra.mxu0 %v978
        %v1406 = vpop.f32.mrf.mxu0
        %v1407 = vadd.f32 %v1318, %v1406
        %v1408 = vpop.f32.mrf.mxu0
        %v1409 = vadd.f32 %v1320, %v1408
        %1410 = vmatmul.bf16.gmra.mxu0 %v982
        %v1411 = vpop.f32.mrf.mxu0
        %v1412 = vadd.f32 %v1323, %v1411
        %v1413 = vpop.f32.mrf.mxu0
        %v1414 = vadd.f32 %v1325, %v1413
        %1415 = vmatmul.bf16.gmra.mxu0 %v986
        %v1416 = vpop.f32.mrf.mxu0
        %v1417 = vadd.f32 %v1328, %v1416
        %v1418 = vpop.f32.mrf.mxu0
        %v1419 = vadd.f32 %v1330, %v1418
        %1420 = vmatmul.bf16.gmra.mxu0 %v990
        %v1421 = vpop.f32.mrf.mxu0
        %v1422 = vadd.f32 %v1333, %v1421
        %v1423 = vpop.f32.mrf.mxu0
        %v1424 = vadd.f32 %v1335, %v1423
        %1425 = vmatmul.bf16.gmra.mxu0 %v994
        %v1426 = vpop.f32.mrf.mxu0
        %v1427 = vadd.f32 %v1338, %v1426
        %v1428 = vpop.f32.mrf.mxu0
        %v1429 = vadd.f32 %v1340, %v1428
        %1430 = vdwg.mxu0
        %1431 = vmatpush.bf16.msra.mxu0 %v1212
        %1432 = vmatpush.bf16.msra.mxu0 %v1211
        %1433 = vmatpush.bf16.msra.mxu0 %v1210
        %1434 = vmatpush.bf16.msra.mxu0 %v1209
        %1435 = vmatpush.bf16.msra.mxu0 %v1208
        %1436 = vmatpush.bf16.msra.mxu0 %v1207
        %1437 = vmatpush.bf16.msra.mxu0 %v1206
        %1438 = vmatpush.bf16.msra.mxu0 %v1205
        %1439 = vmatmul.bf16.gmra.mxu0 %v935
        %v1440 = vpop.f32.mrf.mxu0
        %v1441 = vadd.f32 %v1352, %v1440
        %v1442 = vpop.f32.mrf.mxu0
        %v1443 = vadd.f32 %v1354, %v1442
        %1444 = vmatmul.bf16.gmra.mxu0 %v939
        %v1445 = vpop.f32.mrf.mxu0
        %v1446 = vadd.f32 %v1357, %v1445
        %v1447 = vpop.f32.mrf.mxu0
        %v1448 = vadd.f32 %v1359, %v1447
        %1449 = vmatmul.bf16.gmra.mxu0 %v943
        %v1450 = vpop.f32.mrf.mxu0
        %v1451 = vadd.f32 %v1362, %v1450
        %v1452 = vpop.f32.mrf.mxu0
        %v1453 = vadd.f32 %v1364, %v1452
        %1454 = vmatmul.bf16.gmra.mxu0 %v947
        %v1455 = vpop.f32.mrf.mxu0
        %v1456 = vadd.f32 %v1367, %v1455
        %v1457 = vpop.f32.mrf.mxu0
        %v1458 = vadd.f32 %v1369, %v1457
        %1459 = vmatmul.bf16.gmra.mxu0 %v951
        %v1460 = vpop.f32.mrf.mxu0
        %v1461 = vadd.f32 %v1372, %v1460
        %v1462 = vpop.f32.mrf.mxu0
        %v1463 = vadd.f32 %v1374, %v1462
        %1464 = vmatmul.bf16.gmra.mxu0 %v955
        %v1465 = vpop.f32.mrf.mxu0
        %v1466 = vadd.f32 %v1377, %v1465
        %v1467 = vpop.f32.mrf.mxu0
        %v1468 = vadd.f32 %v1379, %v1467
        %1469 = vmatmul.bf16.gmra.mxu0 %v959
        %v1470 = vpop.f32.mrf.mxu0
        %v1471 = vadd.f32 %v1382, %v1470
        %v1472 = vpop.f32.mrf.mxu0
        %v1473 = vadd.f32 %v1384, %v1472
        %1474 = vmatmul.bf16.gmra.mxu0 %v963
        %v1475 = vpop.f32.mrf.mxu0
        %v1476 = vadd.f32 %v1387, %v1475
        %v1477 = vpop.f32.mrf.mxu0
        %v1478 = vadd.f32 %v1389, %v1477
        %1479 = vmatmul.bf16.gmra.mxu0 %v967
        %v1480 = vpop.f32.mrf.mxu0
        %v1481 = vadd.f32 %v1392, %v1480
        %v1482 = vpop.f32.mrf.mxu0
        %v1483 = vadd.f32 %v1394, %v1482
        %1484 = vmatmul.bf16.gmra.mxu0 %v971
        %v1485 = vpop.f32.mrf.mxu0
        %v1486 = vadd.f32 %v1397, %v1485
        %v1487 = vpop.f32.mrf.mxu0
        %v1488 = vadd.f32 %v1399, %v1487
        %1489 = vmatmul.bf16.gmra.mxu0 %v975
        %v1490 = vpop.f32.mrf.mxu0
        %v1491 = vadd.f32 %v1402, %v1490
        %v1492 = vpop.f32.mrf.mxu0
        %v1493 = vadd.f32 %v1404, %v1492
        %1494 = vmatmul.bf16.gmra.mxu0 %v979
        %v1495 = vpop.f32.mrf.mxu0
        %v1496 = vadd.f32 %v1407, %v1495
        %v1497 = vpop.f32.mrf.mxu0
        %v1498 = vadd.f32 %v1409, %v1497
        %1499 = vmatmul.bf16.gmra.mxu0 %v983
        %v1500 = vpop.f32.mrf.mxu0
        %v1501 = vadd.f32 %v1412, %v1500
        %v1502 = vpop.f32.mrf.mxu0
        %v1503 = vadd.f32 %v1414, %v1502
        %1504 = vmatmul.bf16.gmra.mxu0 %v987
        %v1505 = vpop.f32.mrf.mxu0
        %v1506 = vadd.f32 %v1417, %v1505
        %v1507 = vpop.f32.mrf.mxu0
        %v1508 = vadd.f32 %v1419, %v1507
        %1509 = vmatmul.bf16.gmra.mxu0 %v991
        %v1510 = vpop.f32.mrf.mxu0
        %v1511 = vadd.f32 %v1422, %v1510
        %v1512 = vpop.f32.mrf.mxu0
        %v1513 = vadd.f32 %v1424, %v1512
        %1514 = vmatmul.bf16.gmra.mxu0 %v995
        %v1515 = vpop.f32.mrf.mxu0
        %v1516 = vadd.f32 %v1427, %v1515
        %v1517 = vpop.f32.mrf.mxu0
        %v1518 = vadd.f32 %v1429, %v1517
        %1519 = vdwg.mxu0
        %1520 = vmatpush.bf16.msra.mxu0 %v1220
        %1521 = vmatpush.bf16.msra.mxu0 %v1219
        %1522 = vmatpush.bf16.msra.mxu0 %v1218
        %1523 = vmatpush.bf16.msra.mxu0 %v1217
        %1524 = vmatpush.bf16.msra.mxu0 %v1216
        %1525 = vmatpush.bf16.msra.mxu0 %v1215
        %1526 = vmatpush.bf16.msra.mxu0 %v1214
        %1527 = vmatpush.bf16.msra.mxu0 %v1213
        %1528 = vmatmul.bf16.gmra.mxu0 %v936
        %v1529 = vpop.f32.mrf.mxu0
        %v1530 = vadd.f32 %v1441, %v1529
        %v1531 = vpop.f32.mrf.mxu0
        %v1532 = vadd.f32 %v1443, %v1531
        %1533 = vmatmul.bf16.gmra.mxu0 %v940
        %v1534 = vpop.f32.mrf.mxu0
        %v1535 = vadd.f32 %v1446, %v1534
        %v1536 = vpop.f32.mrf.mxu0
        %v1537 = vadd.f32 %v1448, %v1536
        %1538 = vmatmul.bf16.gmra.mxu0 %v944
        %v1539 = vpop.f32.mrf.mxu0
        %v1540 = vadd.f32 %v1451, %v1539
        %v1541 = vpop.f32.mrf.mxu0
        %v1542 = vadd.f32 %v1453, %v1541
        %1543 = vmatmul.bf16.gmra.mxu0 %v948
        %v1544 = vpop.f32.mrf.mxu0
        %v1545 = vadd.f32 %v1456, %v1544
        %v1546 = vpop.f32.mrf.mxu0
        %v1547 = vadd.f32 %v1458, %v1546
        %1548 = vmatmul.bf16.gmra.mxu0 %v952
        %v1549 = vpop.f32.mrf.mxu0
        %v1550 = vadd.f32 %v1461, %v1549
        %v1551 = vpop.f32.mrf.mxu0
        %v1552 = vadd.f32 %v1463, %v1551
        %1553 = vmatmul.bf16.gmra.mxu0 %v956
        %v1554 = vpop.f32.mrf.mxu0
        %v1555 = vadd.f32 %v1466, %v1554
        %v1556 = vpop.f32.mrf.mxu0
        %v1557 = vadd.f32 %v1468, %v1556
        %1558 = vmatmul.bf16.gmra.mxu0 %v960
        %v1559 = vpop.f32.mrf.mxu0
        %v1560 = vadd.f32 %v1471, %v1559
        %v1561 = vpop.f32.mrf.mxu0
        %v1562 = vadd.f32 %v1473, %v1561
        %1563 = vmatmul.bf16.gmra.mxu0 %v964
        %v1564 = vpop.f32.mrf.mxu0
        %v1565 = vadd.f32 %v1476, %v1564
        %v1566 = vpop.f32.mrf.mxu0
        %v1567 = vadd.f32 %v1478, %v1566
        %1568 = vmatmul.bf16.gmra.mxu0 %v968
        %v1569 = vpop.f32.mrf.mxu0
        %v1570 = vadd.f32 %v1481, %v1569
        %v1571 = vpop.f32.mrf.mxu0
        %v1572 = vadd.f32 %v1483, %v1571
        %1573 = vmatmul.bf16.gmra.mxu0 %v972
        %v1574 = vpop.f32.mrf.mxu0
        %v1575 = vadd.f32 %v1486, %v1574
        %v1576 = vpop.f32.mrf.mxu0
        %v1577 = vadd.f32 %v1488, %v1576
        %1578 = vmatmul.bf16.gmra.mxu0 %v976
        %v1579 = vpop.f32.mrf.mxu0
        %v1580 = vadd.f32 %v1491, %v1579
        %v1581 = vpop.f32.mrf.mxu0
        %v1582 = vadd.f32 %v1493, %v1581
        %1583 = vmatmul.bf16.gmra.mxu0 %v980
        %v1584 = vpop.f32.mrf.mxu0
        %v1585 = vadd.f32 %v1496, %v1584
        %v1586 = vpop.f32.mrf.mxu0
        %v1587 = vadd.f32 %v1498, %v1586
        %1588 = vmatmul.bf16.gmra.mxu0 %v984
        %v1589 = vpop.f32.mrf.mxu0
        %v1590 = vadd.f32 %v1501, %v1589
        %v1591 = vpop.f32.mrf.mxu0
        %v1592 = vadd.f32 %v1503, %v1591
        %1593 = vmatmul.bf16.gmra.mxu0 %v988
        %v1594 = vpop.f32.mrf.mxu0
        %v1595 = vadd.f32 %v1506, %v1594
        %v1596 = vpop.f32.mrf.mxu0
        %v1597 = vadd.f32 %v1508, %v1596
        %1598 = vmatmul.bf16.gmra.mxu0 %v992
        %v1599 = vpop.f32.mrf.mxu0
        %v1600 = vadd.f32 %v1511, %v1599
        %v1601 = vpop.f32.mrf.mxu0
        %v1602 = vadd.f32 %v1513, %v1601
        %1603 = vmatmul.bf16.gmra.mxu0 %v996
        %v1604 = vpop.f32.mrf.mxu0
        %v1605 = vadd.f32 %v1516, %v1604
        %v1606 = vpop.f32.mrf.mxu0
        %v1607 = vadd.f32 %v1518, %v1606
        %1608 = vdwg.mxu0
        %v1609 = vadd.f32 %v645, %v1530
        %v1610 = vadd.f32 %v646, %v1532
        %v1611 = vadd.f32 %v647, %v1535
        %v1612 = vadd.f32 %v648, %v1537
        %v1613 = vadd.f32 %v649, %v1540
        %v1614 = vadd.f32 %v650, %v1542
        %v1615 = vadd.f32 %v651, %v1545
        %v1616 = vadd.f32 %v652, %v1547
        %v1617 = vadd.f32 %v653, %v1550
        %v1618 = vadd.f32 %v654, %v1552
        %v1619 = vadd.f32 %v655, %v1555
        %v1620 = vadd.f32 %v656, %v1557
        %v1621 = vadd.f32 %v657, %v1560
        %v1622 = vadd.f32 %v658, %v1562
        %v1623 = vadd.f32 %v659, %v1565
        %v1624 = vadd.f32 %v660, %v1567
        %v1625 = vadd.f32 %v661, %v1570
        %v1626 = vadd.f32 %v662, %v1572
        %v1627 = vadd.f32 %v663, %v1575
        %v1628 = vadd.f32 %v664, %v1577
        %v1629 = vadd.f32 %v665, %v1580
        %v1630 = vadd.f32 %v666, %v1582
        %v1631 = vadd.f32 %v667, %v1585
        %v1632 = vadd.f32 %v668, %v1587
        %v1633 = vadd.f32 %v669, %v1590
        %v1634 = vadd.f32 %v670, %v1592
        %v1635 = vadd.f32 %v671, %v1595
        %v1636 = vadd.f32 %v672, %v1597
        %v1637 = vadd.f32 %v673, %v1600
        %v1638 = vadd.f32 %v674, %v1602
        %v1639 = vadd.f32 %v675, %v1605
        %v1640 = vadd.f32 %v676, %v1607
        %1641 = vst [vmem:[#allocation2] sm:$0xff] %v1609
        %1642 = vst [vmem:[#allocation2 + $0x8] sm:$0xff] %v1610
        %1643 = vst [vmem:[#allocation2 + $0x10] sm:$0xff] %v1611
        %1644 = vst [vmem:[#allocation2 + $0x18] sm:$0xff] %v1612
        %1645 = vst [vmem:[#allocation2 + $0x20] sm:$0xff] %v1613
        %1646 = vst [vmem:[#allocation2 + $0x28] sm:$0xff] %v1614
        %1647 = vst [vmem:[#allocation2 + $0x30] sm:$0xff] %v1615
        %1648 = vst [vmem:[#allocation2 + $0x38] sm:$0xff] %v1616
        %1649 = vst [vmem:[#allocation2 + $0x40] sm:$0xff] %v1617
        %1650 = vst [vmem:[#allocation2 + $0x48] sm:$0xff] %v1618
        %1651 = vst [vmem:[#allocation2 + $0x50] sm:$0xff] %v1619
        %1652 = vst [vmem:[#allocation2 + $0x58] sm:$0xff] %v1620
        %1653 = vst [vmem:[#allocation2 + $0x60] sm:$0xff] %v1621
        %1654 = vst [vmem:[#allocation2 + $0x68] sm:$0xff] %v1622
        %1655 = vst [vmem:[#allocation2 + $0x70] sm:$0xff] %v1623
        %1656 = vst [vmem:[#allocation2 + $0x78] sm:$0xff] %v1624
        %1657 = vst [vmem:[#allocation2 + $0x80] sm:$0xff] %v1625
        %1658 = vst [vmem:[#allocation2 + $0x88] sm:$0xff] %v1626
        %1659 = vst [vmem:[#allocation2 + $0x90] sm:$0xff] %v1627
        %1660 = vst [vmem:[#allocation2 + $0x98] sm:$0xff] %v1628
        %1661 = vst [vmem:[#allocation2 + $0xa0] sm:$0xff] %v1629
        %1662 = vst [vmem:[#allocation2 + $0xa8] sm:$0xff] %v1630
        %1663 = vst [vmem:[#allocation2 + $0xb0] sm:$0xff] %v1631
        %1664 = vst [vmem:[#allocation2 + $0xb8] sm:$0xff] %v1632
        %1665 = vst [vmem:[#allocation2 + $0xc0] sm:$0xff] %v1633
        %1666 = vst [vmem:[#allocation2 + $0xc8] sm:$0xff] %v1634
        %1667 = vst [vmem:[#allocation2 + $0xd0] sm:$0xff] %v1635
        %1668 = vst [vmem:[#allocation2 + $0xd8] sm:$0xff] %v1636
        %1669 = vst [vmem:[#allocation2 + $0xe0] sm:$0xff] %v1637
        %1670 = vst [vmem:[#allocation2 + $0xe8] sm:$0xff] %v1638
        %1671 = vst [vmem:[#allocation2 + $0xf0] sm:$0xff] %v1639
        %1672 = vst [vmem:[#allocation2 + $0xf8] sm:$0xff] %v1640
        %s1673 = smul.u32 %s28, 256
        %v1674 = vlaneseq
        %v1675 = vshrl.u32 %v1674, 7
        %v1676 = vadd.s32 %v1675, 8
        %v1677 = vadd.s32 %v1675, 16
        %v1678 = vadd.s32 %v1675, 24
        %v1679 = vadd.s32 %v1675, 32
        %v1680 = vadd.s32 %v1675, 40
        %v1681 = vadd.s32 %v1675, 48
        %v1682 = vadd.s32 %v1675, 56
        %v1683 = vadd.s32 %v1675, 64
        %v1684 = vadd.s32 %v1675, 72
        %v1685 = vadd.s32 %v1675, 80
        %v1686 = vadd.s32 %v1675, 88
        %v1687 = vadd.s32 %v1675, 96
        %v1688 = vadd.s32 %v1675, 104
        %v1689 = vadd.s32 %v1675, 112
        %v1690 = vadd.s32 %v1675, 120
        %v1691 = vadd.s32 %v1675, 128
        %v1692 = vadd.s32 %v1675, 136
        %v1693 = vadd.s32 %v1675, 144
        %v1694 = vadd.s32 %v1675, 152
        %v1695 = vadd.s32 %v1675, 160
        %v1696 = vadd.s32 %v1675, 168
        %v1697 = vadd.s32 %v1675, 176
        %v1698 = vadd.s32 %v1675, 184
        %v1699 = vadd.s32 %v1675, 192
        %v1700 = vadd.s32 %v1675, 200
        %v1701 = vadd.s32 %v1675, 208
        %v1702 = vadd.s32 %v1675, 216
        %v1703 = vadd.s32 %v1675, 224
        %v1704 = vadd.s32 %v1675, 232
        %v1705 = vadd.s32 %v1675, 240
        %v1706 = vadd.s32 %v1675, 248
        %v1707 = vstv %s1673
        %v1708 = vadd.s32 %v1707, %v1675
        %v1709 = vadd.s32 %v1707, %v1676
        %v1710 = vadd.s32 %v1707, %v1677
        %v1711 = vadd.s32 %v1707, %v1678
        %v1712 = vadd.s32 %v1707, %v1679
        %v1713 = vadd.s32 %v1707, %v1680
        %v1714 = vadd.s32 %v1707, %v1681
        %v1715 = vadd.s32 %v1707, %v1682
        %v1716 = vadd.s32 %v1707, %v1683
        %v1717 = vadd.s32 %v1707, %v1684
        %v1718 = vadd.s32 %v1707, %v1685
        %v1719 = vadd.s32 %v1707, %v1686
        %v1720 = vadd.s32 %v1707, %v1687
        %v1721 = vadd.s32 %v1707, %v1688
        %v1722 = vadd.s32 %v1707, %v1689
        %v1723 = vadd.s32 %v1707, %v1690
        %v1724 = vadd.s32 %v1707, %v1691
        %v1725 = vadd.s32 %v1707, %v1692
        %v1726 = vadd.s32 %v1707, %v1693
        %v1727 = vadd.s32 %v1707, %v1694
        %v1728 = vadd.s32 %v1707, %v1695
        %v1729 = vadd.s32 %v1707, %v1696
        %v1730 = vadd.s32 %v1707, %v1697
        %v1731 = vadd.s32 %v1707, %v1698
        %v1732 = vadd.s32 %v1707, %v1699
        %v1733 = vadd.s32 %v1707, %v1700
        %v1734 = vadd.s32 %v1707, %v1701
        %v1735 = vadd.s32 %v1707, %v1702
        %v1736 = vadd.s32 %v1707, %v1703
        %v1737 = vadd.s32 %v1707, %v1704
        %v1738 = vadd.s32 %v1707, %v1705
        %v1739 = vadd.s32 %v1707, %v1706
        %vm1740 = vcmp.lt.s32.totalorder %v1708, 600
        %vm1741 = vcmp.lt.s32.totalorder %v1709, 600
        %vm1742 = vcmp.lt.s32.totalorder %v1710, 600
        %vm1743 = vcmp.lt.s32.totalorder %v1711, 600
        %vm1744 = vcmp.lt.s32.totalorder %v1712, 600
        %vm1745 = vcmp.lt.s32.totalorder %v1713, 600
        %vm1746 = vcmp.lt.s32.totalorder %v1714, 600
        %vm1747 = vcmp.lt.s32.totalorder %v1715, 600
        %vm1748 = vcmp.lt.s32.totalorder %v1716, 600
        %vm1749 = vcmp.lt.s32.totalorder %v1717, 600
        %vm1750 = vcmp.lt.s32.totalorder %v1718, 600
        %vm1751 = vcmp.lt.s32.totalorder %v1719, 600
        %vm1752 = vcmp.lt.s32.totalorder %v1720, 600
        %vm1753 = vcmp.lt.s32.totalorder %v1721, 600
        %vm1754 = vcmp.lt.s32.totalorder %v1722, 600
        %vm1755 = vcmp.lt.s32.totalorder %v1723, 600
        %vm1756 = vcmp.lt.s32.totalorder %v1724, 600
        %vm1757 = vcmp.lt.s32.totalorder %v1725, 600
        %vm1758 = vcmp.lt.s32.totalorder %v1726, 600
        %vm1759 = vcmp.lt.s32.totalorder %v1727, 600
        %vm1760 = vcmp.lt.s32.totalorder %v1728, 600
        %vm1761 = vcmp.lt.s32.totalorder %v1729, 600
        %vm1762 = vcmp.lt.s32.totalorder %v1730, 600
        %vm1763 = vcmp.lt.s32.totalorder %v1731, 600
        %vm1764 = vcmp.lt.s32.totalorder %v1732, 600
        %vm1765 = vcmp.lt.s32.totalorder %v1733, 600
        %vm1766 = vcmp.lt.s32.totalorder %v1734, 600
        %vm1767 = vcmp.lt.s32.totalorder %v1735, 600
        %vm1768 = vcmp.lt.s32.totalorder %v1736, 600
        %vm1769 = vcmp.lt.s32.totalorder %v1737, 600
        %vm1770 = vcmp.lt.s32.totalorder %v1738, 600
        %vm1771 = vcmp.lt.s32.totalorder %v1739, 600
        %v1772 = vsel %vm1740, 1, 0
        %v1773 = vsel %vm1741, 1, 0
        %v1774 = vsel %vm1742, 1, 0
        %v1775 = vsel %vm1743, 1, 0
        %v1776 = vsel %vm1744, 1, 0
        %v1777 = vsel %vm1745, 1, 0
        %v1778 = vsel %vm1746, 1, 0
        %v1779 = vsel %vm1747, 1, 0
        %v1780 = vsel %vm1748, 1, 0
        %v1781 = vsel %vm1749, 1, 0
        %v1782 = vsel %vm1750, 1, 0
        %v1783 = vsel %vm1751, 1, 0
        %v1784 = vsel %vm1752, 1, 0
        %v1785 = vsel %vm1753, 1, 0
        %v1786 = vsel %vm1754, 1, 0
        %v1787 = vsel %vm1755, 1, 0
        %v1788 = vsel %vm1756, 1, 0
        %v1789 = vsel %vm1757, 1, 0
        %v1790 = vsel %vm1758, 1, 0
        %v1791 = vsel %vm1759, 1, 0
        %v1792 = vsel %vm1760, 1, 0
        %v1793 = vsel %vm1761, 1, 0
        %v1794 = vsel %vm1762, 1, 0
        %v1795 = vsel %vm1763, 1, 0
        %v1796 = vsel %vm1764, 1, 0
        %v1797 = vsel %vm1765, 1, 0
        %v1798 = vsel %vm1766, 1, 0
        %v1799 = vsel %vm1767, 1, 0
        %v1800 = vsel %vm1768, 1, 0
        %v1801 = vsel %vm1769, 1, 0
        %v1802 = vsel %vm1770, 1, 0
        %v1803 = vsel %vm1771, 1, 0
        %v1804 = vcvt.s32.f32 %v1772
        %v1805 = vcvt.s32.f32 %v1773
        %v1806 = vcvt.s32.f32 %v1774
        %v1807 = vcvt.s32.f32 %v1775
        %v1808 = vcvt.s32.f32 %v1776
        %v1809 = vcvt.s32.f32 %v1777
        %v1810 = vcvt.s32.f32 %v1778
        %v1811 = vcvt.s32.f32 %v1779
        %v1812 = vcvt.s32.f32 %v1780
        %v1813 = vcvt.s32.f32 %v1781
        %v1814 = vcvt.s32.f32 %v1782
        %v1815 = vcvt.s32.f32 %v1783
        %v1816 = vcvt.s32.f32 %v1784
        %v1817 = vcvt.s32.f32 %v1785
        %v1818 = vcvt.s32.f32 %v1786
        %v1819 = vcvt.s32.f32 %v1787
        %v1820 = vcvt.s32.f32 %v1788
        %v1821 = vcvt.s32.f32 %v1789
        %v1822 = vcvt.s32.f32 %v1790
        %v1823 = vcvt.s32.f32 %v1791
        %v1824 = vcvt.s32.f32 %v1792
        %v1825 = vcvt.s32.f32 %v1793
        %v1826 = vcvt.s32.f32 %v1794
        %v1827 = vcvt.s32.f32 %v1795
        %v1828 = vcvt.s32.f32 %v1796
        %v1829 = vcvt.s32.f32 %v1797
        %v1830 = vcvt.s32.f32 %v1798
        %v1831 = vcvt.s32.f32 %v1799
        %v1832 = vcvt.s32.f32 %v1800
        %v1833 = vcvt.s32.f32 %v1801
        %v1834 = vcvt.s32.f32 %v1802
        %v1835 = vcvt.s32.f32 %v1803
        %p1836 = scmp.eq.s32.totalorder %s29, 1
        // Predicated region
        $region76: #{simclr_forward.4} parent=66 // pred_check
          %p1837 = pneg %p1836
        $region77: #{simclr_forward.4} parent=66 // pred_check_branch
          %1839 = sbr.rel (%p1837) target = $region79
        $region78: #{simclr_forward.4} parent=66 // pred_region
          %v1840 = vld [vmem:[#allocation2] sm:$0xff]
          %v1841 = vld [vmem:[#allocation2 + $0x8] sm:$0xff]
          %v1842 = vld [vmem:[#allocation2 + $0x10] sm:$0xff]
          %v1843 = vld [vmem:[#allocation2 + $0x18] sm:$0xff]
          %v1844 = vld [vmem:[#allocation2 + $0x20] sm:$0xff]
          %v1845 = vld [vmem:[#allocation2 + $0x28] sm:$0xff]
          %v1846 = vld [vmem:[#allocation2 + $0x30] sm:$0xff]
          %v1847 = vld [vmem:[#allocation2 + $0x38] sm:$0xff]
          %v1848 = vld [vmem:[#allocation2 + $0x40] sm:$0xff]
          %v1849 = vld [vmem:[#allocation2 + $0x48] sm:$0xff]
          %v1850 = vld [vmem:[#allocation2 + $0x50] sm:$0xff]
          %v1851 = vld [vmem:[#allocation2 + $0x58] sm:$0xff]
          %v1852 = vld [vmem:[#allocation2 + $0x60] sm:$0xff]
          %v1853 = vld [vmem:[#allocation2 + $0x68] sm:$0xff]
          %v1854 = vld [vmem:[#allocation2 + $0x70] sm:$0xff]
          %v1855 = vld [vmem:[#allocation2 + $0x78] sm:$0xff]
          %v1856 = vld [vmem:[#allocation2 + $0x80] sm:$0xff]
          %v1857 = vld [vmem:[#allocation2 + $0x88] sm:$0xff]
          %v1858 = vld [vmem:[#allocation2 + $0x90] sm:$0xff]
          %v1859 = vld [vmem:[#allocation2 + $0x98] sm:$0xff]
          %v1860 = vld [vmem:[#allocation2 + $0xa0] sm:$0xff]
          %v1861 = vld [vmem:[#allocation2 + $0xa8] sm:$0xff]
          %v1862 = vld [vmem:[#allocation2 + $0xb0] sm:$0xff]
          %v1863 = vld [vmem:[#allocation2 + $0xb8] sm:$0xff]
          %v1864 = vld [vmem:[#allocation2 + $0xc0] sm:$0xff]
          %v1865 = vld [vmem:[#allocation2 + $0xc8] sm:$0xff]
          %v1866 = vld [vmem:[#allocation2 + $0xd0] sm:$0xff]
          %v1867 = vld [vmem:[#allocation2 + $0xd8] sm:$0xff]
          %v1868 = vld [vmem:[#allocation2 + $0xe0] sm:$0xff]
          %v1869 = vld [vmem:[#allocation2 + $0xe8] sm:$0xff]
          %v1870 = vld [vmem:[#allocation2 + $0xf0] sm:$0xff]
          %v1871 = vld [vmem:[#allocation2 + $0xf8] sm:$0xff]
          %v1872 = vpack.c.bf16 %v1841, %v1840
          %v1873 = vpack.c.bf16 %v1843, %v1842
          %v1874 = vpack.c.bf16 %v1845, %v1844
          %v1875 = vpack.c.bf16 %v1847, %v1846
          %v1876 = vpack.c.bf16 %v1849, %v1848
          %v1877 = vpack.c.bf16 %v1851, %v1850
          %v1878 = vpack.c.bf16 %v1853, %v1852
          %v1879 = vpack.c.bf16 %v1855, %v1854
          %v1880 = vpack.c.bf16 %v1857, %v1856
          %v1881 = vpack.c.bf16 %v1859, %v1858
          %v1882 = vpack.c.bf16 %v1861, %v1860
          %v1883 = vpack.c.bf16 %v1863, %v1862
          %v1884 = vpack.c.bf16 %v1865, %v1864
          %v1885 = vpack.c.bf16 %v1867, %v1866
          %v1886 = vpack.c.bf16 %v1869, %v1868
          %v1887 = vpack.c.bf16 %v1871, %v1870
          %v1888 = vld [vmem:[%s3] sm:$0xf]
          %v1889 = vld [vmem:[%s3 + $0x4] sm:$0xf]
          %v1890 = vld [vmem:[%s3 + $0x8] sm:$0xf]
          %v1891 = vld [vmem:[%s3 + $0xc] sm:$0xf]
          %v1892 = vld [vmem:[%s3 + $0x10] sm:$0xf]
          %v1893 = vld [vmem:[%s3 + $0x14] sm:$0xf]
          %v1894 = vld [vmem:[%s3 + $0x18] sm:$0xf]
          %v1895 = vld [vmem:[%s3 + $0x1c] sm:$0xf]
          %v1896 = vld [vmem:[%s3 + $0x20] sm:$0xf]
          %v1897 = vld [vmem:[%s3 + $0x24] sm:$0xf]
          %v1898 = vld [vmem:[%s3 + $0x28] sm:$0xf]
          %v1899 = vld [vmem:[%s3 + $0x2c] sm:$0xf]
          %v1900 = vld [vmem:[%s3 + $0x30] sm:$0xf]
          %v1901 = vld [vmem:[%s3 + $0x34] sm:$0xf]
          %v1902 = vld [vmem:[%s3 + $0x38] sm:$0xf]
          %v1903 = vld [vmem:[%s3 + $0x3c] sm:$0xf]
          %v1904 = vld [vmem:[%s4] sm:$0x1]
          %v1906 = vperm.slane %v1904, 0
          %v1924 = vunpack.c.l.b16 %v1888
          %v1925 = vunpack.c.l.b16 %v1889
          %v1926 = vunpack.c.l.b16 %v1890
          %v1927 = vunpack.c.l.b16 %v1891
          %v1928 = vunpack.c.l.b16 %v1892
          %v1929 = vunpack.c.l.b16 %v1893
          %v1930 = vunpack.c.l.b16 %v1894
          %v1931 = vunpack.c.l.b16 %v1895
          %v1932 = vunpack.c.l.b16 %v1896
          %v1933 = vunpack.c.l.b16 %v1897
          %v1934 = vunpack.c.l.b16 %v1898
          %v1935 = vunpack.c.l.b16 %v1899
          %v1936 = vunpack.c.l.b16 %v1900
          %v1937 = vunpack.c.l.b16 %v1901
          %v1938 = vunpack.c.l.b16 %v1902
          %v1939 = vunpack.c.l.b16 %v1903
          %v1940 = vpack.c.b16 %v1925, %v1924
          %v1941 = vpack.c.b16 %v1927, %v1926
          %v1942 = vpack.c.b16 %v1929, %v1928
          %v1943 = vpack.c.b16 %v1931, %v1930
          %v1944 = vpack.c.b16 %v1933, %v1932
          %v1945 = vpack.c.b16 %v1935, %v1934
          %v1946 = vpack.c.b16 %v1937, %v1936
          %v1947 = vpack.c.b16 %v1939, %v1938
          %1956 = vmatpush.bf16.msra.mxu0 %v1947
          %1957 = vmatpush.bf16.msra.mxu0 %v1946
          %1958 = vmatpush.bf16.msra.mxu0 %v1945
          %1959 = vmatpush.bf16.msra.mxu0 %v1944
          %1960 = vmatpush.bf16.msra.mxu0 %v1943
          %1961 = vmatpush.bf16.msra.mxu0 %v1942
          %1962 = vmatpush.bf16.msra.mxu0 %v1941
          %1963 = vmatpush.bf16.msra.mxu0 %v1940
          %1964 = vmatmul.bf16.gmra.mxu0 %v1872
          %v1965 = vpop.f32.mrf.mxu0
          %v1966 = vadd.f32 %v1906, %v1965
          %v1967 = vpop.f32.mrf.mxu0
          %v1968 = vadd.f32 %v1906, %v1967
          %1969 = vmatmul.bf16.gmra.mxu0 %v1873
          %v1970 = vpop.f32.mrf.mxu0
          %v1971 = vadd.f32 %v1906, %v1970
          %v1972 = vpop.f32.mrf.mxu0
          %v1973 = vadd.f32 %v1906, %v1972
          %1974 = vmatmul.bf16.gmra.mxu0 %v1874
          %v1975 = vpop.f32.mrf.mxu0
          %v1976 = vadd.f32 %v1906, %v1975
          %v1977 = vpop.f32.mrf.mxu0
          %v1978 = vadd.f32 %v1906, %v1977
          %1979 = vmatmul.bf16.gmra.mxu0 %v1875
          %v1980 = vpop.f32.mrf.mxu0
          %v1981 = vadd.f32 %v1906, %v1980
          %v1982 = vpop.f32.mrf.mxu0
          %v1983 = vadd.f32 %v1906, %v1982
          %1984 = vmatmul.bf16.gmra.mxu0 %v1876
          %v1985 = vpop.f32.mrf.mxu0
          %v1986 = vadd.f32 %v1906, %v1985
          %v1987 = vpop.f32.mrf.mxu0
          %v1988 = vadd.f32 %v1906, %v1987
          %1989 = vmatmul.bf16.gmra.mxu0 %v1877
          %v1990 = vpop.f32.mrf.mxu0
          %v1991 = vadd.f32 %v1906, %v1990
          %v1992 = vpop.f32.mrf.mxu0
          %v1993 = vadd.f32 %v1906, %v1992
          %1994 = vmatmul.bf16.gmra.mxu0 %v1878
          %v1995 = vpop.f32.mrf.mxu0
          %v1996 = vadd.f32 %v1906, %v1995
          %v1997 = vpop.f32.mrf.mxu0
          %v1998 = vadd.f32 %v1906, %v1997
          %1999 = vmatmul.bf16.gmra.mxu0 %v1879
          %v2000 = vpop.f32.mrf.mxu0
          %v2001 = vadd.f32 %v1906, %v2000
          %v2002 = vpop.f32.mrf.mxu0
          %v2003 = vadd.f32 %v1906, %v2002
          %2004 = vmatmul.bf16.gmra.mxu0 %v1880
          %v2005 = vpop.f32.mrf.mxu0
          %v2006 = vadd.f32 %v1906, %v2005
          %v2007 = vpop.f32.mrf.mxu0
          %v2008 = vadd.f32 %v1906, %v2007
          %2009 = vmatmul.bf16.gmra.mxu0 %v1881
          %v2010 = vpop.f32.mrf.mxu0
          %v2011 = vadd.f32 %v1906, %v2010
          %v2012 = vpop.f32.mrf.mxu0
          %v2013 = vadd.f32 %v1906, %v2012
          %2014 = vmatmul.bf16.gmra.mxu0 %v1882
          %v2015 = vpop.f32.mrf.mxu0
          %v2016 = vadd.f32 %v1906, %v2015
          %v2017 = vpop.f32.mrf.mxu0
          %v2018 = vadd.f32 %v1906, %v2017
          %2019 = vmatmul.bf16.gmra.mxu0 %v1883
          %v2020 = vpop.f32.mrf.mxu0
          %v2021 = vadd.f32 %v1906, %v2020
          %v2022 = vpop.f32.mrf.mxu0
          %v2023 = vadd.f32 %v1906, %v2022
          %2024 = vmatmul.bf16.gmra.mxu0 %v1884
          %v2025 = vpop.f32.mrf.mxu0
          %v2026 = vadd.f32 %v1906, %v2025
          %v2027 = vpop.f32.mrf.mxu0
          %v2028 = vadd.f32 %v1906, %v2027
          %2029 = vmatmul.bf16.gmra.mxu0 %v1885
          %v2030 = vpop.f32.mrf.mxu0
          %v2031 = vadd.f32 %v1906, %v2030
          %v2032 = vpop.f32.mrf.mxu0
          %v2033 = vadd.f32 %v1906, %v2032
          %2034 = vmatmul.bf16.gmra.mxu0 %v1886
          %v2035 = vpop.f32.mrf.mxu0
          %v2036 = vadd.f32 %v1906, %v2035
          %v2037 = vpop.f32.mrf.mxu0
          %v2038 = vadd.f32 %v1906, %v2037
          %2039 = vmatmul.bf16.gmra.mxu0 %v1887
          %v2040 = vpop.f32.mrf.mxu0
          %v2041 = vadd.f32 %v1906, %v2040
          %v2042 = vpop.f32.mrf.mxu0
          %v2043 = vadd.f32 %v1906, %v2042
          %2044 = vdwg.mxu0
          %v2045 = vmax.f32 %v1966, 0.0
          %v2046 = vmax.f32 %v1968, 0.0
          %v2047 = vmax.f32 %v1971, 0.0
          %v2048 = vmax.f32 %v1973, 0.0
          %v2049 = vmax.f32 %v1976, 0.0
          %v2050 = vmax.f32 %v1978, 0.0
          %v2051 = vmax.f32 %v1981, 0.0
          %v2052 = vmax.f32 %v1983, 0.0
          %v2053 = vmax.f32 %v1986, 0.0
          %v2054 = vmax.f32 %v1988, 0.0
          %v2055 = vmax.f32 %v1991, 0.0
          %v2056 = vmax.f32 %v1993, 0.0
          %v2057 = vmax.f32 %v1996, 0.0
          %v2058 = vmax.f32 %v1998, 0.0
          %v2059 = vmax.f32 %v2001, 0.0
          %v2060 = vmax.f32 %v2003, 0.0
          %v2061 = vmax.f32 %v2006, 0.0
          %v2062 = vmax.f32 %v2008, 0.0
          %v2063 = vmax.f32 %v2011, 0.0
          %v2064 = vmax.f32 %v2013, 0.0
          %v2065 = vmax.f32 %v2016, 0.0
          %v2066 = vmax.f32 %v2018, 0.0
          %v2067 = vmax.f32 %v2021, 0.0
          %v2068 = vmax.f32 %v2023, 0.0
          %v2069 = vmax.f32 %v2026, 0.0
          %v2070 = vmax.f32 %v2028, 0.0
          %v2071 = vmax.f32 %v2031, 0.0
          %v2072 = vmax.f32 %v2033, 0.0
          %v2073 = vmax.f32 %v2036, 0.0
          %v2074 = vmax.f32 %v2038, 0.0
          %v2075 = vmax.f32 %v2041, 0.0
          %v2076 = vmax.f32 %v2043, 0.0
          %v2077 = vpack.c.bf16 %v2046, %v2045
          %v2078 = vpack.c.bf16 %v2048, %v2047
          %v2079 = vpack.c.bf16 %v2050, %v2049
          %v2080 = vpack.c.bf16 %v2052, %v2051
          %v2081 = vpack.c.bf16 %v2054, %v2053
          %v2082 = vpack.c.bf16 %v2056, %v2055
          %v2083 = vpack.c.bf16 %v2058, %v2057
          %v2084 = vpack.c.bf16 %v2060, %v2059
          %v2085 = vpack.c.bf16 %v2062, %v2061
          %v2086 = vpack.c.bf16 %v2064, %v2063
          %v2087 = vpack.c.bf16 %v2066, %v2065
          %v2088 = vpack.c.bf16 %v2068, %v2067
          %v2089 = vpack.c.bf16 %v2070, %v2069
          %v2090 = vpack.c.bf16 %v2072, %v2071
          %v2091 = vpack.c.bf16 %v2074, %v2073
          %v2092 = vpack.c.bf16 %v2076, %v2075
          %v2093 = vld [vmem:[%s5] sm:$0xf]
          %v2094 = vld [vmem:[%s5 + $0x4] sm:$0xf]
          %v2095 = vld [vmem:[%s5 + $0x8] sm:$0xf]
          %v2096 = vld [vmem:[%s5 + $0xc] sm:$0xf]
          %v2097 = vld [vmem:[%s5 + $0x10] sm:$0xf]
          %v2098 = vld [vmem:[%s5 + $0x14] sm:$0xf]
          %v2099 = vld [vmem:[%s5 + $0x18] sm:$0xf]
          %v2100 = vld [vmem:[%s5 + $0x1c] sm:$0xf]
          %v2101 = vld [vmem:[%s5 + $0x20] sm:$0xf]
          %v2102 = vld [vmem:[%s5 + $0x24] sm:$0xf]
          %v2103 = vld [vmem:[%s5 + $0x28] sm:$0xf]
          %v2104 = vld [vmem:[%s5 + $0x2c] sm:$0xf]
          %v2105 = vld [vmem:[%s5 + $0x30] sm:$0xf]
          %v2106 = vld [vmem:[%s5 + $0x34] sm:$0xf]
          %v2107 = vld [vmem:[%s5 + $0x38] sm:$0xf]
          %v2108 = vld [vmem:[%s5 + $0x3c] sm:$0xf]
          %v2109 = vld [vmem:[%s6] sm:$0x1]
          %v2111 = vperm.slane %v2109, 0
          %v2129 = vunpack.c.l.b16 %v2093
          %v2130 = vunpack.c.l.b16 %v2094
          %v2131 = vunpack.c.l.b16 %v2095
          %v2132 = vunpack.c.l.b16 %v2096
          %v2133 = vunpack.c.l.b16 %v2097
          %v2134 = vunpack.c.l.b16 %v2098
          %v2135 = vunpack.c.l.b16 %v2099
          %v2136 = vunpack.c.l.b16 %v2100
          %v2137 = vunpack.c.l.b16 %v2101
          %v2138 = vunpack.c.l.b16 %v2102
          %v2139 = vunpack.c.l.b16 %v2103
          %v2140 = vunpack.c.l.b16 %v2104
          %v2141 = vunpack.c.l.b16 %v2105
          %v2142 = vunpack.c.l.b16 %v2106
          %v2143 = vunpack.c.l.b16 %v2107
          %v2144 = vunpack.c.l.b16 %v2108
          %v2145 = vpack.c.b16 %v2130, %v2129
          %v2146 = vpack.c.b16 %v2132, %v2131
          %v2147 = vpack.c.b16 %v2134, %v2133
          %v2148 = vpack.c.b16 %v2136, %v2135
          %v2149 = vpack.c.b16 %v2138, %v2137
          %v2150 = vpack.c.b16 %v2140, %v2139
          %v2151 = vpack.c.b16 %v2142, %v2141
          %v2152 = vpack.c.b16 %v2144, %v2143
          %2161 = vmatpush.bf16.msra.mxu0 %v2152
          %2162 = vmatpush.bf16.msra.mxu0 %v2151
          %2163 = vmatpush.bf16.msra.mxu0 %v2150
          %2164 = vmatpush.bf16.msra.mxu0 %v2149
          %2165 = vmatpush.bf16.msra.mxu0 %v2148
          %2166 = vmatpush.bf16.msra.mxu0 %v2147
          %2167 = vmatpush.bf16.msra.mxu0 %v2146
          %2168 = vmatpush.bf16.msra.mxu0 %v2145
          %2169 = vmatmul.bf16.gmra.mxu0 %v2077
          %v2170 = vpop.f32.mrf.mxu0
          %v2171 = vadd.f32 %v2111, %v2170
          %v2172 = vpop.f32.mrf.mxu0
          %v2173 = vadd.f32 %v2111, %v2172
          %2174 = vmatmul.bf16.gmra.mxu0 %v2078
          %v2175 = vpop.f32.mrf.mxu0
          %v2176 = vadd.f32 %v2111, %v2175
          %v2177 = vpop.f32.mrf.mxu0
          %v2178 = vadd.f32 %v2111, %v2177
          %2179 = vmatmul.bf16.gmra.mxu0 %v2079
          %v2180 = vpop.f32.mrf.mxu0
          %v2181 = vadd.f32 %v2111, %v2180
          %v2182 = vpop.f32.mrf.mxu0
          %v2183 = vadd.f32 %v2111, %v2182
          %2184 = vmatmul.bf16.gmra.mxu0 %v2080
          %v2185 = vpop.f32.mrf.mxu0
          %v2186 = vadd.f32 %v2111, %v2185
          %v2187 = vpop.f32.mrf.mxu0
          %v2188 = vadd.f32 %v2111, %v2187
          %2189 = vmatmul.bf16.gmra.mxu0 %v2081
          %v2190 = vpop.f32.mrf.mxu0
          %v2191 = vadd.f32 %v2111, %v2190
          %v2192 = vpop.f32.mrf.mxu0
          %v2193 = vadd.f32 %v2111, %v2192
          %2194 = vmatmul.bf16.gmra.mxu0 %v2082
          %v2195 = vpop.f32.mrf.mxu0
          %v2196 = vadd.f32 %v2111, %v2195
          %v2197 = vpop.f32.mrf.mxu0
          %v2198 = vadd.f32 %v2111, %v2197
          %2199 = vmatmul.bf16.gmra.mxu0 %v2083
          %v2200 = vpop.f32.mrf.mxu0
          %v2201 = vadd.f32 %v2111, %v2200
          %v2202 = vpop.f32.mrf.mxu0
          %v2203 = vadd.f32 %v2111, %v2202
          %2204 = vmatmul.bf16.gmra.mxu0 %v2084
          %v2205 = vpop.f32.mrf.mxu0
          %v2206 = vadd.f32 %v2111, %v2205
          %v2207 = vpop.f32.mrf.mxu0
          %v2208 = vadd.f32 %v2111, %v2207
          %2209 = vmatmul.bf16.gmra.mxu0 %v2085
          %v2210 = vpop.f32.mrf.mxu0
          %v2211 = vadd.f32 %v2111, %v2210
          %v2212 = vpop.f32.mrf.mxu0
          %v2213 = vadd.f32 %v2111, %v2212
          %2214 = vmatmul.bf16.gmra.mxu0 %v2086
          %v2215 = vpop.f32.mrf.mxu0
          %v2216 = vadd.f32 %v2111, %v2215
          %v2217 = vpop.f32.mrf.mxu0
          %v2218 = vadd.f32 %v2111, %v2217
          %2219 = vmatmul.bf16.gmra.mxu0 %v2087
          %v2220 = vpop.f32.mrf.mxu0
          %v2221 = vadd.f32 %v2111, %v2220
          %v2222 = vpop.f32.mrf.mxu0
          %v2223 = vadd.f32 %v2111, %v2222
          %2224 = vmatmul.bf16.gmra.mxu0 %v2088
          %v2225 = vpop.f32.mrf.mxu0
          %v2226 = vadd.f32 %v2111, %v2225
          %v2227 = vpop.f32.mrf.mxu0
          %v2228 = vadd.f32 %v2111, %v2227
          %2229 = vmatmul.bf16.gmra.mxu0 %v2089
          %v2230 = vpop.f32.mrf.mxu0
          %v2231 = vadd.f32 %v2111, %v2230
          %v2232 = vpop.f32.mrf.mxu0
          %v2233 = vadd.f32 %v2111, %v2232
          %2234 = vmatmul.bf16.gmra.mxu0 %v2090
          %v2235 = vpop.f32.mrf.mxu0
          %v2236 = vadd.f32 %v2111, %v2235
          %v2237 = vpop.f32.mrf.mxu0
          %v2238 = vadd.f32 %v2111, %v2237
          %2239 = vmatmul.bf16.gmra.mxu0 %v2091
          %v2240 = vpop.f32.mrf.mxu0
          %v2241 = vadd.f32 %v2111, %v2240
          %v2242 = vpop.f32.mrf.mxu0
          %v2243 = vadd.f32 %v2111, %v2242
          %2244 = vmatmul.bf16.gmra.mxu0 %v2092
          %v2245 = vpop.f32.mrf.mxu0
          %v2246 = vadd.f32 %v2111, %v2245
          %v2247 = vpop.f32.mrf.mxu0
          %v2248 = vadd.f32 %v2111, %v2247
          %2249 = vdwg.mxu0
          %v2250 = vmax.f32 %v2171, 0.0
          %v2251 = vmax.f32 %v2173, 0.0
          %v2252 = vmax.f32 %v2176, 0.0
          %v2253 = vmax.f32 %v2178, 0.0
          %v2254 = vmax.f32 %v2181, 0.0
          %v2255 = vmax.f32 %v2183, 0.0
          %v2256 = vmax.f32 %v2186, 0.0
          %v2257 = vmax.f32 %v2188, 0.0
          %v2258 = vmax.f32 %v2191, 0.0
          %v2259 = vmax.f32 %v2193, 0.0
          %v2260 = vmax.f32 %v2196, 0.0
          %v2261 = vmax.f32 %v2198, 0.0
          %v2262 = vmax.f32 %v2201, 0.0
          %v2263 = vmax.f32 %v2203, 0.0
          %v2264 = vmax.f32 %v2206, 0.0
          %v2265 = vmax.f32 %v2208, 0.0
          %v2266 = vmax.f32 %v2211, 0.0
          %v2267 = vmax.f32 %v2213, 0.0
          %v2268 = vmax.f32 %v2216, 0.0
          %v2269 = vmax.f32 %v2218, 0.0
          %v2270 = vmax.f32 %v2221, 0.0
          %v2271 = vmax.f32 %v2223, 0.0
          %v2272 = vmax.f32 %v2226, 0.0
          %v2273 = vmax.f32 %v2228, 0.0
          %v2274 = vmax.f32 %v2231, 0.0
          %v2275 = vmax.f32 %v2233, 0.0
          %v2276 = vmax.f32 %v2236, 0.0
          %v2277 = vmax.f32 %v2238, 0.0
          %v2278 = vmax.f32 %v2241, 0.0
          %v2279 = vmax.f32 %v2243, 0.0
          %v2280 = vmax.f32 %v2246, 0.0
          %v2281 = vmax.f32 %v2248, 0.0
          %2282 = vst [vmem:[%s510] sm:$0xff] %v2250
          %2283 = vst [vmem:[%s510 + $0x8] sm:$0xff] %v2251
          %2284 = vst [vmem:[%s510 + $0x10] sm:$0xff] %v2252
          %2285 = vst [vmem:[%s510 + $0x18] sm:$0xff] %v2253
          %2286 = vst [vmem:[%s510 + $0x20] sm:$0xff] %v2254
          %2287 = vst [vmem:[%s510 + $0x28] sm:$0xff] %v2255
          %2288 = vst [vmem:[%s510 + $0x30] sm:$0xff] %v2256
          %2289 = vst [vmem:[%s510 + $0x38] sm:$0xff] %v2257
          %2290 = vst [vmem:[%s510 + $0x40] sm:$0xff] %v2258
          %2291 = vst [vmem:[%s510 + $0x48] sm:$0xff] %v2259
          %2292 = vst [vmem:[%s510 + $0x50] sm:$0xff] %v2260
          %2293 = vst [vmem:[%s510 + $0x58] sm:$0xff] %v2261
          %2294 = vst [vmem:[%s510 + $0x60] sm:$0xff] %v2262
          %2295 = vst [vmem:[%s510 + $0x68] sm:$0xff] %v2263
          %2296 = vst [vmem:[%s510 + $0x70] sm:$0xff] %v2264
          %2297 = vst [vmem:[%s510 + $0x78] sm:$0xff] %v2265
          %2298 = vst [vmem:[%s510 + $0x80] sm:$0xff] %v2266
          %2299 = vst [vmem:[%s510 + $0x88] sm:$0xff] %v2267
          %2300 = vst [vmem:[%s510 + $0x90] sm:$0xff] %v2268
          %2301 = vst [vmem:[%s510 + $0x98] sm:$0xff] %v2269
          %2302 = vst [vmem:[%s510 + $0xa0] sm:$0xff] %v2270
          %2303 = vst [vmem:[%s510 + $0xa8] sm:$0xff] %v2271
          %2304 = vst [vmem:[%s510 + $0xb0] sm:$0xff] %v2272
          %2305 = vst [vmem:[%s510 + $0xb8] sm:$0xff] %v2273
          %2306 = vst [vmem:[%s510 + $0xc0] sm:$0xff] %v2274
          %2307 = vst [vmem:[%s510 + $0xc8] sm:$0xff] %v2275
          %2308 = vst [vmem:[%s510 + $0xd0] sm:$0xff] %v2276
          %2309 = vst [vmem:[%s510 + $0xd8] sm:$0xff] %v2277
          %2310 = vst [vmem:[%s510 + $0xe0] sm:$0xff] %v2278
          %2311 = vst [vmem:[%s510 + $0xe8] sm:$0xff] %v2279
          %2312 = vst [vmem:[%s510 + $0xf0] sm:$0xff] %v2280
          %2313 = vst [vmem:[%s510 + $0xf8] sm:$0xff] %v2281
          %v2314 = vmul.f32 %v2250, %v1804
          %v2315 = vmul.f32 %v2251, %v1805
          %v2316 = vmul.f32 %v2252, %v1806
          %v2317 = vmul.f32 %v2253, %v1807
          %v2318 = vmul.f32 %v2254, %v1808
          %v2319 = vmul.f32 %v2255, %v1809
          %v2320 = vmul.f32 %v2256, %v1810
          %v2321 = vmul.f32 %v2257, %v1811
          %v2322 = vmul.f32 %v2258, %v1812
          %v2323 = vmul.f32 %v2259, %v1813
          %v2324 = vmul.f32 %v2260, %v1814
          %v2325 = vmul.f32 %v2261, %v1815
          %v2326 = vmul.f32 %v2262, %v1816
          %v2327 = vmul.f32 %v2263, %v1817
          %v2328 = vmul.f32 %v2264, %v1818
          %v2329 = vmul.f32 %v2265, %v1819
          %v2330 = vmul.f32 %v2266, %v1820
          %v2331 = vmul.f32 %v2267, %v1821
          %v2332 = vmul.f32 %v2268, %v1822
          %v2333 = vmul.f32 %v2269, %v1823
          %v2334 = vmul.f32 %v2270, %v1824
          %v2335 = vmul.f32 %v2271, %v1825
          %v2336 = vmul.f32 %v2272, %v1826
          %v2337 = vmul.f32 %v2273, %v1827
          %v2338 = vmul.f32 %v2274, %v1828
          %v2339 = vmul.f32 %v2275, %v1829
          %v2340 = vmul.f32 %v2276, %v1830
          %v2341 = vmul.f32 %v2277, %v1831
          %v2342 = vmul.f32 %v2278, %v1832
          %v2343 = vmul.f32 %v2279, %v1833
          %v2344 = vmul.f32 %v2280, %v1834
          %v2345 = vmul.f32 %v2281, %v1835
          %v2346 = vadd.f32 %v2314, %v2315
          %v2347 = vadd.f32 %v2346, %v2316
          %v2348 = vadd.f32 %v2347, %v2317
          %v2349 = vadd.f32 %v2348, %v2318
          %v2350 = vadd.f32 %v2349, %v2319
          %v2351 = vadd.f32 %v2350, %v2320
          %v2352 = vadd.f32 %v2351, %v2321
          %v2353 = vadd.f32 %v2352, %v2322
          %v2354 = vadd.f32 %v2353, %v2323
          %v2355 = vadd.f32 %v2354, %v2324
          %v2356 = vadd.f32 %v2355, %v2325
          %v2357 = vadd.f32 %v2356, %v2326
          %v2358 = vadd.f32 %v2357, %v2327
          %v2359 = vadd.f32 %v2358, %v2328
          %v2360 = vadd.f32 %v2359, %v2329
          %v2361 = vadd.f32 %v2360, %v2330
          %v2362 = vadd.f32 %v2361, %v2331
          %v2363 = vadd.f32 %v2362, %v2332
          %v2364 = vadd.f32 %v2363, %v2333
          %v2365 = vadd.f32 %v2364, %v2334
          %v2366 = vadd.f32 %v2365, %v2335
          %v2367 = vadd.f32 %v2366, %v2336
          %v2368 = vadd.f32 %v2367, %v2337
          %v2369 = vadd.f32 %v2368, %v2338
          %v2370 = vadd.f32 %v2369, %v2339
          %v2371 = vadd.f32 %v2370, %v2340
          %v2372 = vadd.f32 %v2371, %v2341
          %v2373 = vadd.f32 %v2372, %v2342
          %v2374 = vadd.f32 %v2373, %v2343
          %v2375 = vadd.f32 %v2374, %v2344
          %v2376 = vadd.f32 %v2375, %v2345
          %v2377 = vrot.slane %v2376, 4
          %v2378 = vadd.f32 %v2376, %v2377
          %v2379 = vrot.slane %v2378, 2
          %v2380 = vadd.f32 %v2378, %v2379
          %v2381 = vrot.slane %v2380, 1
          %v2382 = vadd.f32 %v2380, %v2381
          %v2383 = vmul.f32 %v2314, %v2314
          %v2384 = vmul.f32 %v2315, %v2315
          %v2385 = vmul.f32 %v2316, %v2316
          %v2386 = vmul.f32 %v2317, %v2317
          %v2387 = vmul.f32 %v2318, %v2318
          %v2388 = vmul.f32 %v2319, %v2319
          %v2389 = vmul.f32 %v2320, %v2320
          %v2390 = vmul.f32 %v2321, %v2321
          %v2391 = vmul.f32 %v2322, %v2322
          %v2392 = vmul.f32 %v2323, %v2323
          %v2393 = vmul.f32 %v2324, %v2324
          %v2394 = vmul.f32 %v2325, %v2325
          %v2395 = vmul.f32 %v2326, %v2326
          %v2396 = vmul.f32 %v2327, %v2327
          %v2397 = vmul.f32 %v2328, %v2328
          %v2398 = vmul.f32 %v2329, %v2329
          %v2399 = vmul.f32 %v2330, %v2330
          %v2400 = vmul.f32 %v2331, %v2331
          %v2401 = vmul.f32 %v2332, %v2332
          %v2402 = vmul.f32 %v2333, %v2333
          %v2403 = vmul.f32 %v2334, %v2334
          %v2404 = vmul.f32 %v2335, %v2335
          %v2405 = vmul.f32 %v2336, %v2336
          %v2406 = vmul.f32 %v2337, %v2337
          %v2407 = vmul.f32 %v2338, %v2338
          %v2408 = vmul.f32 %v2339, %v2339
          %v2409 = vmul.f32 %v2340, %v2340
          %v2410 = vmul.f32 %v2341, %v2341
          %v2411 = vmul.f32 %v2342, %v2342
          %v2412 = vmul.f32 %v2343, %v2343
          %v2413 = vmul.f32 %v2344, %v2344
          %v2414 = vmul.f32 %v2345, %v2345
          %v2415 = vadd.f32 %v2383, %v2384
          %v2416 = vadd.f32 %v2415, %v2385
          %v2417 = vadd.f32 %v2416, %v2386
          %v2418 = vadd.f32 %v2417, %v2387
          %v2419 = vadd.f32 %v2418, %v2388
          %v2420 = vadd.f32 %v2419, %v2389
          %v2421 = vadd.f32 %v2420, %v2390
          %v2422 = vadd.f32 %v2421, %v2391
          %v2423 = vadd.f32 %v2422, %v2392
          %v2424 = vadd.f32 %v2423, %v2393
          %v2425 = vadd.f32 %v2424, %v2394
          %v2426 = vadd.f32 %v2425, %v2395
          %v2427 = vadd.f32 %v2426, %v2396
          %v2428 = vadd.f32 %v2427, %v2397
          %v2429 = vadd.f32 %v2428, %v2398
          %v2430 = vadd.f32 %v2429, %v2399
          %v2431 = vadd.f32 %v2430, %v2400
          %v2432 = vadd.f32 %v2431, %v2401
          %v2433 = vadd.f32 %v2432, %v2402
          %v2434 = vadd.f32 %v2433, %v2403
          %v2435 = vadd.f32 %v2434, %v2404
          %v2436 = vadd.f32 %v2435, %v2405
          %v2437 = vadd.f32 %v2436, %v2406
          %v2438 = vadd.f32 %v2437, %v2407
          %v2439 = vadd.f32 %v2438, %v2408
          %v2440 = vadd.f32 %v2439, %v2409
          %v2441 = vadd.f32 %v2440, %v2410
          %v2442 = vadd.f32 %v2441, %v2411
          %v2443 = vadd.f32 %v2442, %v2412
          %v2444 = vadd.f32 %v2443, %v2413
          %v2445 = vadd.f32 %v2444, %v2414
          %v2446 = vrot.slane %v2445, 4
          %v2447 = vadd.f32 %v2445, %v2446
          %v2448 = vrot.slane %v2447, 2
          %v2449 = vadd.f32 %v2447, %v2448
          %v2450 = vrot.slane %v2449, 1
          %v2451 = vadd.f32 %v2449, %v2450
          %vm2452 = vcmask 1040384
          %v2453 = vsel %vm2452, %v2382, %v2451
          %2454 = vst [vmem:[%s535] sm:$0x3] %v2453
          %v2455 = vld [vmem:[%s529] sm:$0xff]
          %v2456 = vpack.c.bf16 %v2251, %v2250
          %v2457 = vpack.c.bf16 %v2253, %v2252
          %v2458 = vpack.c.bf16 %v2255, %v2254
          %v2459 = vpack.c.bf16 %v2257, %v2256
          %v2460 = vpack.c.bf16 %v2259, %v2258
          %v2461 = vpack.c.bf16 %v2261, %v2260
          %v2462 = vpack.c.bf16 %v2263, %v2262
          %v2463 = vpack.c.bf16 %v2265, %v2264
          %v2464 = vpack.c.bf16 %v2267, %v2266
          %v2465 = vpack.c.bf16 %v2269, %v2268
          %v2466 = vpack.c.bf16 %v2271, %v2270
          %v2467 = vpack.c.bf16 %v2273, %v2272
          %v2468 = vpack.c.bf16 %v2275, %v2274
          %v2469 = vpack.c.bf16 %v2277, %v2276
          %v2470 = vpack.c.bf16 %v2279, %v2278
          %v2471 = vpack.c.bf16 %v2281, %v2280
          %v2473 = vunpack.c.l.b16 %v2455
          %v2474 = vunpack.c.h.b16 %v2455
          %v2475 = vpack.c.b16 %v2473, %v2473
          %v2476 = vpack.c.b16 %v2474, %v2474
          %2479 = vmatpush.bf16.msra.mxu0 %v2463
          %2480 = vmatpush.bf16.msra.mxu0 %v2462
          %2481 = vmatpush.bf16.msra.mxu0 %v2461
          %2482 = vmatpush.bf16.msra.mxu0 %v2460
          %2483 = vmatpush.bf16.msra.mxu0 %v2459
          %2484 = vmatpush.bf16.msra.mxu0 %v2458
          %2485 = vmatpush.bf16.msra.mxu0 %v2457
          %2486 = vmatpush.bf16.msra.mxu0 %v2456
          %2487 = vmatmul.bf16.gmra.mxu0 %v2475
          %v2488 = vpop.f32.mrf.mxu0
          %v2489 = vadd.f32 0.0, %v2488
          %v2490 = vpop.f32.mrf.mxu0
          %2491 = vdwg.mxu0
          %2492 = vmatpush.bf16.msra.mxu0 %v2471
          %2493 = vmatpush.bf16.msra.mxu0 %v2470
          %2494 = vmatpush.bf16.msra.mxu0 %v2469
          %2495 = vmatpush.bf16.msra.mxu0 %v2468
          %2496 = vmatpush.bf16.msra.mxu0 %v2467
          %2497 = vmatpush.bf16.msra.mxu0 %v2466
          %2498 = vmatpush.bf16.msra.mxu0 %v2465
          %2499 = vmatpush.bf16.msra.mxu0 %v2464
          %2500 = vmatmul.bf16.gmra.mxu0 %v2476
          %v2501 = vpop.f32.mrf.mxu0
          %v2502 = vadd.f32 %v2489, %v2501
          %v2503 = vpop.f32.mrf.mxu0
          %2504 = vdwg.mxu0
          %2505 = vst [vmem:[%s539] sm:$0xff] %v2502
        $region79: #{simclr_forward.4} parent=66 // pred_fallthru
          _
        %s2506 = sand.u32 %s203, 1
        %s2507 = scalar_lea.sflag [#allocation5], %s2506
        %s2508 = sand.u32 %s203, 1
        %s2509 = smul.addr %s2508, 256
        %s2510 = scalar_lea.vmem [#allocation4], %s2509
        %p2511 = scmp.lt.s32.totalorder %s28, 3
        %s2512 = scalar_select %p2511, %s28, 3
        %s2513 = smul.addr %s2512, 2
        %s2514 = scalar_lea.vmem %s8, %s2513
        %p2515 = scmp.lt.s32.totalorder %s28, 3
        %s2516 = scalar_select %p2515, %s28, 3
        %s2517 = smul.addr %s2516, 8
        %s2518 = scalar_lea.vmem %s9, %s2517
        // Predicated region
        $region80: #{simclr_forward.4} parent=66 // pred_check
          %p2519 = pneg %p213
        $region81: #{simclr_forward.4} parent=66 // pred_check_branch
          %2521 = sbr.rel (%p2519) target = $region83
        $region82: #{simclr_forward.4} parent=66 // pred_region
          %s2522 = smul.u32 32, %s28
          %2524 = vsyncadd %s2507, 0
          %s2525 = smul.addr %s2522, 8
          %s2526 = scalar_lea.hbm %s7, %s2525
          %s2527 = sshll.u32 %s2510, 4
          %s2528 = int_to_ptr.vmem [resolvable:$true] %s2527
          %s2529 = sshll.u32 %s2526, 4
          %s2530 = int_to_ptr.hbm [resolvable:$true] %s2529
          %2535 = dma.vmem_to_hbm [thread:$0]  %s2528, 4096, %s2530, %s2507, 128, 128, 8
        $region83: #{simclr_forward.4} parent=66 // pred_fallthru
          _
        // Predicated region
        $region84: #{simclr_forward.4} parent=66 // pred_check
          %p2536 = pneg %p239
        $region85: #{simclr_forward.4} parent=66 // pred_check_branch
          %2538 = sbr.rel (%p2536) target = $region87
        $region86: #{simclr_forward.4} parent=66 // pred_region
          _
        $region87: #{simclr_forward.4} parent=66 // pred_fallthru
          _
        // Predicated region
        $region88: #{simclr_forward.4} parent=66 // pred_check
          %p2539 = pneg %p265
        $region89: #{simclr_forward.4} parent=66 // pred_check_branch
          %2541 = sbr.rel (%p2539) target = $region91
        $region90: #{simclr_forward.4} parent=66 // pred_region
          _
        $region91: #{simclr_forward.4} parent=66 // pred_fallthru
          _
      $region67: #{simclr_forward.4} parent=5 // pred_fallthru
        _
      %p2542 = scmp.le.s32.totalorder 2, %s19
      // Predicated region
      $region92: #{simclr_forward.4} parent=5 // pred_check
        %p2543 = pneg %p2542
      $region93: #{simclr_forward.4} parent=5 // pred_check_branch
        %2545 = sbr.rel (%p2543) target = $region95
      $region94: #{simclr_forward.4} parent=5 // pred_region
        %s2546 = ssub.s32 %s19, 2
        // Predicated region
        $region96: #{simclr_forward.4} parent=94 // pred_check
          %p2547 = pneg %p219
        $region97: #{simclr_forward.4} parent=94 // pred_check_branch
          %2549 = sbr.rel (%p2547) target = $region99
        $region98: #{simclr_forward.4} parent=94 // pred_region
          %s2550 = sand.u32 %s204, 1
          %s2551 = scalar_lea.sflag [#allocation5], %s2550
          %s2552 = sand.u32 %s204, 1
          %s2553 = smul.addr %s2552, 256
          %s2554 = scalar_lea.vmem [#allocation4], %s2553
          %2556 = dma.done %s2551, 4096
        $region99: #{simclr_forward.4} parent=94 // pred_fallthru
          _
        // Predicated region
        $region100: #{simclr_forward.4} parent=94 // pred_check
          %p2557 = pneg %p245
        $region101: #{simclr_forward.4} parent=94 // pred_check_branch
          %2559 = sbr.rel (%p2557) target = $region103
        $region102: #{simclr_forward.4} parent=94 // pred_region
          %p2560 = scmp.lt.s32.totalorder %s30, 3
          %s2561 = scalar_select %p2560, %s30, 3
          %s2562 = smul.addr %s2561, 2
          %s2563 = scalar_lea.vmem %s8, %s2562
        $region103: #{simclr_forward.4} parent=94 // pred_fallthru
          _
        // Predicated region
        $region104: #{simclr_forward.4} parent=94 // pred_check
          %p2564 = pneg %p271
        $region105: #{simclr_forward.4} parent=94 // pred_check_branch
          %2566 = sbr.rel (%p2564) target = $region107
        $region106: #{simclr_forward.4} parent=94 // pred_region
          %p2567 = scmp.lt.s32.totalorder %s30, 3
          %s2568 = scalar_select %p2567, %s30, 3
          %s2569 = smul.addr %s2568, 8
          %s2570 = scalar_lea.vmem %s9, %s2569
        $region107: #{simclr_forward.4} parent=94 // pred_fallthru
          _
      $region95: #{simclr_forward.4} parent=5 // pred_fallthru
        _
    $region6: #{simclr_forward.4} parent=1 // loop_footer
      %s23 = sadd.s32 1, %s19
    $region7: #{simclr_forward.4} parent=1 // loop_footer_branch
      %18 = sbr.rel target = $region3
    $region8: #{simclr_forward.4} parent=1 // loop_exit
      _
    %2571 = vsyncpa [#allocation5], 1
    %s2572 = scalar_lea.sflag [#allocation5], 1
    %2573 = vsyncpa %s2572, 1

// kernel: simclr_forward.5
$region0: #{simclr_forward.5}
  #allocation0 [shape = 'u32[]', space=smem, size = 0x4, offset = 0x4, fixed_abs, tag = 'smem constant byte address 0x4 - core index']
  #allocation1 [shape = 'u32[72,128]{1,0:T(1,128)}', space=vmem, size = 0x9000, scoped, tag = 'internal scratch']
  %s0 = inlined_call_operand.vmem [shape: f32[8,128], index: 0, kind: input, shape index: {}]
  %s1 = inlined_call_operand.vmem [shape: f32[8,128], index: 1, kind: input, shape index: {}]
  %s2 = inlined_call_operand.vmem [shape: bf16[128,128], index: 2, kind: input, shape index: {}]
  %s3 = inlined_call_operand.vmem [shape: bf16[128,128], index: 3, kind: input, shape index: {}]
  %s4 = inlined_call_operand.vmem [shape: f32[1,128], index: 4, kind: input, shape index: {}]
  %s5 = inlined_call_operand.vmem [shape: bf16[128,128], index: 5, kind: input, shape index: {}]
  %s6 = inlined_call_operand.vmem [shape: f32[1,128], index: 6, kind: input, shape index: {}]
  %s7 = inlined_call_operand.hbm [shape: f32[8,128], index: 7, kind: output, shape index: {}]
  %s8 = sld [smem:[#allocation0]]
  $region38: #{simclr_forward.5} parent=0
    _
  %s10 = ssub.s32 1, %s8
  %s11 = scalar_select 0, %s10, %s8
  $region1: #{simclr_forward.5} parent=0
    #allocation2 [shape = 'u8[4096]{0}', space=vmem, size = 0x1000, scoped, tag = 'output window, operand 0, single buffered']
    #allocation3 [shape = 's32[1]{0}', space=sflag, size = 0x4, scoped, tag = 'scoped memory for simclr_forward.5']
    %12 = vsyncpa [#allocation3], 0
    // Predicated region
    $region2: #{simclr_forward.5} parent=1 // pred_check
      _
    $region3: #{simclr_forward.5} parent=1 // pred_check_branch
      %14 = sbr.rel (0) target = $region5
    $region4: #{simclr_forward.5} parent=1 // pred_region
      _
    $region5: #{simclr_forward.5} parent=1 // pred_fallthru
      _
    // Predicated region
    $region6: #{simclr_forward.5} parent=1 // pred_check
      _
    $region7: #{simclr_forward.5} parent=1 // pred_check_branch
      %16 = sbr.rel (0) target = $region9
    $region8: #{simclr_forward.5} parent=1 // pred_region
      _
    $region9: #{simclr_forward.5} parent=1 // pred_fallthru
      _
    // Predicated region
    $region10: #{simclr_forward.5} parent=1 // pred_check
      _
    $region11: #{simclr_forward.5} parent=1 // pred_check_branch
      %18 = sbr.rel (0) target = $region13
    $region12: #{simclr_forward.5} parent=1 // pred_region
      _
    $region13: #{simclr_forward.5} parent=1 // pred_fallthru
      _
    // Predicated region
    $region14: #{simclr_forward.5} parent=1 // pred_check
      _
    $region15: #{simclr_forward.5} parent=1 // pred_check_branch
      %20 = sbr.rel (0) target = $region17
    $region16: #{simclr_forward.5} parent=1 // pred_region
      _
    $region17: #{simclr_forward.5} parent=1 // pred_fallthru
      _
    // Predicated region
    $region18: #{simclr_forward.5} parent=1 // pred_check
      _
    $region19: #{simclr_forward.5} parent=1 // pred_check_branch
      %22 = sbr.rel (0) target = $region21
    $region20: #{simclr_forward.5} parent=1 // pred_region
      _
    $region21: #{simclr_forward.5} parent=1 // pred_fallthru
      _
    // Predicated region
    $region22: #{simclr_forward.5} parent=1 // pred_check
      _
    $region23: #{simclr_forward.5} parent=1 // pred_check_branch
      %24 = sbr.rel (0) target = $region25
    $region24: #{simclr_forward.5} parent=1 // pred_region
      _
    $region25: #{simclr_forward.5} parent=1 // pred_fallthru
      _
    // Predicated region
    $region26: #{simclr_forward.5} parent=1 // pred_check
      _
    $region27: #{simclr_forward.5} parent=1 // pred_check_branch
      %26 = sbr.rel (0) target = $region29
    $region28: #{simclr_forward.5} parent=1 // pred_region
      _
    $region29: #{simclr_forward.5} parent=1 // pred_fallthru
      _
    %v27 = vld [vmem:[%s0] sm:$0xff]
    %v28 = vpack.c.bf16 %v27, %v27
    %v29 = vld [vmem:[%s2] sm:$0xf]
    %v30 = vld [vmem:[%s2 + $0x4] sm:$0xf]
    %v31 = vld [vmem:[%s2 + $0x8] sm:$0xf]
    %v32 = vld [vmem:[%s2 + $0xc] sm:$0xf]
    %v33 = vld [vmem:[%s2 + $0x10] sm:$0xf]
    %v34 = vld [vmem:[%s2 + $0x14] sm:$0xf]
    %v35 = vld [vmem:[%s2 + $0x18] sm:$0xf]
    %v36 = vld [vmem:[%s2 + $0x1c] sm:$0xf]
    %v37 = vld [vmem:[%s2 + $0x20] sm:$0xf]
    %v38 = vld [vmem:[%s2 + $0x24] sm:$0xf]
    %v39 = vld [vmem:[%s2 + $0x28] sm:$0xf]
    %v40 = vld [vmem:[%s2 + $0x2c] sm:$0xf]
    %v41 = vld [vmem:[%s2 + $0x30] sm:$0xf]
    %v42 = vld [vmem:[%s2 + $0x34] sm:$0xf]
    %v43 = vld [vmem:[%s2 + $0x38] sm:$0xf]
    %v44 = vld [vmem:[%s2 + $0x3c] sm:$0xf]
    %v45 = vld [vmem:[%s1] sm:$0xff]
    %v46 = vpack.c.bf16 %v45, %v45
    %v47 = vld [vmem:[%s3] sm:$0xf]
    %v48 = vld [vmem:[%s3 + $0x4] sm:$0xf]
    %v49 = vld [vmem:[%s3 + $0x8] sm:$0xf]
    %v50 = vld [vmem:[%s3 + $0xc] sm:$0xf]
    %v51 = vld [vmem:[%s3 + $0x10] sm:$0xf]
    %v52 = vld [vmem:[%s3 + $0x14] sm:$0xf]
    %v53 = vld [vmem:[%s3 + $0x18] sm:$0xf]
    %v54 = vld [vmem:[%s3 + $0x1c] sm:$0xf]
    %v55 = vld [vmem:[%s3 + $0x20] sm:$0xf]
    %v56 = vld [vmem:[%s3 + $0x24] sm:$0xf]
    %v57 = vld [vmem:[%s3 + $0x28] sm:$0xf]
    %v58 = vld [vmem:[%s3 + $0x2c] sm:$0xf]
    %v59 = vld [vmem:[%s3 + $0x30] sm:$0xf]
    %v60 = vld [vmem:[%s3 + $0x34] sm:$0xf]
    %v61 = vld [vmem:[%s3 + $0x38] sm:$0xf]
    %v62 = vld [vmem:[%s3 + $0x3c] sm:$0xf]
    %v79 = vunpack.c.l.b16 %v47
    %v80 = vunpack.c.l.b16 %v48
    %v81 = vunpack.c.l.b16 %v49
    %v82 = vunpack.c.l.b16 %v50
    %v83 = vunpack.c.l.b16 %v51
    %v84 = vunpack.c.l.b16 %v52
    %v85 = vunpack.c.l.b16 %v53
    %v86 = vunpack.c.l.b16 %v54
    %v87 = vunpack.c.l.b16 %v55
    %v88 = vunpack.c.l.b16 %v56
    %v89 = vunpack.c.l.b16 %v57
    %v90 = vunpack.c.l.b16 %v58
    %v91 = vunpack.c.l.b16 %v59
    %v92 = vunpack.c.l.b16 %v60
    %v93 = vunpack.c.l.b16 %v61
    %v94 = vunpack.c.l.b16 %v62
    %v95 = vpack.c.b16 %v80, %v79
    %v96 = vpack.c.b16 %v82, %v81
    %v97 = vpack.c.b16 %v84, %v83
    %v98 = vpack.c.b16 %v86, %v85
    %v99 = vpack.c.b16 %v88, %v87
    %v100 = vpack.c.b16 %v90, %v89
    %v101 = vpack.c.b16 %v92, %v91
    %v102 = vpack.c.b16 %v94, %v93
    %111 = vmatpush.bf16.msra.mxu0 %v102
    %112 = vmatpush.bf16.msra.mxu0 %v101
    %113 = vmatpush.bf16.msra.mxu0 %v100
    %114 = vmatpush.bf16.msra.mxu0 %v99
    %115 = vmatpush.bf16.msra.mxu0 %v98
    %116 = vmatpush.bf16.msra.mxu0 %v97
    %117 = vmatpush.bf16.msra.mxu0 %v96
    %118 = vmatpush.bf16.msra.mxu0 %v95
    %119 = vmatmul.bf16.gmra.mxu0 %v46
    %v120 = vpop.f32.mrf.mxu0
    %v121 = vadd.f32 0.0, %v120
    %v122 = vpop.f32.mrf.mxu0
    %123 = vdwg.mxu0
    %v140 = vunpack.c.l.b16 %v29
    %v141 = vunpack.c.l.b16 %v30
    %v142 = vunpack.c.l.b16 %v31
    %v143 = vunpack.c.l.b16 %v32
    %v144 = vunpack.c.l.b16 %v33
    %v145 = vunpack.c.l.b16 %v34
    %v146 = vunpack.c.l.b16 %v35
    %v147 = vunpack.c.l.b16 %v36
    %v148 = vunpack.c.l.b16 %v37
    %v149 = vunpack.c.l.b16 %v38
    %v150 = vunpack.c.l.b16 %v39
    %v151 = vunpack.c.l.b16 %v40
    %v152 = vunpack.c.l.b16 %v41
    %v153 = vunpack.c.l.b16 %v42
    %v154 = vunpack.c.l.b16 %v43
    %v155 = vunpack.c.l.b16 %v44
    %v156 = vpack.c.b16 %v141, %v140
    %v157 = vpack.c.b16 %v143, %v142
    %v158 = vpack.c.b16 %v145, %v144
    %v159 = vpack.c.b16 %v147, %v146
    %v160 = vpack.c.b16 %v149, %v148
    %v161 = vpack.c.b16 %v151, %v150
    %v162 = vpack.c.b16 %v153, %v152
    %v163 = vpack.c.b16 %v155, %v154
    %172 = vmatpush.bf16.msra.mxu0 %v163
    %173 = vmatpush.bf16.msra.mxu0 %v162
    %174 = vmatpush.bf16.msra.mxu0 %v161
    %175 = vmatpush.bf16.msra.mxu0 %v160
    %176 = vmatpush.bf16.msra.mxu0 %v159
    %177 = vmatpush.bf16.msra.mxu0 %v158
    %178 = vmatpush.bf16.msra.mxu0 %v157
    %179 = vmatpush.bf16.msra.mxu0 %v156
    %180 = vmatmul.bf16.gmra.mxu0 %v28
    %v181 = vpop.f32.mrf.mxu0
    %v182 = vadd.f32 %v121, %v181
    %v183 = vpop.f32.mrf.mxu0
    %184 = vdwg.mxu0
    %v185 = vld [vmem:[%s4] sm:$0x1]
    %v187 = vperm.slane %v185, 0
    %v189 = vadd.f32 %v182, %v187
    %v190 = vmax.f32 %v189, 0.0
    %v191 = vpack.c.bf16 %v190, %v190
    %v192 = vld [vmem:[%s5] sm:$0xf]
    %v193 = vld [vmem:[%s5 + $0x4] sm:$0xf]
    %v194 = vld [vmem:[%s5 + $0x8] sm:$0xf]
    %v195 = vld [vmem:[%s5 + $0xc] sm:$0xf]
    %v196 = vld [vmem:[%s5 + $0x10] sm:$0xf]
    %v197 = vld [vmem:[%s5 + $0x14] sm:$0xf]
    %v198 = vld [vmem:[%s5 + $0x18] sm:$0xf]
    %v199 = vld [vmem:[%s5 + $0x1c] sm:$0xf]
    %v200 = vld [vmem:[%s5 + $0x20] sm:$0xf]
    %v201 = vld [vmem:[%s5 + $0x24] sm:$0xf]
    %v202 = vld [vmem:[%s5 + $0x28] sm:$0xf]
    %v203 = vld [vmem:[%s5 + $0x2c] sm:$0xf]
    %v204 = vld [vmem:[%s5 + $0x30] sm:$0xf]
    %v205 = vld [vmem:[%s5 + $0x34] sm:$0xf]
    %v206 = vld [vmem:[%s5 + $0x38] sm:$0xf]
    %v207 = vld [vmem:[%s5 + $0x3c] sm:$0xf]
    %v208 = vld [vmem:[%s6] sm:$0x1]
    %v210 = vperm.slane %v208, 0
    %v228 = vunpack.c.l.b16 %v192
    %v229 = vunpack.c.l.b16 %v193
    %v230 = vunpack.c.l.b16 %v194
    %v231 = vunpack.c.l.b16 %v195
    %v232 = vunpack.c.l.b16 %v196
    %v233 = vunpack.c.l.b16 %v197
    %v234 = vunpack.c.l.b16 %v198
    %v235 = vunpack.c.l.b16 %v199
    %v236 = vunpack.c.l.b16 %v200
    %v237 = vunpack.c.l.b16 %v201
    %v238 = vunpack.c.l.b16 %v202
    %v239 = vunpack.c.l.b16 %v203
    %v240 = vunpack.c.l.b16 %v204
    %v241 = vunpack.c.l.b16 %v205
    %v242 = vunpack.c.l.b16 %v206
    %v243 = vunpack.c.l.b16 %v207
    %v244 = vpack.c.b16 %v229, %v228
    %v245 = vpack.c.b16 %v231, %v230
    %v246 = vpack.c.b16 %v233, %v232
    %v247 = vpack.c.b16 %v235, %v234
    %v248 = vpack.c.b16 %v237, %v236
    %v249 = vpack.c.b16 %v239, %v238
    %v250 = vpack.c.b16 %v241, %v240
    %v251 = vpack.c.b16 %v243, %v242
    %260 = vmatpush.bf16.msra.mxu0 %v251
    %261 = vmatpush.bf16.msra.mxu0 %v250
    %262 = vmatpush.bf16.msra.mxu0 %v249
    %263 = vmatpush.bf16.msra.mxu0 %v248
    %264 = vmatpush.bf16.msra.mxu0 %v247
    %265 = vmatpush.bf16.msra.mxu0 %v246
    %266 = vmatpush.bf16.msra.mxu0 %v245
    %267 = vmatpush.bf16.msra.mxu0 %v244
    %268 = vmatmul.bf16.gmra.mxu0 %v191
    %v269 = vpop.f32.mrf.mxu0
    %v270 = vadd.f32 %v210, %v269
    %v271 = vpop.f32.mrf.mxu0
    %272 = vdwg.mxu0
    %273 = vst [vmem:[#allocation2] sm:$0xff] %v270
    // Predicated region
    $region30: #{simclr_forward.5} parent=1 // pred_check
      _
    $region31: #{simclr_forward.5} parent=1 // pred_check_branch
      %275 = sbr.rel (0) target = $region33
    $region32: #{simclr_forward.5} parent=1 // pred_region
      %277 = vsyncadd [#allocation3], 0
      %s279 = sshll.u32 [#allocation2], 4
      %s280 = int_to_ptr.vmem [resolvable:$true] %s279
      %s281 = sshll.u32 %s7, 4
      %s282 = int_to_ptr.hbm [resolvable:$true] %s281
      %284 = dma.vmem_to_hbm [thread:$0]  %s280, 128, %s282, [#allocation3]
    $region33: #{simclr_forward.5} parent=1 // pred_fallthru
      _
    // Predicated region
    $region34: #{simclr_forward.5} parent=1 // pred_check
      _
    $region35: #{simclr_forward.5} parent=1 // pred_check_branch
      %286 = sbr.rel (0) target = $region37
    $region36: #{simclr_forward.5} parent=1 // pred_region
      %288 = dma.done [#allocation3], 128
    $region37: #{simclr_forward.5} parent=1 // pred_fallthru
      _
    %289 = vsyncpa [#allocation3], 1

</llo_original>
